<compile_context>
chip_gen: v7x
topology: tpu7x:2x2x1
jax: 0.10.0
libtpu: 0.0.40
codegen_flags: <defaults>
</compile_context>

<pallas_src>
import jax
import jax.numpy as jnp
from jax import lax
from jax.experimental import pallas as pl
from jax.experimental.pallas import tpu as pltpu

HIDDEN = 128      # nn.LSTM hidden size (fixed in the module)
DENSE = 64        # dense1 output size (fixed in the module)
DENSE_PAD = 128   # dense1 padded to a full lane tile (extra cols are zero)
LANE = 128
SUBLANE = 8


def _round_up(x, m):
    return (x + m - 1) // m * m


def word_tagging_kernel(x_ref, w_ih_ref, w_hh_ref, b_ref,
                        w1_ref, b1_ref, w2_ref, b2_ref,
                        out_ref, h_scr, c_scr, xg_scr, hs_scr):
    """One time block.

    x_ref   : (T_blk*B_pad, E)      time-major flattened embeddings
    out_ref : (T_blk*B_pad, C_pad)  softmax probabilities
    """
    rows, _ = x_ref.shape
    Bp = h_scr.shape[0]
    Tb = rows // Bp

    # h/c persist across time blocks (grid axis is "arbitrary"); init once.
    @pl.when(pl.program_id(0) == 0)
    def _():
        h_scr[...] = jnp.zeros_like(h_scr)
        c_scr[...] = jnp.zeros_like(c_scr)

    # ---- hoisted input projection: one (Tb*Bp, E) @ (E, 4H) matmul ---------
    xg_scr[...] = (jnp.dot(x_ref[...], w_ih_ref[...],
                           preferred_element_type=jnp.float32)
                   + b_ref[...])

    # ---- serial LSTM recurrence: only h @ W_hh on the critical path --------
    def step(t, carry):
        h, c = carry
        row = pl.multiple_of(t * Bp, SUBLANE)
        gates = (xg_scr[pl.ds(row, Bp), :]
                 + jnp.dot(h, w_hh_ref[...],
                           preferred_element_type=jnp.float32))
        # gate column order permuted in the wrapper to [i, f, o, g]
        sig = jax.nn.sigmoid(gates[:, :3 * HIDDEN])        # one wide EUP slab
        i_g = sig[:, 0 * HIDDEN:1 * HIDDEN]
        f_g = sig[:, 1 * HIDDEN:2 * HIDDEN]
        o_g = sig[:, 2 * HIDDEN:3 * HIDDEN]
        g_g = jnp.tanh(gates[:, 3 * HIDDEN:4 * HIDDEN])
        c_new = f_g * c + i_g * g_g
        h_new = o_g * jnp.tanh(c_new)
        hs_scr[pl.ds(row, Bp), :] = h_new
        return (h_new, c_new)

    unroll = True if Tb <= 16 else 8
    h_fin, c_fin = lax.fori_loop(0, Tb, step, (h_scr[...], c_scr[...]),
                                 unroll=unroll)
    h_scr[...] = h_fin
    c_scr[...] = c_fin

    # ---- batched dense1 -> ReLU -> dense2 -> softmax over the block --------
    d1 = jnp.dot(hs_scr[...], w1_ref[...],
                 preferred_element_type=jnp.float32) + b1_ref[...]
    d1 = jnp.maximum(d1, 0.0)
    logits = jnp.dot(d1, w2_ref[...],
                     preferred_element_type=jnp.float32) + b2_ref[...]
    m = jnp.max(logits, axis=-1, keepdims=True)
    e = jnp.exp(logits - m)
    denom = jnp.sum(e, axis=-1, keepdims=True)
    out_ref[...] = (e / denom).astype(out_ref.dtype)   # exact softmax


def word_tagging_forward(token_ids, emb, w_ih, w_hh, b_ih, b_hh,
                         w1, b1, w2, b2, *, time_block=64):
    """token_ids: (B, T) int32.  Returns (B, T, num_classes) float32."""
    B, T = token_ids.shape
    E = emb.shape[1]
    C = w2.shape[0]

    # Embedding lookup (frozen table) is glue, done in plain JAX.
    # TODO(synk): embedding gather stays in XLA; a Pallas DMA-gather would
    # need scalar-prefetch of the token ids.
    x = jnp.take(emb, token_ids, axis=0).astype(jnp.float32)     # (B, T, E)

    # padding: batch -> sublane tile, time -> time-block multiple, C -> lanes
    B_pad = _round_up(max(B, SUBLANE), SUBLANE)
    T_blk = min(time_block, _round_up(T, SUBLANE))
    T_pad = _round_up(T, T_blk)
    C_pad = _round_up(max(C, LANE), LANE)

    x = jnp.pad(x, ((0, B_pad - B), (0, T_pad - T), (0, 0)))
    # time-major, flattened to 2-D: rows grouped (t, b)
    x_tm = jnp.transpose(x, (1, 0, 2)).reshape(T_pad * B_pad, E)

    # permute PyTorch gate order [i, f, g, o] -> [i, f, o, g]
    def permute_gates(w):
        i, f, g, o = jnp.split(w, 4, axis=0)
        return jnp.concatenate([i, f, o, g], axis=0)

    w_ih_t = permute_gates(w_ih).T                               # (E, 4H)
    w_hh_t = permute_gates(w_hh).T                               # (H, 4H)
    b = permute_gates(b_ih + b_hh)[None, :]                      # (1, 4H)

    # dense1 padded to 128 cols (zeros, ReLU keeps them 0); dense2 padded to a
    # lane-dense C_pad with -1e30 bias on fake classes (softmax prob exactly 0).
    w1_t = jnp.zeros((HIDDEN, DENSE_PAD), jnp.float32).at[:, :DENSE].set(w1.T)
    b1_p = jnp.zeros((1, DENSE_PAD), jnp.float32).at[:, :DENSE].set(b1)
    w2_t = jnp.zeros((DENSE_PAD, C_pad), jnp.float32).at[:DENSE, :C].set(w2.T)
    b2_p = jnp.full((1, C_pad), -1e30, jnp.float32).at[:, :C].set(b2)

    rows_blk = T_blk * B_pad

    def full(shape):
        return pl.BlockSpec(shape, lambda t: (0,) * len(shape))

    out_2d = pl.pallas_call(
        word_tagging_kernel,
        out_shape=jax.ShapeDtypeStruct((T_pad * B_pad, C_pad), jnp.float32),
        grid=(T_pad // T_blk,),
        in_specs=[
            pl.BlockSpec((rows_blk, E), lambda t: (t, 0)),       # x block
            full((E, 4 * HIDDEN)),                               # W_ih^T
            full((HIDDEN, 4 * HIDDEN)),                          # W_hh^T
            full((1, 4 * HIDDEN)),                               # bias
            full((HIDDEN, DENSE_PAD)),                           # W1^T
            full((1, DENSE_PAD)),                                # b1
            full((DENSE_PAD, C_pad)),                            # W2^T
            full((1, C_pad)),                                    # b2
        ],
        out_specs=pl.BlockSpec((rows_blk, C_pad), lambda t: (t, 0)),
        scratch_shapes=[
            pltpu.VMEM((B_pad, HIDDEN), jnp.float32),            # h state
            pltpu.VMEM((B_pad, HIDDEN), jnp.float32),            # c state
            pltpu.VMEM((rows_blk, 4 * HIDDEN), jnp.float32),     # x @ W_ih
            pltpu.VMEM((rows_blk, HIDDEN), jnp.float32),         # h per step
        ],
        compiler_params=pltpu.CompilerParams(
            dimension_semantics=("arbitrary",)),
    )(x_tm, w_ih_t, w_hh_t, b, w1_t, b1_p, w2_t, b2_p)

    out = out_2d.reshape(T_pad, B_pad, C_pad)
    out = jnp.transpose(out, (1, 0, 2))                          # (B_pad, T_pad, C_pad)
    return out[:B, :T, :C]


def _reference_forward(token_ids, emb, w_ih, w_hh, b_ih, b_hh, w1, b1, w2, b2):
    """Pure-JAX reference matching torch semantics (eval mode)."""
    x = jnp.take(emb, token_ids, axis=0).astype(jnp.float32)     # (B, T, E)
    B, _, _ = x.shape

    def cell(carry, x_t):
        h, c = carry
        gates = x_t @ w_ih.T + b_ih + h @ w_hh.T + b_hh
        i, f, g, o = jnp.split(gates, 4, axis=-1)
        i, f, o = jax.nn.sigmoid(i), jax.nn.sigmoid(f), jax.nn.sigmoid(o)
        g = jnp.tanh(g)
        c = f * c + i * g
        h = o * jnp.tanh(c)
        return (h, c), h

    h0 = jnp.zeros((B, HIDDEN), jnp.float32)
    c0 = jnp.zeros((B, HIDDEN), jnp.float32)
    _, hs = lax.scan(cell, (h0, c0), jnp.transpose(x, (1, 0, 2)))
    hs = jnp.transpose(hs, (1, 0, 2))                            # (B, T, H)
    d1 = jnp.maximum(hs @ w1.T + b1, 0.0)
    logits = d1 @ w2.T + b2
    return jax.nn.softmax(logits, axis=2)


if __name__ == "__main__":
    vocab_size, embedding_dim, num_classes = 50, 32, 16
    B, T = 2, 8

    key = jax.random.PRNGKey(0)
    keys = jax.random.split(key, 10)
    s = 0.1
    emb = jax.random.normal(keys[0], (vocab_size, embedding_dim), jnp.float32) * s
    w_ih = jax.random.normal(keys[1], (4 * HIDDEN, embedding_dim), jnp.float32) * s
    w_hh = jax.random.normal(keys[2], (4 * HIDDEN, HIDDEN), jnp.float32) * s
    b_ih = jax.random.normal(keys[3], (4 * HIDDEN,), jnp.float32) * s
    b_hh = jax.random.normal(keys[4], (4 * HIDDEN,), jnp.float32) * s
    w1 = jax.random.normal(keys[5], (DENSE, HIDDEN), jnp.float32) * s
    b1 = jax.random.normal(keys[6], (DENSE,), jnp.float32) * s
    w2 = jax.random.normal(keys[7], (num_classes, DENSE), jnp.float32) * s
    b2 = jax.random.normal(keys[8], (num_classes,), jnp.float32) * s
    token_ids = jax.random.randint(keys[9], (B, T), 0, vocab_size, jnp.int32)

    out = word_tagging_forward(token_ids, emb, w_ih, w_hh, b_ih, b_hh,
                               w1, b1, w2, b2)
    out = jax.block_until_ready(out)

    ref = _reference_forward(token_ids, emb, w_ih, w_hh, b_ih, b_hh,
                             w1, b1, w2, b2)
    assert out.shape == (B, T, num_classes)
    assert jnp.allclose(out, ref, rtol=1e-3, atol=1e-4), (
        float(jnp.max(jnp.abs(out - ref))))
    print("KERNEL_OK")
</pallas_src>

<mosaic_0001>
module attributes {stable_mosaic.version = 11 : i64} {
  func.func @word_tagging_kernel(%arg0: i32, %arg1: memref<64x32xf32, #tpu.memory_space<vmem>>, %arg2: memref<32x512xf32, #tpu.memory_space<vmem>>, %arg3: memref<128x512xf32, #tpu.memory_space<vmem>>, %arg4: memref<1x512xf32, #tpu.memory_space<vmem>>, %arg5: memref<128x128xf32, #tpu.memory_space<vmem>>, %arg6: memref<1x128xf32, #tpu.memory_space<vmem>>, %arg7: memref<128x128xf32, #tpu.memory_space<vmem>>, %arg8: memref<1x128xf32, #tpu.memory_space<vmem>>, %arg9: memref<64x128xf32, #tpu.memory_space<vmem>>, %arg10: memref<8x128xf32, #tpu.memory_space<vmem>>, %arg11: memref<8x128xf32, #tpu.memory_space<vmem>>, %arg12: memref<64x512xf32, #tpu.memory_space<vmem>>, %arg13: memref<64x128xf32, #tpu.memory_space<vmem>>) attributes {dimension_semantics = [#tpu.dimension_semantics<arbitrary>], iteration_bounds = array<i64: 1>, scalar_prefetch = 0 : i64, scratch_operands = 4 : i64, tpu.core_type = #tpu.core_type<tc>, window_params = [{transform_indices = @transform_0, window_bounds = array<i64: 64, 32>}, {pipeline_mode = #tpu.pipeline_mode<synchronous>, transform_indices = @transform_1, window_bounds = array<i64: 32, 512>}, {pipeline_mode = #tpu.pipeline_mode<synchronous>, transform_indices = @transform_2, window_bounds = array<i64: 128, 512>}, {pipeline_mode = #tpu.pipeline_mode<synchronous>, transform_indices = @transform_3, window_bounds = array<i64: 1, 512>}, {pipeline_mode = #tpu.pipeline_mode<synchronous>, transform_indices = @transform_4, window_bounds = array<i64: 128, 128>}, {pipeline_mode = #tpu.pipeline_mode<synchronous>, transform_indices = @transform_5, window_bounds = array<i64: 1, 128>}, {pipeline_mode = #tpu.pipeline_mode<synchronous>, transform_indices = @transform_6, window_bounds = array<i64: 128, 128>}, {pipeline_mode = #tpu.pipeline_mode<synchronous>, transform_indices = @transform_7, window_bounds = array<i64: 1, 128>}, {transform_indices = @transform_8, window_bounds = array<i64: 64, 128>}]} {
    %c0_i32 = arith.constant 0 : i32
    %0 = arith.cmpi eq, %arg0, %c0_i32 : i32
    %1 = arith.extui %0 : i1 to i32
    %c0_i32_0 = arith.constant 0 : i32
    %2 = arith.cmpi ne, %1, %c0_i32_0 : i32
    scf.if %2 {
      %cst_90 = arith.constant 0.000000e+00 : f32
      %237 = vector.broadcast %cst_90 : f32 to vector<8x128xf32>
      %c0_91 = arith.constant 0 : index
      %c0_92 = arith.constant 0 : index
      %238 = vector.load %arg10[%c0_91, %c0_92] : memref<8x128xf32, #tpu.memory_space<vmem>>, vector<8x128xf32>
      tpu.vector_store %arg10[%c0_91, %c0_92], %237 {strides = array<i32>} : memref<8x128xf32, #tpu.memory_space<vmem>>, vector<8x128xf32>,
      %cst_93 = arith.constant 0.000000e+00 : f32
      %239 = vector.broadcast %cst_93 : f32 to vector<8x128xf32>
      %c0_94 = arith.constant 0 : index
      %c0_95 = arith.constant 0 : index
      %240 = vector.load %arg11[%c0_94, %c0_95] : memref<8x128xf32, #tpu.memory_space<vmem>>, vector<8x128xf32>
      tpu.vector_store %arg11[%c0_94, %c0_95], %239 {strides = array<i32>} : memref<8x128xf32, #tpu.memory_space<vmem>>, vector<8x128xf32>,
    } else {
    }
    %c0 = arith.constant 0 : index
    %c0_1 = arith.constant 0 : index
    %3 = vector.load %arg1[%c0, %c0_1] : memref<64x32xf32, #tpu.memory_space<vmem>>, vector<64x32xf32>
    %c0_2 = arith.constant 0 : index
    %c0_3 = arith.constant 0 : index
    %4 = vector.load %arg2[%c0_2, %c0_3] : memref<32x512xf32, #tpu.memory_space<vmem>>, vector<32x512xf32>
    %cst = arith.constant dense<0.000000e+00> : vector<64x512xf32>
    %5 = tpu.matmul %3, %4, %cst {dimension_numbers = #tpu.dot_dimension_numbers<[1], [0], [0], [1], [0, 0, 1, 1], [], []>} : vector<64x32xf32>, vector<32x512xf32>, vector<64x512xf32> -> vector<64x512xf32>
    %c0_4 = arith.constant 0 : index
    %c0_5 = arith.constant 0 : index
    %6 = vector.load %arg4[%c0_4, %c0_5] : memref<1x512xf32, #tpu.memory_space<vmem>>, vector<1x512xf32>
    %7 = vector.broadcast %6 : vector<1x512xf32> to vector<64x512xf32>
    %8 = arith.addf %5, %7 : vector<64x512xf32>
    %c0_6 = arith.constant 0 : index
    %c0_7 = arith.constant 0 : index
    %9 = vector.load %arg12[%c0_6, %c0_7] : memref<64x512xf32, #tpu.memory_space<vmem>>, vector<64x512xf32>
    tpu.vector_store %arg12[%c0_6, %c0_7], %8 {strides = array<i32>} : memref<64x512xf32, #tpu.memory_space<vmem>>, vector<64x512xf32>,
    %c0_8 = arith.constant 0 : index
    %c0_9 = arith.constant 0 : index
    %10 = vector.load %arg10[%c0_8, %c0_9] : memref<8x128xf32, #tpu.memory_space<vmem>>, vector<8x128xf32>
    %c0_10 = arith.constant 0 : index
    %c0_11 = arith.constant 0 : index
    %11 = vector.load %arg11[%c0_10, %c0_11] : memref<8x128xf32, #tpu.memory_space<vmem>>, vector<8x128xf32>
    %c0_i32_12 = arith.constant 0 : i32
    %c8_i32 = arith.constant 8 : i32
    %12 = arith.muli %c0_i32_12, %c8_i32 : i32
    %13 = tpu.assume_multiple %12, 8 : i32
    %14 = arith.index_cast %13 : i32 to index
    %c0_13 = arith.constant 0 : index
    %15 = vector.load %arg12[%14, %c0_13] : memref<64x512xf32, #tpu.memory_space<vmem>>, vector<8x512xf32>
    %c0_14 = arith.constant 0 : index
    %c0_15 = arith.constant 0 : index
    %16 = vector.load %arg3[%c0_14, %c0_15] : memref<128x512xf32, #tpu.memory_space<vmem>>, vector<128x512xf32>
    %cst_16 = arith.constant dense<0.000000e+00> : vector<8x512xf32>
    %17 = tpu.matmul %10, %16, %cst_16 {dimension_numbers = #tpu.dot_dimension_numbers<[1], [0], [0], [1], [0, 0, 1, 1], [], []>} : vector<8x128xf32>, vector<128x512xf32>, vector<8x512xf32> -> vector<8x512xf32>
    %18 = arith.addf %15, %17 : vector<8x512xf32>
    %19 = vector.extract_strided_slice %18 {offsets = [0, 0], sizes = [8, 384], strides = [1, 1]} : vector<8x512xf32> to vector<8x384xf32>
    %20 = arith.negf %19 : vector<8x384xf32>
    %21 = math.exp %20 : vector<8x384xf32>
    %cst_17 = arith.constant 1.000000e+00 : f32
    %22 = vector.broadcast %cst_17 : f32 to vector<8x384xf32>
    %23 = arith.addf %22, %21 : vector<8x384xf32>
    %24 = arith.divf %22, %23 : vector<8x384xf32>
    %25 = vector.extract_strided_slice %24 {offsets = [0, 0], sizes = [8, 128], strides = [1, 1]} : vector<8x384xf32> to vector<8x128xf32>
    %26 = vector.extract_strided_slice %24 {offsets = [0, 128], sizes = [8, 128], strides = [1, 1]} : vector<8x384xf32> to vector<8x128xf32>
    %27 = vector.extract_strided_slice %24 {offsets = [0, 256], sizes = [8, 128], strides = [1, 1]} : vector<8x384xf32> to vector<8x128xf32>
    %28 = vector.extract_strided_slice %18 {offsets = [0, 384], sizes = [8, 128], strides = [1, 1]} : vector<8x512xf32> to vector<8x128xf32>
    %29 = math.tanh %28 : vector<8x128xf32>
    %30 = arith.mulf %26, %11 : vector<8x128xf32>
    %31 = arith.mulf %25, %29 : vector<8x128xf32>
    %32 = arith.addf %30, %31 : vector<8x128xf32>
    %33 = math.tanh %32 : vector<8x128xf32>
    %34 = arith.mulf %27, %33 : vector<8x128xf32>
    %35 = arith.index_cast %13 : i32 to index
    %c0_18 = arith.constant 0 : index
    %36 = vector.load %arg13[%35, %c0_18] : memref<64x128xf32, #tpu.memory_space<vmem>>, vector<8x128xf32>
    tpu.vector_store %arg13[%35, %c0_18], %34 {strides = array<i32>} : memref<64x128xf32, #tpu.memory_space<vmem>>, vector<8x128xf32>,
    %c1_i32 = arith.constant 1 : i32
    %c8_i32_19 = arith.constant 8 : i32
    %37 = arith.muli %c1_i32, %c8_i32_19 : i32
    %38 = tpu.assume_multiple %37, 8 : i32
    %39 = arith.index_cast %38 : i32 to index
    %c0_20 = arith.constant 0 : index
    %40 = vector.load %arg12[%39, %c0_20] : memref<64x512xf32, #tpu.memory_space<vmem>>, vector<8x512xf32>
    %c0_21 = arith.constant 0 : index
    %c0_22 = arith.constant 0 : index
    %41 = vector.load %arg3[%c0_21, %c0_22] : memref<128x512xf32, #tpu.memory_space<vmem>>, vector<128x512xf32>
    %cst_23 = arith.constant dense<0.000000e+00> : vector<8x512xf32>
    %42 = tpu.matmul %34, %41, %cst_23 {dimension_numbers = #tpu.dot_dimension_numbers<[1], [0], [0], [1], [0, 0, 1, 1], [], []>} : vector<8x128xf32>, vector<128x512xf32>, vector<8x512xf32> -> vector<8x512xf32>
    %43 = arith.addf %40, %42 : vector<8x512xf32>
    %44 = vector.extract_strided_slice %43 {offsets = [0, 0], sizes = [8, 384], strides = [1, 1]} : vector<8x512xf32> to vector<8x384xf32>
    %45 = arith.negf %44 : vector<8x384xf32>
    %46 = math.exp %45 : vector<8x384xf32>
    %cst_24 = arith.constant 1.000000e+00 : f32
    %47 = vector.broadcast %cst_24 : f32 to vector<8x384xf32>
    %48 = arith.addf %47, %46 : vector<8x384xf32>
    %49 = arith.divf %47, %48 : vector<8x384xf32>
    %50 = vector.extract_strided_slice %49 {offsets = [0, 0], sizes = [8, 128], strides = [1, 1]} : vector<8x384xf32> to vector<8x128xf32>
    %51 = vector.extract_strided_slice %49 {offsets = [0, 128], sizes = [8, 128], strides = [1, 1]} : vector<8x384xf32> to vector<8x128xf32>
    %52 = vector.extract_strided_slice %49 {offsets = [0, 256], sizes = [8, 128], strides = [1, 1]} : vector<8x384xf32> to vector<8x128xf32>
    %53 = vector.extract_strided_slice %43 {offsets = [0, 384], sizes = [8, 128], strides = [1, 1]} : vector<8x512xf32> to vector<8x128xf32>
    %54 = math.tanh %53 : vector<8x128xf32>
    %55 = arith.mulf %51, %32 : vector<8x128xf32>
    %56 = arith.mulf %50, %54 : vector<8x128xf32>
    %57 = arith.addf %55, %56 : vector<8x128xf32>
    %58 = math.tanh %57 : vector<8x128xf32>
    %59 = arith.mulf %52, %58 : vector<8x128xf32>
    %60 = arith.index_cast %38 : i32 to index
    %c0_25 = arith.constant 0 : index
    %61 = vector.load %arg13[%60, %c0_25] : memref<64x128xf32, #tpu.memory_space<vmem>>, vector<8x128xf32>
    tpu.vector_store %arg13[%60, %c0_25], %59 {strides = array<i32>} : memref<64x128xf32, #tpu.memory_space<vmem>>, vector<8x128xf32>,
    %c2_i32 = arith.constant 2 : i32
    %c8_i32_26 = arith.constant 8 : i32
    %62 = arith.muli %c2_i32, %c8_i32_26 : i32
    %63 = tpu.assume_multiple %62, 8 : i32
    %64 = arith.index_cast %63 : i32 to index
    %c0_27 = arith.constant 0 : index
    %65 = vector.load %arg12[%64, %c0_27] : memref<64x512xf32, #tpu.memory_space<vmem>>, vector<8x512xf32>
    %c0_28 = arith.constant 0 : index
    %c0_29 = arith.constant 0 : index
    %66 = vector.load %arg3[%c0_28, %c0_29] : memref<128x512xf32, #tpu.memory_space<vmem>>, vector<128x512xf32>
    %cst_30 = arith.constant dense<0.000000e+00> : vector<8x512xf32>
    %67 = tpu.matmul %59, %66, %cst_30 {dimension_numbers = #tpu.dot_dimension_numbers<[1], [0], [0], [1], [0, 0, 1, 1], [], []>} : vector<8x128xf32>, vector<128x512xf32>, vector<8x512xf32> -> vector<8x512xf32>
    %68 = arith.addf %65, %67 : vector<8x512xf32>
    %69 = vector.extract_strided_slice %68 {offsets = [0, 0], sizes = [8, 384], strides = [1, 1]} : vector<8x512xf32> to vector<8x384xf32>
    %70 = arith.negf %69 : vector<8x384xf32>
    %71 = math.exp %70 : vector<8x384xf32>
    %cst_31 = arith.constant 1.000000e+00 : f32
    %72 = vector.broadcast %cst_31 : f32 to vector<8x384xf32>
    %73 = arith.addf %72, %71 : vector<8x384xf32>
    %74 = arith.divf %72, %73 : vector<8x384xf32>
    %75 = vector.extract_strided_slice %74 {offsets = [0, 0], sizes = [8, 128], strides = [1, 1]} : vector<8x384xf32> to vector<8x128xf32>
    %76 = vector.extract_strided_slice %74 {offsets = [0, 128], sizes = [8, 128], strides = [1, 1]} : vector<8x384xf32> to vector<8x128xf32>
    %77 = vector.extract_strided_slice %74 {offsets = [0, 256], sizes = [8, 128], strides = [1, 1]} : vector<8x384xf32> to vector<8x128xf32>
    %78 = vector.extract_strided_slice %68 {offsets = [0, 384], sizes = [8, 128], strides = [1, 1]} : vector<8x512xf32> to vector<8x128xf32>
    %79 = math.tanh %78 : vector<8x128xf32>
    %80 = arith.mulf %76, %57 : vector<8x128xf32>
    %81 = arith.mulf %75, %79 : vector<8x128xf32>
    %82 = arith.addf %80, %81 : vector<8x128xf32>
    %83 = math.tanh %82 : vector<8x128xf32>
    %84 = arith.mulf %77, %83 : vector<8x128xf32>
    %85 = arith.index_cast %63 : i32 to index
    %c0_32 = arith.constant 0 : index
    %86 = vector.load %arg13[%85, %c0_32] : memref<64x128xf32, #tpu.memory_space<vmem>>, vector<8x128xf32>
    tpu.vector_store %arg13[%85, %c0_32], %84 {strides = array<i32>} : memref<64x128xf32, #tpu.memory_space<vmem>>, vector<8x128xf32>,
    %c3_i32 = arith.constant 3 : i32
    %c8_i32_33 = arith.constant 8 : i32
    %87 = arith.muli %c3_i32, %c8_i32_33 : i32
    %88 = tpu.assume_multiple %87, 8 : i32
    %89 = arith.index_cast %88 : i32 to index
    %c0_34 = arith.constant 0 : index
    %90 = vector.load %arg12[%89, %c0_34] : memref<64x512xf32, #tpu.memory_space<vmem>>, vector<8x512xf32>
    %c0_35 = arith.constant 0 : index
    %c0_36 = arith.constant 0 : index
    %91 = vector.load %arg3[%c0_35, %c0_36] : memref<128x512xf32, #tpu.memory_space<vmem>>, vector<128x512xf32>
    %cst_37 = arith.constant dense<0.000000e+00> : vector<8x512xf32>
    %92 = tpu.matmul %84, %91, %cst_37 {dimension_numbers = #tpu.dot_dimension_numbers<[1], [0], [0], [1], [0, 0, 1, 1], [], []>} : vector<8x128xf32>, vector<128x512xf32>, vector<8x512xf32> -> vector<8x512xf32>
    %93 = arith.addf %90, %92 : vector<8x512xf32>
    %94 = vector.extract_strided_slice %93 {offsets = [0, 0], sizes = [8, 384], strides = [1, 1]} : vector<8x512xf32> to vector<8x384xf32>
    %95 = arith.negf %94 : vector<8x384xf32>
    %96 = math.exp %95 : vector<8x384xf32>
    %cst_38 = arith.constant 1.000000e+00 : f32
    %97 = vector.broadcast %cst_38 : f32 to vector<8x384xf32>
    %98 = arith.addf %97, %96 : vector<8x384xf32>
    %99 = arith.divf %97, %98 : vector<8x384xf32>
    %100 = vector.extract_strided_slice %99 {offsets = [0, 0], sizes = [8, 128], strides = [1, 1]} : vector<8x384xf32> to vector<8x128xf32>
    %101 = vector.extract_strided_slice %99 {offsets = [0, 128], sizes = [8, 128], strides = [1, 1]} : vector<8x384xf32> to vector<8x128xf32>
    %102 = vector.extract_strided_slice %99 {offsets = [0, 256], sizes = [8, 128], strides = [1, 1]} : vector<8x384xf32> to vector<8x128xf32>
    %103 = vector.extract_strided_slice %93 {offsets = [0, 384], sizes = [8, 128], strides = [1, 1]} : vector<8x512xf32> to vector<8x128xf32>
    %104 = math.tanh %103 : vector<8x128xf32>
    %105 = arith.mulf %101, %82 : vector<8x128xf32>
    %106 = arith.mulf %100, %104 : vector<8x128xf32>
    %107 = arith.addf %105, %106 : vector<8x128xf32>
    %108 = math.tanh %107 : vector<8x128xf32>
    %109 = arith.mulf %102, %108 : vector<8x128xf32>
    %110 = arith.index_cast %88 : i32 to index
    %c0_39 = arith.constant 0 : index
    %111 = vector.load %arg13[%110, %c0_39] : memref<64x128xf32, #tpu.memory_space<vmem>>, vector<8x128xf32>
    tpu.vector_store %arg13[%110, %c0_39], %109 {strides = array<i32>} : memref<64x128xf32, #tpu.memory_space<vmem>>, vector<8x128xf32>,
    %c4_i32 = arith.constant 4 : i32
    %c8_i32_40 = arith.constant 8 : i32
    %112 = arith.muli %c4_i32, %c8_i32_40 : i32
    %113 = tpu.assume_multiple %112, 8 : i32
    %114 = arith.index_cast %113 : i32 to index
    %c0_41 = arith.constant 0 : index
    %115 = vector.load %arg12[%114, %c0_41] : memref<64x512xf32, #tpu.memory_space<vmem>>, vector<8x512xf32>
    %c0_42 = arith.constant 0 : index
    %c0_43 = arith.constant 0 : index
    %116 = vector.load %arg3[%c0_42, %c0_43] : memref<128x512xf32, #tpu.memory_space<vmem>>, vector<128x512xf32>
    %cst_44 = arith.constant dense<0.000000e+00> : vector<8x512xf32>
    %117 = tpu.matmul %109, %116, %cst_44 {dimension_numbers = #tpu.dot_dimension_numbers<[1], [0], [0], [1], [0, 0, 1, 1], [], []>} : vector<8x128xf32>, vector<128x512xf32>, vector<8x512xf32> -> vector<8x512xf32>
    %118 = arith.addf %115, %117 : vector<8x512xf32>
    %119 = vector.extract_strided_slice %118 {offsets = [0, 0], sizes = [8, 384], strides = [1, 1]} : vector<8x512xf32> to vector<8x384xf32>
    %120 = arith.negf %119 : vector<8x384xf32>
    %121 = math.exp %120 : vector<8x384xf32>
    %cst_45 = arith.constant 1.000000e+00 : f32
    %122 = vector.broadcast %cst_45 : f32 to vector<8x384xf32>
    %123 = arith.addf %122, %121 : vector<8x384xf32>
    %124 = arith.divf %122, %123 : vector<8x384xf32>
    %125 = vector.extract_strided_slice %124 {offsets = [0, 0], sizes = [8, 128], strides = [1, 1]} : vector<8x384xf32> to vector<8x128xf32>
    %126 = vector.extract_strided_slice %124 {offsets = [0, 128], sizes = [8, 128], strides = [1, 1]} : vector<8x384xf32> to vector<8x128xf32>
    %127 = vector.extract_strided_slice %124 {offsets = [0, 256], sizes = [8, 128], strides = [1, 1]} : vector<8x384xf32> to vector<8x128xf32>
    %128 = vector.extract_strided_slice %118 {offsets = [0, 384], sizes = [8, 128], strides = [1, 1]} : vector<8x512xf32> to vector<8x128xf32>
    %129 = math.tanh %128 : vector<8x128xf32>
    %130 = arith.mulf %126, %107 : vector<8x128xf32>
    %131 = arith.mulf %125, %129 : vector<8x128xf32>
    %132 = arith.addf %130, %131 : vector<8x128xf32>
    %133 = math.tanh %132 : vector<8x128xf32>
    %134 = arith.mulf %127, %133 : vector<8x128xf32>
    %135 = arith.index_cast %113 : i32 to index
    %c0_46 = arith.constant 0 : index
    %136 = vector.load %arg13[%135, %c0_46] : memref<64x128xf32, #tpu.memory_space<vmem>>, vector<8x128xf32>
    tpu.vector_store %arg13[%135, %c0_46], %134 {strides = array<i32>} : memref<64x128xf32, #tpu.memory_space<vmem>>, vector<8x128xf32>,
    %c5_i32 = arith.constant 5 : i32
    %c8_i32_47 = arith.constant 8 : i32
    %137 = arith.muli %c5_i32, %c8_i32_47 : i32
    %138 = tpu.assume_multiple %137, 8 : i32
    %139 = arith.index_cast %138 : i32 to index
    %c0_48 = arith.constant 0 : index
    %140 = vector.load %arg12[%139, %c0_48] : memref<64x512xf32, #tpu.memory_space<vmem>>, vector<8x512xf32>
    %c0_49 = arith.constant 0 : index
    %c0_50 = arith.constant 0 : index
    %141 = vector.load %arg3[%c0_49, %c0_50] : memref<128x512xf32, #tpu.memory_space<vmem>>, vector<128x512xf32>
    %cst_51 = arith.constant dense<0.000000e+00> : vector<8x512xf32>
    %142 = tpu.matmul %134, %141, %cst_51 {dimension_numbers = #tpu.dot_dimension_numbers<[1], [0], [0], [1], [0, 0, 1, 1], [], []>} : vector<8x128xf32>, vector<128x512xf32>, vector<8x512xf32> -> vector<8x512xf32>
    %143 = arith.addf %140, %142 : vector<8x512xf32>
    %144 = vector.extract_strided_slice %143 {offsets = [0, 0], sizes = [8, 384], strides = [1, 1]} : vector<8x512xf32> to vector<8x384xf32>
    %145 = arith.negf %144 : vector<8x384xf32>
    %146 = math.exp %145 : vector<8x384xf32>
    %cst_52 = arith.constant 1.000000e+00 : f32
    %147 = vector.broadcast %cst_52 : f32 to vector<8x384xf32>
    %148 = arith.addf %147, %146 : vector<8x384xf32>
    %149 = arith.divf %147, %148 : vector<8x384xf32>
    %150 = vector.extract_strided_slice %149 {offsets = [0, 0], sizes = [8, 128], strides = [1, 1]} : vector<8x384xf32> to vector<8x128xf32>
    %151 = vector.extract_strided_slice %149 {offsets = [0, 128], sizes = [8, 128], strides = [1, 1]} : vector<8x384xf32> to vector<8x128xf32>
    %152 = vector.extract_strided_slice %149 {offsets = [0, 256], sizes = [8, 128], strides = [1, 1]} : vector<8x384xf32> to vector<8x128xf32>
    %153 = vector.extract_strided_slice %143 {offsets = [0, 384], sizes = [8, 128], strides = [1, 1]} : vector<8x512xf32> to vector<8x128xf32>
    %154 = math.tanh %153 : vector<8x128xf32>
    %155 = arith.mulf %151, %132 : vector<8x128xf32>
    %156 = arith.mulf %150, %154 : vector<8x128xf32>
    %157 = arith.addf %155, %156 : vector<8x128xf32>
    %158 = math.tanh %157 : vector<8x128xf32>
    %159 = arith.mulf %152, %158 : vector<8x128xf32>
    %160 = arith.index_cast %138 : i32 to index
    %c0_53 = arith.constant 0 : index
    %161 = vector.load %arg13[%160, %c0_53] : memref<64x128xf32, #tpu.memory_space<vmem>>, vector<8x128xf32>
    tpu.vector_store %arg13[%160, %c0_53], %159 {strides = array<i32>} : memref<64x128xf32, #tpu.memory_space<vmem>>, vector<8x128xf32>,
    %c6_i32 = arith.constant 6 : i32
    %c8_i32_54 = arith.constant 8 : i32
    %162 = arith.muli %c6_i32, %c8_i32_54 : i32
    %163 = tpu.assume_multiple %162, 8 : i32
    %164 = arith.index_cast %163 : i32 to index
    %c0_55 = arith.constant 0 : index
    %165 = vector.load %arg12[%164, %c0_55] : memref<64x512xf32, #tpu.memory_space<vmem>>, vector<8x512xf32>
    %c0_56 = arith.constant 0 : index
    %c0_57 = arith.constant 0 : index
    %166 = vector.load %arg3[%c0_56, %c0_57] : memref<128x512xf32, #tpu.memory_space<vmem>>, vector<128x512xf32>
    %cst_58 = arith.constant dense<0.000000e+00> : vector<8x512xf32>
    %167 = tpu.matmul %159, %166, %cst_58 {dimension_numbers = #tpu.dot_dimension_numbers<[1], [0], [0], [1], [0, 0, 1, 1], [], []>} : vector<8x128xf32>, vector<128x512xf32>, vector<8x512xf32> -> vector<8x512xf32>
    %168 = arith.addf %165, %167 : vector<8x512xf32>
    %169 = vector.extract_strided_slice %168 {offsets = [0, 0], sizes = [8, 384], strides = [1, 1]} : vector<8x512xf32> to vector<8x384xf32>
    %170 = arith.negf %169 : vector<8x384xf32>
    %171 = math.exp %170 : vector<8x384xf32>
    %cst_59 = arith.constant 1.000000e+00 : f32
    %172 = vector.broadcast %cst_59 : f32 to vector<8x384xf32>
    %173 = arith.addf %172, %171 : vector<8x384xf32>
    %174 = arith.divf %172, %173 : vector<8x384xf32>
    %175 = vector.extract_strided_slice %174 {offsets = [0, 0], sizes = [8, 128], strides = [1, 1]} : vector<8x384xf32> to vector<8x128xf32>
    %176 = vector.extract_strided_slice %174 {offsets = [0, 128], sizes = [8, 128], strides = [1, 1]} : vector<8x384xf32> to vector<8x128xf32>
    %177 = vector.extract_strided_slice %174 {offsets = [0, 256], sizes = [8, 128], strides = [1, 1]} : vector<8x384xf32> to vector<8x128xf32>
    %178 = vector.extract_strided_slice %168 {offsets = [0, 384], sizes = [8, 128], strides = [1, 1]} : vector<8x512xf32> to vector<8x128xf32>
    %179 = math.tanh %178 : vector<8x128xf32>
    %180 = arith.mulf %176, %157 : vector<8x128xf32>
    %181 = arith.mulf %175, %179 : vector<8x128xf32>
    %182 = arith.addf %180, %181 : vector<8x128xf32>
    %183 = math.tanh %182 : vector<8x128xf32>
    %184 = arith.mulf %177, %183 : vector<8x128xf32>
    %185 = arith.index_cast %163 : i32 to index
    %c0_60 = arith.constant 0 : index
    %186 = vector.load %arg13[%185, %c0_60] : memref<64x128xf32, #tpu.memory_space<vmem>>, vector<8x128xf32>
    tpu.vector_store %arg13[%185, %c0_60], %184 {strides = array<i32>} : memref<64x128xf32, #tpu.memory_space<vmem>>, vector<8x128xf32>,
    %c7_i32 = arith.constant 7 : i32
    %c8_i32_61 = arith.constant 8 : i32
    %187 = arith.muli %c7_i32, %c8_i32_61 : i32
    %188 = tpu.assume_multiple %187, 8 : i32
    %189 = arith.index_cast %188 : i32 to index
    %c0_62 = arith.constant 0 : index
    %190 = vector.load %arg12[%189, %c0_62] : memref<64x512xf32, #tpu.memory_space<vmem>>, vector<8x512xf32>
    %c0_63 = arith.constant 0 : index
    %c0_64 = arith.constant 0 : index
    %191 = vector.load %arg3[%c0_63, %c0_64] : memref<128x512xf32, #tpu.memory_space<vmem>>, vector<128x512xf32>
    %cst_65 = arith.constant dense<0.000000e+00> : vector<8x512xf32>
    %192 = tpu.matmul %184, %191, %cst_65 {dimension_numbers = #tpu.dot_dimension_numbers<[1], [0], [0], [1], [0, 0, 1, 1], [], []>} : vector<8x128xf32>, vector<128x512xf32>, vector<8x512xf32> -> vector<8x512xf32>
    %193 = arith.addf %190, %192 : vector<8x512xf32>
    %194 = vector.extract_strided_slice %193 {offsets = [0, 0], sizes = [8, 384], strides = [1, 1]} : vector<8x512xf32> to vector<8x384xf32>
    %195 = arith.negf %194 : vector<8x384xf32>
    %196 = math.exp %195 : vector<8x384xf32>
    %cst_66 = arith.constant 1.000000e+00 : f32
    %197 = vector.broadcast %cst_66 : f32 to vector<8x384xf32>
    %198 = arith.addf %197, %196 : vector<8x384xf32>
    %199 = arith.divf %197, %198 : vector<8x384xf32>
    %200 = vector.extract_strided_slice %199 {offsets = [0, 0], sizes = [8, 128], strides = [1, 1]} : vector<8x384xf32> to vector<8x128xf32>
    %201 = vector.extract_strided_slice %199 {offsets = [0, 128], sizes = [8, 128], strides = [1, 1]} : vector<8x384xf32> to vector<8x128xf32>
    %202 = vector.extract_strided_slice %199 {offsets = [0, 256], sizes = [8, 128], strides = [1, 1]} : vector<8x384xf32> to vector<8x128xf32>
    %203 = vector.extract_strided_slice %193 {offsets = [0, 384], sizes = [8, 128], strides = [1, 1]} : vector<8x512xf32> to vector<8x128xf32>
    %204 = math.tanh %203 : vector<8x128xf32>
    %205 = arith.mulf %201, %182 : vector<8x128xf32>
    %206 = arith.mulf %200, %204 : vector<8x128xf32>
    %207 = arith.addf %205, %206 : vector<8x128xf32>
    %208 = math.tanh %207 : vector<8x128xf32>
    %209 = arith.mulf %202, %208 : vector<8x128xf32>
    %210 = arith.index_cast %188 : i32 to index
    %c0_67 = arith.constant 0 : index
    %211 = vector.load %arg13[%210, %c0_67] : memref<64x128xf32, #tpu.memory_space<vmem>>, vector<8x128xf32>
    tpu.vector_store %arg13[%210, %c0_67], %209 {strides = array<i32>} : memref<64x128xf32, #tpu.memory_space<vmem>>, vector<8x128xf32>,
    %c8_i32_68 = arith.constant 8 : i32
    %c0_69 = arith.constant 0 : index
    %c0_70 = arith.constant 0 : index
    %212 = vector.load %arg10[%c0_69, %c0_70] : memref<8x128xf32, #tpu.memory_space<vmem>>, vector<8x128xf32>
    tpu.vector_store %arg10[%c0_69, %c0_70], %209 {strides = array<i32>} : memref<8x128xf32, #tpu.memory_space<vmem>>, vector<8x128xf32>,
    %c0_71 = arith.constant 0 : index
    %c0_72 = arith.constant 0 : index
    %213 = vector.load %arg11[%c0_71, %c0_72] : memref<8x128xf32, #tpu.memory_space<vmem>>, vector<8x128xf32>
    tpu.vector_store %arg11[%c0_71, %c0_72], %207 {strides = array<i32>} : memref<8x128xf32, #tpu.memory_space<vmem>>, vector<8x128xf32>,
    %c0_73 = arith.constant 0 : index
    %c0_74 = arith.constant 0 : index
    %214 = vector.load %arg13[%c0_73, %c0_74] : memref<64x128xf32, #tpu.memory_space<vmem>>, vector<64x128xf32>
    %c0_75 = arith.constant 0 : index
    %c0_76 = arith.constant 0 : index
    %215 = vector.load %arg5[%c0_75, %c0_76] : memref<128x128xf32, #tpu.memory_space<vmem>>, vector<128x128xf32>
    %cst_77 = arith.constant dense<0.000000e+00> : vector<64x128xf32>
    %216 = tpu.matmul %214, %215, %cst_77 {dimension_numbers = #tpu.dot_dimension_numbers<[1], [0], [0], [1], [0, 0, 1, 1], [], []>} : vector<64x128xf32>, vector<128x128xf32>, vector<64x128xf32> -> vector<64x128xf32>
    %c0_78 = arith.constant 0 : index
    %c0_79 = arith.constant 0 : index
    %217 = vector.load %arg6[%c0_78, %c0_79] : memref<1x128xf32, #tpu.memory_space<vmem>>, vector<1x128xf32>
    %218 = vector.broadcast %217 : vector<1x128xf32> to vector<64x128xf32>
    %219 = arith.addf %216, %218 : vector<64x128xf32>
    %cst_80 = arith.constant 0.000000e+00 : f32
    %220 = vector.broadcast %cst_80 : f32 to vector<64x128xf32>
    %221 = arith.maximumf %219, %220 : vector<64x128xf32>
    %c0_81 = arith.constant 0 : index
    %c0_82 = arith.constant 0 : index
    %222 = vector.load %arg7[%c0_81, %c0_82] : memref<128x128xf32, #tpu.memory_space<vmem>>, vector<128x128xf32>
    %cst_83 = arith.constant dense<0.000000e+00> : vector<64x128xf32>
    %223 = tpu.matmul %221, %222, %cst_83 {dimension_numbers = #tpu.dot_dimension_numbers<[1], [0], [0], [1], [0, 0, 1, 1], [], []>} : vector<64x128xf32>, vector<128x128xf32>, vector<64x128xf32> -> vector<64x128xf32>
    %c0_84 = arith.constant 0 : index
    %c0_85 = arith.constant 0 : index
    %224 = vector.load %arg8[%c0_84, %c0_85] : memref<1x128xf32, #tpu.memory_space<vmem>>, vector<1x128xf32>
    %225 = vector.broadcast %224 : vector<1x128xf32> to vector<64x128xf32>
    %226 = arith.addf %223, %225 : vector<64x128xf32>
    %cst_86 = arith.constant dense<0xFF800000> : vector<64xf32>
    %227 = vector.multi_reduction <maximumf>, %226, %cst_86 [1] : vector<64x128xf32> to vector<64xf32>
    %228 = vector.shape_cast %227 : vector<64xf32> to vector<64x1xf32>
    %229 = vector.broadcast %228 : vector<64x1xf32> to vector<64x128xf32>
    %230 = arith.subf %226, %229 : vector<64x128xf32>
    %231 = math.exp %230 : vector<64x128xf32>
    %cst_87 = arith.constant dense<0.000000e+00> : vector<64xf32>
    %232 = vector.multi_reduction <add>, %231, %cst_87 [1] : vector<64x128xf32> to vector<64xf32>
    %233 = vector.shape_cast %232 : vector<64xf32> to vector<64x1xf32>
    %234 = vector.broadcast %233 : vector<64x1xf32> to vector<64x128xf32>
    %235 = arith.divf %231, %234 : vector<64x128xf32>
    %c0_88 = arith.constant 0 : index
    %c0_89 = arith.constant 0 : index
    %236 = vector.load %arg9[%c0_88, %c0_89] : memref<64x128xf32, #tpu.memory_space<vmem>>, vector<64x128xf32>
    tpu.vector_store %arg9[%c0_88, %c0_89], %235 {strides = array<i32>} : memref<64x128xf32, #tpu.memory_space<vmem>>, vector<64x128xf32>,
    return
  }
  func.func @transform_0(%arg0: i32) -> (i32, i32) {
    %c0_i32 = arith.constant 0 : i32
    %c0_i32_0 = arith.constant 0 : i32
    return %arg0, %c0_i32 : i32, i32
  }
  func.func @transform_1(%arg0: i32) -> (i32, i32) {
    %c0_i32 = arith.constant 0 : i32
    %c0_i32_0 = arith.constant 0 : i32
    %c0_i32_1 = arith.constant 0 : i32
    return %c0_i32, %c0_i32_0 : i32, i32
  }
  func.func @transform_2(%arg0: i32) -> (i32, i32) {
    %c0_i32 = arith.constant 0 : i32
    %c0_i32_0 = arith.constant 0 : i32
    %c0_i32_1 = arith.constant 0 : i32
    return %c0_i32, %c0_i32_0 : i32, i32
  }
  func.func @transform_3(%arg0: i32) -> (i32, i32) {
    %c0_i32 = arith.constant 0 : i32
    %c0_i32_0 = arith.constant 0 : i32
    %c0_i32_1 = arith.constant 0 : i32
    return %c0_i32, %c0_i32_0 : i32, i32
  }
  func.func @transform_4(%arg0: i32) -> (i32, i32) {
    %c0_i32 = arith.constant 0 : i32
    %c0_i32_0 = arith.constant 0 : i32
    %c0_i32_1 = arith.constant 0 : i32
    return %c0_i32, %c0_i32_0 : i32, i32
  }
  func.func @transform_5(%arg0: i32) -> (i32, i32) {
    %c0_i32 = arith.constant 0 : i32
    %c0_i32_0 = arith.constant 0 : i32
    %c0_i32_1 = arith.constant 0 : i32
    return %c0_i32, %c0_i32_0 : i32, i32
  }
  func.func @transform_6(%arg0: i32) -> (i32, i32) {
    %c0_i32 = arith.constant 0 : i32
    %c0_i32_0 = arith.constant 0 : i32
    %c0_i32_1 = arith.constant 0 : i32
    return %c0_i32, %c0_i32_0 : i32, i32
  }
  func.func @transform_7(%arg0: i32) -> (i32, i32) {
    %c0_i32 = arith.constant 0 : i32
    %c0_i32_0 = arith.constant 0 : i32
    %c0_i32_1 = arith.constant 0 : i32
    return %c0_i32, %c0_i32_0 : i32, i32
  }
  func.func @transform_8(%arg0: i32) -> (i32, i32) {
    %c0_i32 = arith.constant 0 : i32
    %c0_i32_0 = arith.constant 0 : i32
    return %arg0, %c0_i32 : i32, i32
  }
}

</mosaic_0001>

<llo_original>
// kernel: tpu_custom_call.1
$region0: #{tpu_custom_call.1}
  #allocation0 [shape = 'u32[]', space=smem, size = 0x4, offset = 0x4, fixed_abs, tag = 'smem constant byte address 0x4 - core index']
  #allocation1 [shape = 'u32[144,128]{1,0:T(1,128)}', space=vmem, size = 0x12000, scoped, tag = 'internal scratch']
  #allocation2 [shape = 'f32[8,128]{1,0:T(8,128)}', space=vmem, size = 0x1000, scoped, tag = 'scratch operand']
  #allocation3 [shape = 'f32[8,128]{1,0:T(8,128)}', space=vmem, size = 0x1000, scoped, tag = 'scratch operand']
  #allocation4 [shape = 'f32[64,512]{1,0:T(8,128)}', space=vmem, size = 0x20000, scoped, tag = 'scratch operand']
  #allocation5 [shape = 'f32[64,128]{1,0:T(8,128)}', space=vmem, size = 0x8000, scoped, tag = 'scratch operand']
  %s0 = inlined_call_operand.vmem [shape: f32[64,32], index: 0, kind: input, shape index: {}]
  %s1 = inlined_call_operand.hbm [shape: f32[32,512], index: 1, kind: input, shape index: {}]
  %s2 = inlined_call_operand.hbm [shape: f32[128,512], index: 2, kind: input, shape index: {}]
  %s3 = inlined_call_operand.vmem [shape: f32[1,512], index: 3, kind: input, shape index: {}]
  %s4 = inlined_call_operand.hbm [shape: f32[128,128], index: 4, kind: input, shape index: {}]
  %s5 = inlined_call_operand.vmem [shape: f32[1,128], index: 5, kind: input, shape index: {}]
  %s6 = inlined_call_operand.hbm [shape: f32[128,128], index: 6, kind: input, shape index: {}]
  %s7 = inlined_call_operand.vmem [shape: f32[1,128], index: 7, kind: input, shape index: {}]
  %s8 = inlined_call_operand.hbm [shape: f32[64,128], index: 8, kind: output, shape index: {}]
  %s9 = sld [smem:[#allocation0]]
  $region62: #{tpu_custom_call.1} parent=0
    _
  %s11 = ssub.s32 1, %s9
  %s12 = scalar_select 0, %s11, %s9
  $region1: #{tpu_custom_call.1} parent=0
    #allocation6 [shape = 'u8[65536]{0}', space=vmem, size = 0x10000, scoped, tag = 'input window, operand 1, single buffered']
    #allocation7 [shape = 's32[1]{0}', space=sflag, size = 0x4, scoped, tag = 'scoped memory for tpu_custom_call.1']
    #allocation8 [shape = 's32[1]{0}', space=sflag, size = 0x4, scoped, tag = 'scoped memory for tpu_custom_call.1']
    #allocation9 [shape = 'u8[262144]{0}', space=vmem, size = 0x40000, scoped, tag = 'input window, operand 2, single buffered']
    #allocation10 [shape = 's32[1]{0}', space=sflag, size = 0x4, scoped, tag = 'scoped memory for tpu_custom_call.1']
    #allocation11 [shape = 'u8[65536]{0}', space=vmem, size = 0x10000, scoped, tag = 'input window, operand 4, single buffered']
    #allocation12 [shape = 'u8[65536]{0}', space=vmem, size = 0x10000, scoped, tag = 'input window, operand 6, single buffered']
    #allocation13 [shape = 's32[1]{0}', space=sflag, size = 0x4, scoped, tag = 'scoped memory for tpu_custom_call.1']
    #allocation14 [shape = 'u8[32768]{0}', space=vmem, size = 0x8000, scoped, tag = 'output window, operand 0, single buffered']
    %13 = vsyncpa [#allocation7], 0
    %14 = vsyncpa [#allocation10], 0
    %15 = vsyncpa [#allocation13], 0
    %16 = vsyncpa [#allocation8], 0
    // Predicated region
    $region2: #{tpu_custom_call.1} parent=1 // pred_check
      _
    $region3: #{tpu_custom_call.1} parent=1 // pred_check_branch
      %18 = sbr.rel (0) target = $region5
    $region4: #{tpu_custom_call.1} parent=1 // pred_region
      _
    $region5: #{tpu_custom_call.1} parent=1 // pred_fallthru
      _
    // Predicated region
    $region6: #{tpu_custom_call.1} parent=1 // pred_check
      _
    $region7: #{tpu_custom_call.1} parent=1 // pred_check_branch
      %20 = sbr.rel (0) target = $region9
    $region8: #{tpu_custom_call.1} parent=1 // pred_region
      %s22 = ssub.s32 2048, 2048
      %23 = vsyncadd [#allocation7], %s22
      %s24 = sshll.u32 [#allocation6], 4
      %s25 = int_to_ptr.vmem [resolvable:$true] %s24
      %30 = dma.hbm_to_vmem [thread:$0]  %s1, 2048, %s25, [#allocation7], 512, 512, 32
    $region9: #{tpu_custom_call.1} parent=1 // pred_fallthru
      _
    // Predicated region
    $region10: #{tpu_custom_call.1} parent=1 // pred_check
      _
    $region11: #{tpu_custom_call.1} parent=1 // pred_check_branch
      %32 = sbr.rel (0) target = $region13
    $region12: #{tpu_custom_call.1} parent=1 // pred_region
      %s34 = ssub.s32 8192, 8192
      %35 = vsyncadd [#allocation10], %s34
      %s36 = sshll.u32 [#allocation9], 4
      %s37 = int_to_ptr.vmem [resolvable:$true] %s36
      %42 = dma.hbm_to_vmem [thread:$0]  %s2, 8192, %s37, [#allocation10], 512, 512, 32
    $region13: #{tpu_custom_call.1} parent=1 // pred_fallthru
      _
    // Predicated region
    $region14: #{tpu_custom_call.1} parent=1 // pred_check
      _
    $region15: #{tpu_custom_call.1} parent=1 // pred_check_branch
      %44 = sbr.rel (0) target = $region17
    $region16: #{tpu_custom_call.1} parent=1 // pred_region
      _
    $region17: #{tpu_custom_call.1} parent=1 // pred_fallthru
      _
    // Predicated region
    $region18: #{tpu_custom_call.1} parent=1 // pred_check
      _
    $region19: #{tpu_custom_call.1} parent=1 // pred_check_branch
      %46 = sbr.rel (0) target = $region21
    $region20: #{tpu_custom_call.1} parent=1 // pred_region
      %s48 = ssub.s32 2048, 2048
      %49 = vsyncadd [#allocation10], %s48
      %s50 = sshll.u32 [#allocation11], 4
      %s51 = int_to_ptr.vmem [resolvable:$true] %s50
      %56 = dma.hbm_to_vmem [thread:$0]  %s4, 2048, %s51, [#allocation10], 128, 128, 8
    $region21: #{tpu_custom_call.1} parent=1 // pred_fallthru
      _
    // Predicated region
    $region22: #{tpu_custom_call.1} parent=1 // pred_check
      _
    $region23: #{tpu_custom_call.1} parent=1 // pred_check_branch
      %58 = sbr.rel (0) target = $region25
    $region24: #{tpu_custom_call.1} parent=1 // pred_region
      _
    $region25: #{tpu_custom_call.1} parent=1 // pred_fallthru
      _
    // Predicated region
    $region26: #{tpu_custom_call.1} parent=1 // pred_check
      _
    $region27: #{tpu_custom_call.1} parent=1 // pred_check_branch
      %60 = sbr.rel (0) target = $region29
    $region28: #{tpu_custom_call.1} parent=1 // pred_region
      %s62 = ssub.s32 2048, 2048
      %63 = vsyncadd [#allocation13], %s62
      %s64 = sshll.u32 [#allocation12], 4
      %s65 = int_to_ptr.vmem [resolvable:$true] %s64
      %70 = dma.hbm_to_vmem [thread:$0]  %s6, 2048, %s65, [#allocation13], 128, 128, 8
    $region29: #{tpu_custom_call.1} parent=1 // pred_fallthru
      _
    // Predicated region
    $region30: #{tpu_custom_call.1} parent=1 // pred_check
      _
    $region31: #{tpu_custom_call.1} parent=1 // pred_check_branch
      %72 = sbr.rel (0) target = $region33
    $region32: #{tpu_custom_call.1} parent=1 // pred_region
      _
    $region33: #{tpu_custom_call.1} parent=1 // pred_fallthru
      _
    // Predicated region
    $region34: #{tpu_custom_call.1} parent=1 // pred_check
      _
    $region35: #{tpu_custom_call.1} parent=1 // pred_check_branch
      %74 = sbr.rel (0) target = $region37
    $region36: #{tpu_custom_call.1} parent=1 // pred_region
      %75 = dma.done [#allocation7], 2048
    $region37: #{tpu_custom_call.1} parent=1 // pred_fallthru
      _
    // Predicated region
    $region38: #{tpu_custom_call.1} parent=1 // pred_check
      _
    $region39: #{tpu_custom_call.1} parent=1 // pred_check_branch
      %77 = sbr.rel (0) target = $region41
    $region40: #{tpu_custom_call.1} parent=1 // pred_region
      %78 = dma.done [#allocation10], 8192
    $region41: #{tpu_custom_call.1} parent=1 // pred_fallthru
      _
    // Predicated region
    $region42: #{tpu_custom_call.1} parent=1 // pred_check
      _
    $region43: #{tpu_custom_call.1} parent=1 // pred_check_branch
      %80 = sbr.rel (0) target = $region45
    $region44: #{tpu_custom_call.1} parent=1 // pred_region
      %81 = dma.done [#allocation10], 2048
    $region45: #{tpu_custom_call.1} parent=1 // pred_fallthru
      _
    // Predicated region
    $region46: #{tpu_custom_call.1} parent=1 // pred_check
      _
    $region47: #{tpu_custom_call.1} parent=1 // pred_check_branch
      %83 = sbr.rel (0) target = $region49
    $region48: #{tpu_custom_call.1} parent=1 // pred_region
      %84 = dma.done [#allocation13], 2048
    $region49: #{tpu_custom_call.1} parent=1 // pred_fallthru
      _
    %p85 = scmp.eq.s32.totalorder 0, 0
    // Predicated region
    $region50: #{tpu_custom_call.1} parent=1 // pred_check
      %p86 = pneg %p85
    $region51: #{tpu_custom_call.1} parent=1 // pred_check_branch
      %88 = sbr.rel (%p86) target = $region53
    $region52: #{tpu_custom_call.1} parent=1 // pred_region
      %89 = vst [vmem:[#allocation2] sm:$0xff] 0.0
      %90 = vst [vmem:[#allocation3] sm:$0xff] 0.0
    $region53: #{tpu_custom_call.1} parent=1 // pred_fallthru
      _
    %v91 = vld [vmem:[%s0] sm:$0xff]
    %v92 = vld [vmem:[%s0 + $0x8] sm:$0xff]
    %v93 = vld [vmem:[%s0 + $0x10] sm:$0xff]
    %v94 = vld [vmem:[%s0 + $0x18] sm:$0xff]
    %v95 = vld [vmem:[%s0 + $0x20] sm:$0xff]
    %v96 = vld [vmem:[%s0 + $0x28] sm:$0xff]
    %v97 = vld [vmem:[%s0 + $0x30] sm:$0xff]
    %v98 = vld [vmem:[%s0 + $0x38] sm:$0xff]
    %v99 = vld [vmem:[#allocation6] sm:$0xff]
    %v100 = vld [vmem:[#allocation6 + $0x8] sm:$0xff]
    %v101 = vld [vmem:[#allocation6 + $0x10] sm:$0xff]
    %v102 = vld [vmem:[#allocation6 + $0x18] sm:$0xff]
    %v103 = vld [vmem:[#allocation6 + $0x20] sm:$0xff]
    %v104 = vld [vmem:[#allocation6 + $0x28] sm:$0xff]
    %v105 = vld [vmem:[#allocation6 + $0x30] sm:$0xff]
    %v106 = vld [vmem:[#allocation6 + $0x38] sm:$0xff]
    %v107 = vld [vmem:[#allocation6 + $0x40] sm:$0xff]
    %v108 = vld [vmem:[#allocation6 + $0x48] sm:$0xff]
    %v109 = vld [vmem:[#allocation6 + $0x50] sm:$0xff]
    %v110 = vld [vmem:[#allocation6 + $0x58] sm:$0xff]
    %v111 = vld [vmem:[#allocation6 + $0x60] sm:$0xff]
    %v112 = vld [vmem:[#allocation6 + $0x68] sm:$0xff]
    %v113 = vld [vmem:[#allocation6 + $0x70] sm:$0xff]
    %v114 = vld [vmem:[#allocation6 + $0x78] sm:$0xff]
    %v115 = vld [vmem:[%s3] sm:$0xf]
    %v117 = vlaneseq
    %v118 = vshrl.u32 %v117, 7
    %v119 = vsub.s32 0, %v118
    %v120 = vrot.slane %v115, %v119
    %v121 = vlaneseq
    %v122 = vshrl.u32 %v121, 7
    %v123 = vsub.s32 1, %v122
    %v124 = vrot.slane %v115, %v123
    %v125 = vlaneseq
    %v126 = vshrl.u32 %v125, 7
    %v127 = vsub.s32 2, %v126
    %v128 = vrot.slane %v115, %v127
    %v129 = vlaneseq
    %v130 = vshrl.u32 %v129, 7
    %v131 = vsub.s32 3, %v130
    %v132 = vrot.slane %v115, %v131
    %vm137 = vcmask 261120
    %v139 = vsel %vm137, %v91, 0
    %v142 = vsel %vm137, %v92, 0
    %v145 = vsel %vm137, %v93, 0
    %v148 = vsel %vm137, %v94, 0
    %v151 = vsel %vm137, %v95, 0
    %v154 = vsel %vm137, %v96, 0
    %v157 = vsel %vm137, %v97, 0
    %v160 = vsel %vm137, %v98, 0
    %162 = vmatprep.subr.mxu0 %v100
    %163 = vmatpush1.msra.mxu0 %v99
    %164 = vmatprep.subr.mxu0 %v104
    %165 = vmatpush1.msra.mxu0 %v103
    %166 = vmatprep.subr.mxu0 %v108
    %167 = vmatpush1.msra.mxu0 %v107
    %168 = vmatprep.subr.mxu0 %v112
    %169 = vmatpush1.msra.mxu0 %v111
    %170 = vmatprep.subr.mxu0 0.0
    %171 = vmatpush1.msra.mxu0 0.0
    %172 = vmatprep.subr.mxu0 0.0
    %173 = vmatpush1.msra.mxu0 0.0
    %174 = vmatprep.subr.mxu0 0.0
    %175 = vmatpush1.msra.mxu0 0.0
    %176 = vmatprep.subr.mxu0 0.0
    %177 = vmatpush1.msra.mxu0 0.0
    %178 = vmatprep.subr.mxu0 0.0
    %179 = vmatpush1.msra.mxu0 0.0
    %180 = vmatprep.subr.mxu0 0.0
    %181 = vmatpush1.msra.mxu0 0.0
    %182 = vmatprep.subr.mxu0 0.0
    %183 = vmatpush1.msra.mxu0 0.0
    %184 = vmatprep.subr.mxu0 0.0
    %185 = vmatpush1.msra.mxu0 0.0
    %186 = vmatprep.subr.mxu0 0.0
    %187 = vmatpush1.msra.mxu0 0.0
    %188 = vmatprep.subr.mxu0 0.0
    %189 = vmatpush1.msra.mxu0 0.0
    %190 = vmatprep.subr.mxu0 0.0
    %191 = vmatpush1.msra.mxu0 0.0
    %192 = vmatprep.subr.mxu0 0.0
    %193 = vmatpush1.msra.mxu0 0.0
    %194 = vmatprep.subr.mxu0 0.0
    %195 = vmatpush1.msra.mxu0 0.0
    %196 = vmatprep.subr.mxu0 0.0
    %197 = vmatpush1.msra.mxu0 0.0
    %198 = vmatprep.subr.mxu0 0.0
    %199 = vmatpush1.msra.mxu0 0.0
    %200 = vmatprep.subr.mxu0 0.0
    %201 = vmatpush1.msra.mxu0 0.0
    %202 = vmatprep.subr.mxu0 0.0
    %203 = vmatpush1.msra.mxu0 0.0
    %204 = vmatprep.subr.mxu0 0.0
    %205 = vmatpush1.msra.mxu0 0.0
    %206 = vmatprep.subr.mxu0 0.0
    %207 = vmatpush1.msra.mxu0 0.0
    %208 = vmatprep.subr.mxu0 0.0
    %209 = vmatpush1.msra.mxu0 0.0
    %210 = vmatprep.subr.mxu0 0.0
    %211 = vmatpush1.msra.mxu0 0.0
    %212 = vmatprep.subr.mxu0 0.0
    %213 = vmatpush1.msra.mxu0 0.0
    %214 = vmatprep.subr.mxu0 0.0
    %215 = vmatpush1.msra.mxu0 0.0
    %216 = vmatprep.subr.mxu0 0.0
    %217 = vmatpush1.msra.mxu0 0.0
    %218 = vmatprep.subr.mxu0 0.0
    %219 = vmatpush1.msra.mxu0 0.0
    %220 = vmatprep.subr.mxu0 0.0
    %221 = vmatpush1.msra.mxu0 0.0
    %222 = vmatprep.subr.mxu0 0.0
    %223 = vmatpush1.msra.mxu0 0.0
    %224 = vmatprep.subr.mxu0 0.0
    %225 = vmatpush1.msra.mxu0 0.0
    %226 = vmatprep.mubr.f32.mxu0 0.0
    %227 = vmatmul.mubr.f32.gmra.mrb[0].mxu0 %v139
    %v228 = vpop.f32.mrb[0].mxu0
    %v229 = vadd.f32 %v120, %v228
    %v230 = vpop.f32.mrb[0].mxu0
    %v231 = vadd.f32 %v124, %v230
    %232 = vmatprep.mubr.f32.mxu0 0.0
    %233 = vmatmul.mubr.f32.gmra.mrb[0].mxu0 %v142
    %v234 = vpop.f32.mrb[0].mxu0
    %v235 = vadd.f32 %v120, %v234
    %v236 = vpop.f32.mrb[0].mxu0
    %v237 = vadd.f32 %v124, %v236
    %238 = vmatprep.mubr.f32.mxu0 0.0
    %239 = vmatmul.mubr.f32.gmra.mrb[0].mxu0 %v145
    %v240 = vpop.f32.mrb[0].mxu0
    %v241 = vadd.f32 %v120, %v240
    %v242 = vpop.f32.mrb[0].mxu0
    %v243 = vadd.f32 %v124, %v242
    %244 = vmatprep.mubr.f32.mxu0 0.0
    %245 = vmatmul.mubr.f32.gmra.mrb[0].mxu0 %v148
    %v246 = vpop.f32.mrb[0].mxu0
    %v247 = vadd.f32 %v120, %v246
    %v248 = vpop.f32.mrb[0].mxu0
    %v249 = vadd.f32 %v124, %v248
    %250 = vmatprep.mubr.f32.mxu0 0.0
    %251 = vmatmul.mubr.f32.gmra.mrb[0].mxu0 %v151
    %v252 = vpop.f32.mrb[0].mxu0
    %v253 = vadd.f32 %v120, %v252
    %v254 = vpop.f32.mrb[0].mxu0
    %v255 = vadd.f32 %v124, %v254
    %256 = vmatprep.mubr.f32.mxu0 0.0
    %257 = vmatmul.mubr.f32.gmra.mrb[0].mxu0 %v154
    %v258 = vpop.f32.mrb[0].mxu0
    %v259 = vadd.f32 %v120, %v258
    %v260 = vpop.f32.mrb[0].mxu0
    %v261 = vadd.f32 %v124, %v260
    %262 = vmatprep.mubr.f32.mxu0 0.0
    %263 = vmatmul.mubr.f32.gmra.mrb[0].mxu0 %v157
    %v264 = vpop.f32.mrb[0].mxu0
    %v265 = vadd.f32 %v120, %v264
    %v266 = vpop.f32.mrb[0].mxu0
    %v267 = vadd.f32 %v124, %v266
    %268 = vmatprep.mubr.f32.mxu0 0.0
    %269 = vmatmul.mubr.f32.gmra.mrb[0].mxu0 %v160
    %v270 = vpop.f32.mrb[0].mxu0
    %v271 = vadd.f32 %v120, %v270
    %v272 = vpop.f32.mrb[0].mxu0
    %v273 = vadd.f32 %v124, %v272
    %274 = vdwg.mxu0
    %275 = vmatprep.subr.mxu0 %v102
    %276 = vmatpush1.msra.mxu0 %v101
    %277 = vmatprep.subr.mxu0 %v106
    %278 = vmatpush1.msra.mxu0 %v105
    %279 = vmatprep.subr.mxu0 %v110
    %280 = vmatpush1.msra.mxu0 %v109
    %281 = vmatprep.subr.mxu0 %v114
    %282 = vmatpush1.msra.mxu0 %v113
    %283 = vmatprep.subr.mxu0 0.0
    %284 = vmatpush1.msra.mxu0 0.0
    %285 = vmatprep.subr.mxu0 0.0
    %286 = vmatpush1.msra.mxu0 0.0
    %287 = vmatprep.subr.mxu0 0.0
    %288 = vmatpush1.msra.mxu0 0.0
    %289 = vmatprep.subr.mxu0 0.0
    %290 = vmatpush1.msra.mxu0 0.0
    %291 = vmatprep.subr.mxu0 0.0
    %292 = vmatpush1.msra.mxu0 0.0
    %293 = vmatprep.subr.mxu0 0.0
    %294 = vmatpush1.msra.mxu0 0.0
    %295 = vmatprep.subr.mxu0 0.0
    %296 = vmatpush1.msra.mxu0 0.0
    %297 = vmatprep.subr.mxu0 0.0
    %298 = vmatpush1.msra.mxu0 0.0
    %299 = vmatprep.subr.mxu0 0.0
    %300 = vmatpush1.msra.mxu0 0.0
    %301 = vmatprep.subr.mxu0 0.0
    %302 = vmatpush1.msra.mxu0 0.0
    %303 = vmatprep.subr.mxu0 0.0
    %304 = vmatpush1.msra.mxu0 0.0
    %305 = vmatprep.subr.mxu0 0.0
    %306 = vmatpush1.msra.mxu0 0.0
    %307 = vmatprep.subr.mxu0 0.0
    %308 = vmatpush1.msra.mxu0 0.0
    %309 = vmatprep.subr.mxu0 0.0
    %310 = vmatpush1.msra.mxu0 0.0
    %311 = vmatprep.subr.mxu0 0.0
    %312 = vmatpush1.msra.mxu0 0.0
    %313 = vmatprep.subr.mxu0 0.0
    %314 = vmatpush1.msra.mxu0 0.0
    %315 = vmatprep.subr.mxu0 0.0
    %316 = vmatpush1.msra.mxu0 0.0
    %317 = vmatprep.subr.mxu0 0.0
    %318 = vmatpush1.msra.mxu0 0.0
    %319 = vmatprep.subr.mxu0 0.0
    %320 = vmatpush1.msra.mxu0 0.0
    %321 = vmatprep.subr.mxu0 0.0
    %322 = vmatpush1.msra.mxu0 0.0
    %323 = vmatprep.subr.mxu0 0.0
    %324 = vmatpush1.msra.mxu0 0.0
    %325 = vmatprep.subr.mxu0 0.0
    %326 = vmatpush1.msra.mxu0 0.0
    %327 = vmatprep.subr.mxu0 0.0
    %328 = vmatpush1.msra.mxu0 0.0
    %329 = vmatprep.subr.mxu0 0.0
    %330 = vmatpush1.msra.mxu0 0.0
    %331 = vmatprep.subr.mxu0 0.0
    %332 = vmatpush1.msra.mxu0 0.0
    %333 = vmatprep.subr.mxu0 0.0
    %334 = vmatpush1.msra.mxu0 0.0
    %335 = vmatprep.subr.mxu0 0.0
    %336 = vmatpush1.msra.mxu0 0.0
    %337 = vmatprep.subr.mxu0 0.0
    %338 = vmatpush1.msra.mxu0 0.0
    %339 = vmatprep.mubr.f32.mxu0 0.0
    %340 = vmatmul.mubr.f32.gmra.mrb[0].mxu0 %v139
    %v341 = vpop.f32.mrb[0].mxu0
    %v342 = vadd.f32 %v128, %v341
    %v343 = vpop.f32.mrb[0].mxu0
    %v344 = vadd.f32 %v132, %v343
    %345 = vmatprep.mubr.f32.mxu0 0.0
    %346 = vmatmul.mubr.f32.gmra.mrb[0].mxu0 %v142
    %v347 = vpop.f32.mrb[0].mxu0
    %v348 = vadd.f32 %v128, %v347
    %v349 = vpop.f32.mrb[0].mxu0
    %v350 = vadd.f32 %v132, %v349
    %351 = vmatprep.mubr.f32.mxu0 0.0
    %352 = vmatmul.mubr.f32.gmra.mrb[0].mxu0 %v145
    %v353 = vpop.f32.mrb[0].mxu0
    %v354 = vadd.f32 %v128, %v353
    %v355 = vpop.f32.mrb[0].mxu0
    %v356 = vadd.f32 %v132, %v355
    %357 = vmatprep.mubr.f32.mxu0 0.0
    %358 = vmatmul.mubr.f32.gmra.mrb[0].mxu0 %v148
    %v359 = vpop.f32.mrb[0].mxu0
    %v360 = vadd.f32 %v128, %v359
    %v361 = vpop.f32.mrb[0].mxu0
    %v362 = vadd.f32 %v132, %v361
    %363 = vmatprep.mubr.f32.mxu0 0.0
    %364 = vmatmul.mubr.f32.gmra.mrb[0].mxu0 %v151
    %v365 = vpop.f32.mrb[0].mxu0
    %v366 = vadd.f32 %v128, %v365
    %v367 = vpop.f32.mrb[0].mxu0
    %v368 = vadd.f32 %v132, %v367
    %369 = vmatprep.mubr.f32.mxu0 0.0
    %370 = vmatmul.mubr.f32.gmra.mrb[0].mxu0 %v154
    %v371 = vpop.f32.mrb[0].mxu0
    %v372 = vadd.f32 %v128, %v371
    %v373 = vpop.f32.mrb[0].mxu0
    %v374 = vadd.f32 %v132, %v373
    %375 = vmatprep.mubr.f32.mxu0 0.0
    %376 = vmatmul.mubr.f32.gmra.mrb[0].mxu0 %v157
    %v377 = vpop.f32.mrb[0].mxu0
    %v378 = vadd.f32 %v128, %v377
    %v379 = vpop.f32.mrb[0].mxu0
    %v380 = vadd.f32 %v132, %v379
    %381 = vmatprep.mubr.f32.mxu0 0.0
    %382 = vmatmul.mubr.f32.gmra.mrb[0].mxu0 %v160
    %v383 = vpop.f32.mrb[0].mxu0
    %v384 = vadd.f32 %v128, %v383
    %v385 = vpop.f32.mrb[0].mxu0
    %v386 = vadd.f32 %v132, %v385
    %387 = vdwg.mxu0
    %388 = vst [vmem:[#allocation4] sm:$0xff] %v229
    %389 = vst [vmem:[#allocation4 + $0x8] sm:$0xff] %v231
    %390 = vst [vmem:[#allocation4 + $0x10] sm:$0xff] %v342
    %391 = vst [vmem:[#allocation4 + $0x18] sm:$0xff] %v344
    %392 = vst [vmem:[#allocation4 + $0x20] sm:$0xff] %v235
    %393 = vst [vmem:[#allocation4 + $0x28] sm:$0xff] %v237
    %394 = vst [vmem:[#allocation4 + $0x30] sm:$0xff] %v348
    %395 = vst [vmem:[#allocation4 + $0x38] sm:$0xff] %v350
    %396 = vst [vmem:[#allocation4 + $0x40] sm:$0xff] %v241
    %397 = vst [vmem:[#allocation4 + $0x48] sm:$0xff] %v243
    %398 = vst [vmem:[#allocation4 + $0x50] sm:$0xff] %v354
    %399 = vst [vmem:[#allocation4 + $0x58] sm:$0xff] %v356
    %400 = vst [vmem:[#allocation4 + $0x60] sm:$0xff] %v247
    %401 = vst [vmem:[#allocation4 + $0x68] sm:$0xff] %v249
    %402 = vst [vmem:[#allocation4 + $0x70] sm:$0xff] %v360
    %403 = vst [vmem:[#allocation4 + $0x78] sm:$0xff] %v362
    %404 = vst [vmem:[#allocation4 + $0x80] sm:$0xff] %v253
    %405 = vst [vmem:[#allocation4 + $0x88] sm:$0xff] %v255
    %406 = vst [vmem:[#allocation4 + $0x90] sm:$0xff] %v366
    %407 = vst [vmem:[#allocation4 + $0x98] sm:$0xff] %v368
    %408 = vst [vmem:[#allocation4 + $0xa0] sm:$0xff] %v259
    %409 = vst [vmem:[#allocation4 + $0xa8] sm:$0xff] %v261
    %410 = vst [vmem:[#allocation4 + $0xb0] sm:$0xff] %v372
    %411 = vst [vmem:[#allocation4 + $0xb8] sm:$0xff] %v374
    %412 = vst [vmem:[#allocation4 + $0xc0] sm:$0xff] %v265
    %413 = vst [vmem:[#allocation4 + $0xc8] sm:$0xff] %v267
    %414 = vst [vmem:[#allocation4 + $0xd0] sm:$0xff] %v378
    %415 = vst [vmem:[#allocation4 + $0xd8] sm:$0xff] %v380
    %416 = vst [vmem:[#allocation4 + $0xe0] sm:$0xff] %v271
    %417 = vst [vmem:[#allocation4 + $0xe8] sm:$0xff] %v273
    %418 = vst [vmem:[#allocation4 + $0xf0] sm:$0xff] %v384
    %419 = vst [vmem:[#allocation4 + $0xf8] sm:$0xff] %v386
    %v420 = vld [vmem:[#allocation2] sm:$0xff]
    %v421 = vld [vmem:[#allocation3] sm:$0xff]
    %s422 = smul.u32 0, 4
    %s423 = smul.addr %s422, 8
    %s424 = scalar_lea.vmem [#allocation4], %s423
    %v425 = vld [vmem:[%s424] sm:$0xff]
    %v426 = vld [vmem:[%s424 + $0x8] sm:$0xff]
    %v427 = vld [vmem:[%s424 + $0x10] sm:$0xff]
    %v428 = vld [vmem:[%s424 + $0x18] sm:$0xff]
    %v429 = vld [vmem:[#allocation9] sm:$0xff]
    %v430 = vld [vmem:[#allocation9 + $0x8] sm:$0xff]
    %v431 = vld [vmem:[#allocation9 + $0x10] sm:$0xff]
    %v432 = vld [vmem:[#allocation9 + $0x18] sm:$0xff]
    %v433 = vld [vmem:[#allocation9 + $0x20] sm:$0xff]
    %v434 = vld [vmem:[#allocation9 + $0x28] sm:$0xff]
    %v435 = vld [vmem:[#allocation9 + $0x30] sm:$0xff]
    %v436 = vld [vmem:[#allocation9 + $0x38] sm:$0xff]
    %v437 = vld [vmem:[#allocation9 + $0x40] sm:$0xff]
    %v438 = vld [vmem:[#allocation9 + $0x48] sm:$0xff]
    %v439 = vld [vmem:[#allocation9 + $0x50] sm:$0xff]
    %v440 = vld [vmem:[#allocation9 + $0x58] sm:$0xff]
    %v441 = vld [vmem:[#allocation9 + $0x60] sm:$0xff]
    %v442 = vld [vmem:[#allocation9 + $0x68] sm:$0xff]
    %v443 = vld [vmem:[#allocation9 + $0x70] sm:$0xff]
    %v444 = vld [vmem:[#allocation9 + $0x78] sm:$0xff]
    %v445 = vld [vmem:[#allocation9 + $0x80] sm:$0xff]
    %v446 = vld [vmem:[#allocation9 + $0x88] sm:$0xff]
    %v447 = vld [vmem:[#allocation9 + $0x90] sm:$0xff]
    %v448 = vld [vmem:[#allocation9 + $0x98] sm:$0xff]
    %v449 = vld [vmem:[#allocation9 + $0xa0] sm:$0xff]
    %v450 = vld [vmem:[#allocation9 + $0xa8] sm:$0xff]
    %v451 = vld [vmem:[#allocation9 + $0xb0] sm:$0xff]
    %v452 = vld [vmem:[#allocation9 + $0xb8] sm:$0xff]
    %v453 = vld [vmem:[#allocation9 + $0xc0] sm:$0xff]
    %v454 = vld [vmem:[#allocation9 + $0xc8] sm:$0xff]
    %v455 = vld [vmem:[#allocation9 + $0xd0] sm:$0xff]
    %v456 = vld [vmem:[#allocation9 + $0xd8] sm:$0xff]
    %v457 = vld [vmem:[#allocation9 + $0xe0] sm:$0xff]
    %v458 = vld [vmem:[#allocation9 + $0xe8] sm:$0xff]
    %v459 = vld [vmem:[#allocation9 + $0xf0] sm:$0xff]
    %v460 = vld [vmem:[#allocation9 + $0xf8] sm:$0xff]
    %v461 = vld [vmem:[#allocation9 + $0x100] sm:$0xff]
    %v462 = vld [vmem:[#allocation9 + $0x108] sm:$0xff]
    %v463 = vld [vmem:[#allocation9 + $0x110] sm:$0xff]
    %v464 = vld [vmem:[#allocation9 + $0x118] sm:$0xff]
    %v465 = vld [vmem:[#allocation9 + $0x120] sm:$0xff]
    %v466 = vld [vmem:[#allocation9 + $0x128] sm:$0xff]
    %v467 = vld [vmem:[#allocation9 + $0x130] sm:$0xff]
    %v468 = vld [vmem:[#allocation9 + $0x138] sm:$0xff]
    %v469 = vld [vmem:[#allocation9 + $0x140] sm:$0xff]
    %v470 = vld [vmem:[#allocation9 + $0x148] sm:$0xff]
    %v471 = vld [vmem:[#allocation9 + $0x150] sm:$0xff]
    %v472 = vld [vmem:[#allocation9 + $0x158] sm:$0xff]
    %v473 = vld [vmem:[#allocation9 + $0x160] sm:$0xff]
    %v474 = vld [vmem:[#allocation9 + $0x168] sm:$0xff]
    %v475 = vld [vmem:[#allocation9 + $0x170] sm:$0xff]
    %v476 = vld [vmem:[#allocation9 + $0x178] sm:$0xff]
    %v477 = vld [vmem:[#allocation9 + $0x180] sm:$0xff]
    %v478 = vld [vmem:[#allocation9 + $0x188] sm:$0xff]
    %v479 = vld [vmem:[#allocation9 + $0x190] sm:$0xff]
    %v480 = vld [vmem:[#allocation9 + $0x198] sm:$0xff]
    %v481 = vld [vmem:[#allocation9 + $0x1a0] sm:$0xff]
    %v482 = vld [vmem:[#allocation9 + $0x1a8] sm:$0xff]
    %v483 = vld [vmem:[#allocation9 + $0x1b0] sm:$0xff]
    %v484 = vld [vmem:[#allocation9 + $0x1b8] sm:$0xff]
    %v485 = vld [vmem:[#allocation9 + $0x1c0] sm:$0xff]
    %v486 = vld [vmem:[#allocation9 + $0x1c8] sm:$0xff]
    %v487 = vld [vmem:[#allocation9 + $0x1d0] sm:$0xff]
    %v488 = vld [vmem:[#allocation9 + $0x1d8] sm:$0xff]
    %v489 = vld [vmem:[#allocation9 + $0x1e0] sm:$0xff]
    %v490 = vld [vmem:[#allocation9 + $0x1e8] sm:$0xff]
    %v491 = vld [vmem:[#allocation9 + $0x1f0] sm:$0xff]
    %v492 = vld [vmem:[#allocation9 + $0x1f8] sm:$0xff]
    %493 = vmatprep.subr.mxu0 %v430
    %494 = vmatpush1.msra.mxu0 %v429
    %495 = vmatprep.subr.mxu0 %v434
    %496 = vmatpush1.msra.mxu0 %v433
    %497 = vmatprep.subr.mxu0 %v438
    %498 = vmatpush1.msra.mxu0 %v437
    %499 = vmatprep.subr.mxu0 %v442
    %500 = vmatpush1.msra.mxu0 %v441
    %501 = vmatprep.subr.mxu0 %v446
    %502 = vmatpush1.msra.mxu0 %v445
    %503 = vmatprep.subr.mxu0 %v450
    %504 = vmatpush1.msra.mxu0 %v449
    %505 = vmatprep.subr.mxu0 %v454
    %506 = vmatpush1.msra.mxu0 %v453
    %507 = vmatprep.subr.mxu0 %v458
    %508 = vmatpush1.msra.mxu0 %v457
    %509 = vmatprep.subr.mxu0 %v462
    %510 = vmatpush1.msra.mxu0 %v461
    %511 = vmatprep.subr.mxu0 %v466
    %512 = vmatpush1.msra.mxu0 %v465
    %513 = vmatprep.subr.mxu0 %v470
    %514 = vmatpush1.msra.mxu0 %v469
    %515 = vmatprep.subr.mxu0 %v474
    %516 = vmatpush1.msra.mxu0 %v473
    %517 = vmatprep.subr.mxu0 %v478
    %518 = vmatpush1.msra.mxu0 %v477
    %519 = vmatprep.subr.mxu0 %v482
    %520 = vmatpush1.msra.mxu0 %v481
    %521 = vmatprep.subr.mxu0 %v486
    %522 = vmatpush1.msra.mxu0 %v485
    %523 = vmatprep.subr.mxu0 %v490
    %524 = vmatpush1.msra.mxu0 %v489
    %525 = vmatprep.subr.mxu0 0.0
    %526 = vmatpush1.msra.mxu0 0.0
    %527 = vmatprep.subr.mxu0 0.0
    %528 = vmatpush1.msra.mxu0 0.0
    %529 = vmatprep.subr.mxu0 0.0
    %530 = vmatpush1.msra.mxu0 0.0
    %531 = vmatprep.subr.mxu0 0.0
    %532 = vmatpush1.msra.mxu0 0.0
    %533 = vmatprep.subr.mxu0 0.0
    %534 = vmatpush1.msra.mxu0 0.0
    %535 = vmatprep.subr.mxu0 0.0
    %536 = vmatpush1.msra.mxu0 0.0
    %537 = vmatprep.subr.mxu0 0.0
    %538 = vmatpush1.msra.mxu0 0.0
    %539 = vmatprep.subr.mxu0 0.0
    %540 = vmatpush1.msra.mxu0 0.0
    %541 = vmatprep.subr.mxu0 0.0
    %542 = vmatpush1.msra.mxu0 0.0
    %543 = vmatprep.subr.mxu0 0.0
    %544 = vmatpush1.msra.mxu0 0.0
    %545 = vmatprep.subr.mxu0 0.0
    %546 = vmatpush1.msra.mxu0 0.0
    %547 = vmatprep.subr.mxu0 0.0
    %548 = vmatpush1.msra.mxu0 0.0
    %549 = vmatprep.subr.mxu0 0.0
    %550 = vmatpush1.msra.mxu0 0.0
    %551 = vmatprep.subr.mxu0 0.0
    %552 = vmatpush1.msra.mxu0 0.0
    %553 = vmatprep.subr.mxu0 0.0
    %554 = vmatpush1.msra.mxu0 0.0
    %555 = vmatprep.subr.mxu0 0.0
    %556 = vmatpush1.msra.mxu0 0.0
    %557 = vmatprep.mubr.f32.mxu0 0.0
    %558 = vmatmul.mubr.f32.gmra.mrb[0].mxu0 %v420
    %v559 = vpop.f32.mrb[0].mxu0
    %v560 = vadd.f32 0.0, %v559
    %v561 = vpop.f32.mrb[0].mxu0
    %v562 = vadd.f32 0.0, %v561
    %563 = vdwg.mxu0
    %564 = vmatprep.subr.mxu0 %v432
    %565 = vmatpush1.msra.mxu0 %v431
    %566 = vmatprep.subr.mxu0 %v436
    %567 = vmatpush1.msra.mxu0 %v435
    %568 = vmatprep.subr.mxu0 %v440
    %569 = vmatpush1.msra.mxu0 %v439
    %570 = vmatprep.subr.mxu0 %v444
    %571 = vmatpush1.msra.mxu0 %v443
    %572 = vmatprep.subr.mxu0 %v448
    %573 = vmatpush1.msra.mxu0 %v447
    %574 = vmatprep.subr.mxu0 %v452
    %575 = vmatpush1.msra.mxu0 %v451
    %576 = vmatprep.subr.mxu0 %v456
    %577 = vmatpush1.msra.mxu0 %v455
    %578 = vmatprep.subr.mxu0 %v460
    %579 = vmatpush1.msra.mxu0 %v459
    %580 = vmatprep.subr.mxu0 %v464
    %581 = vmatpush1.msra.mxu0 %v463
    %582 = vmatprep.subr.mxu0 %v468
    %583 = vmatpush1.msra.mxu0 %v467
    %584 = vmatprep.subr.mxu0 %v472
    %585 = vmatpush1.msra.mxu0 %v471
    %586 = vmatprep.subr.mxu0 %v476
    %587 = vmatpush1.msra.mxu0 %v475
    %588 = vmatprep.subr.mxu0 %v480
    %589 = vmatpush1.msra.mxu0 %v479
    %590 = vmatprep.subr.mxu0 %v484
    %591 = vmatpush1.msra.mxu0 %v483
    %592 = vmatprep.subr.mxu0 %v488
    %593 = vmatpush1.msra.mxu0 %v487
    %594 = vmatprep.subr.mxu0 %v492
    %595 = vmatpush1.msra.mxu0 %v491
    %596 = vmatprep.subr.mxu0 0.0
    %597 = vmatpush1.msra.mxu0 0.0
    %598 = vmatprep.subr.mxu0 0.0
    %599 = vmatpush1.msra.mxu0 0.0
    %600 = vmatprep.subr.mxu0 0.0
    %601 = vmatpush1.msra.mxu0 0.0
    %602 = vmatprep.subr.mxu0 0.0
    %603 = vmatpush1.msra.mxu0 0.0
    %604 = vmatprep.subr.mxu0 0.0
    %605 = vmatpush1.msra.mxu0 0.0
    %606 = vmatprep.subr.mxu0 0.0
    %607 = vmatpush1.msra.mxu0 0.0
    %608 = vmatprep.subr.mxu0 0.0
    %609 = vmatpush1.msra.mxu0 0.0
    %610 = vmatprep.subr.mxu0 0.0
    %611 = vmatpush1.msra.mxu0 0.0
    %612 = vmatprep.subr.mxu0 0.0
    %613 = vmatpush1.msra.mxu0 0.0
    %614 = vmatprep.subr.mxu0 0.0
    %615 = vmatpush1.msra.mxu0 0.0
    %616 = vmatprep.subr.mxu0 0.0
    %617 = vmatpush1.msra.mxu0 0.0
    %618 = vmatprep.subr.mxu0 0.0
    %619 = vmatpush1.msra.mxu0 0.0
    %620 = vmatprep.subr.mxu0 0.0
    %621 = vmatpush1.msra.mxu0 0.0
    %622 = vmatprep.subr.mxu0 0.0
    %623 = vmatpush1.msra.mxu0 0.0
    %624 = vmatprep.subr.mxu0 0.0
    %625 = vmatpush1.msra.mxu0 0.0
    %626 = vmatprep.subr.mxu0 0.0
    %627 = vmatpush1.msra.mxu0 0.0
    %628 = vmatprep.mubr.f32.mxu0 0.0
    %629 = vmatmul.mubr.f32.gmra.mrb[0].mxu0 %v420
    %v630 = vpop.f32.mrb[0].mxu0
    %v631 = vadd.f32 0.0, %v630
    %v632 = vpop.f32.mrb[0].mxu0
    %v633 = vadd.f32 0.0, %v632
    %634 = vdwg.mxu0
    %v635 = vadd.f32 %v425, %v560
    %v636 = vadd.f32 %v426, %v562
    %v637 = vadd.f32 %v427, %v631
    %v638 = vadd.f32 %v428, %v633
    %v639 = vxor.u32 %v635, 2147483648
    %v640 = vxor.u32 %v636, 2147483648
    %v641 = vxor.u32 %v637, 2147483648
    %v642 = vmul.f32 %v639, 1.442695
    %v643 = vpow.pop %v642
    %v644 = vmul.f32 %v640, 1.442695
    %v645 = vpow.pop %v644
    %v646 = vmul.f32 %v641, 1.442695
    %v647 = vpow.pop %v646
    %v648 = vadd.f32 %v643, 1.0
    %v649 = vadd.f32 %v645, 1.0
    %v650 = vadd.f32 %v647, 1.0
    %v651 = vrcp.pop %v648
    %v652 = vmul.f32 1.0, %v651
    %v653 = vrcp.pop %v649
    %v654 = vmul.f32 1.0, %v653
    %v655 = vrcp.pop %v650
    %v656 = vmul.f32 1.0, %v655
    %v657 = vtanh.pop %v638
    %v658 = vmul.f32 %v654, %v421
    %v659 = vmul.f32 %v652, %v657
    %v660 = vadd.f32 %v658, %v659
    %v661 = vtanh.pop %v660
    %v662 = vmul.f32 %v656, %v661
    %663 = vst [vmem:[#allocation5] sm:$0xff] %v662
    %s664 = smul.u32 1, 4
    %s665 = smul.addr %s664, 8
    %s666 = scalar_lea.vmem [#allocation4], %s665
    %v667 = vld [vmem:[%s666] sm:$0xff]
    %v668 = vld [vmem:[%s666 + $0x8] sm:$0xff]
    %v669 = vld [vmem:[%s666 + $0x10] sm:$0xff]
    %v670 = vld [vmem:[%s666 + $0x18] sm:$0xff]
    %v671 = vld [vmem:[#allocation9] sm:$0xff]
    %v672 = vld [vmem:[#allocation9 + $0x8] sm:$0xff]
    %v673 = vld [vmem:[#allocation9 + $0x10] sm:$0xff]
    %v674 = vld [vmem:[#allocation9 + $0x18] sm:$0xff]
    %v675 = vld [vmem:[#allocation9 + $0x20] sm:$0xff]
    %v676 = vld [vmem:[#allocation9 + $0x28] sm:$0xff]
    %v677 = vld [vmem:[#allocation9 + $0x30] sm:$0xff]
    %v678 = vld [vmem:[#allocation9 + $0x38] sm:$0xff]
    %v679 = vld [vmem:[#allocation9 + $0x40] sm:$0xff]
    %v680 = vld [vmem:[#allocation9 + $0x48] sm:$0xff]
    %v681 = vld [vmem:[#allocation9 + $0x50] sm:$0xff]
    %v682 = vld [vmem:[#allocation9 + $0x58] sm:$0xff]
    %v683 = vld [vmem:[#allocation9 + $0x60] sm:$0xff]
    %v684 = vld [vmem:[#allocation9 + $0x68] sm:$0xff]
    %v685 = vld [vmem:[#allocation9 + $0x70] sm:$0xff]
    %v686 = vld [vmem:[#allocation9 + $0x78] sm:$0xff]
    %v687 = vld [vmem:[#allocation9 + $0x80] sm:$0xff]
    %v688 = vld [vmem:[#allocation9 + $0x88] sm:$0xff]
    %v689 = vld [vmem:[#allocation9 + $0x90] sm:$0xff]
    %v690 = vld [vmem:[#allocation9 + $0x98] sm:$0xff]
    %v691 = vld [vmem:[#allocation9 + $0xa0] sm:$0xff]
    %v692 = vld [vmem:[#allocation9 + $0xa8] sm:$0xff]
    %v693 = vld [vmem:[#allocation9 + $0xb0] sm:$0xff]
    %v694 = vld [vmem:[#allocation9 + $0xb8] sm:$0xff]
    %v695 = vld [vmem:[#allocation9 + $0xc0] sm:$0xff]
    %v696 = vld [vmem:[#allocation9 + $0xc8] sm:$0xff]
    %v697 = vld [vmem:[#allocation9 + $0xd0] sm:$0xff]
    %v698 = vld [vmem:[#allocation9 + $0xd8] sm:$0xff]
    %v699 = vld [vmem:[#allocation9 + $0xe0] sm:$0xff]
    %v700 = vld [vmem:[#allocation9 + $0xe8] sm:$0xff]
    %v701 = vld [vmem:[#allocation9 + $0xf0] sm:$0xff]
    %v702 = vld [vmem:[#allocation9 + $0xf8] sm:$0xff]
    %v703 = vld [vmem:[#allocation9 + $0x100] sm:$0xff]
    %v704 = vld [vmem:[#allocation9 + $0x108] sm:$0xff]
    %v705 = vld [vmem:[#allocation9 + $0x110] sm:$0xff]
    %v706 = vld [vmem:[#allocation9 + $0x118] sm:$0xff]
    %v707 = vld [vmem:[#allocation9 + $0x120] sm:$0xff]
    %v708 = vld [vmem:[#allocation9 + $0x128] sm:$0xff]
    %v709 = vld [vmem:[#allocation9 + $0x130] sm:$0xff]
    %v710 = vld [vmem:[#allocation9 + $0x138] sm:$0xff]
    %v711 = vld [vmem:[#allocation9 + $0x140] sm:$0xff]
    %v712 = vld [vmem:[#allocation9 + $0x148] sm:$0xff]
    %v713 = vld [vmem:[#allocation9 + $0x150] sm:$0xff]
    %v714 = vld [vmem:[#allocation9 + $0x158] sm:$0xff]
    %v715 = vld [vmem:[#allocation9 + $0x160] sm:$0xff]
    %v716 = vld [vmem:[#allocation9 + $0x168] sm:$0xff]
    %v717 = vld [vmem:[#allocation9 + $0x170] sm:$0xff]
    %v718 = vld [vmem:[#allocation9 + $0x178] sm:$0xff]
    %v719 = vld [vmem:[#allocation9 + $0x180] sm:$0xff]
    %v720 = vld [vmem:[#allocation9 + $0x188] sm:$0xff]
    %v721 = vld [vmem:[#allocation9 + $0x190] sm:$0xff]
    %v722 = vld [vmem:[#allocation9 + $0x198] sm:$0xff]
    %v723 = vld [vmem:[#allocation9 + $0x1a0] sm:$0xff]
    %v724 = vld [vmem:[#allocation9 + $0x1a8] sm:$0xff]
    %v725 = vld [vmem:[#allocation9 + $0x1b0] sm:$0xff]
    %v726 = vld [vmem:[#allocation9 + $0x1b8] sm:$0xff]
    %v727 = vld [vmem:[#allocation9 + $0x1c0] sm:$0xff]
    %v728 = vld [vmem:[#allocation9 + $0x1c8] sm:$0xff]
    %v729 = vld [vmem:[#allocation9 + $0x1d0] sm:$0xff]
    %v730 = vld [vmem:[#allocation9 + $0x1d8] sm:$0xff]
    %v731 = vld [vmem:[#allocation9 + $0x1e0] sm:$0xff]
    %v732 = vld [vmem:[#allocation9 + $0x1e8] sm:$0xff]
    %v733 = vld [vmem:[#allocation9 + $0x1f0] sm:$0xff]
    %v734 = vld [vmem:[#allocation9 + $0x1f8] sm:$0xff]
    %735 = vmatprep.subr.mxu0 %v672
    %736 = vmatpush1.msra.mxu0 %v671
    %737 = vmatprep.subr.mxu0 %v676
    %738 = vmatpush1.msra.mxu0 %v675
    %739 = vmatprep.subr.mxu0 %v680
    %740 = vmatpush1.msra.mxu0 %v679
    %741 = vmatprep.subr.mxu0 %v684
    %742 = vmatpush1.msra.mxu0 %v683
    %743 = vmatprep.subr.mxu0 %v688
    %744 = vmatpush1.msra.mxu0 %v687
    %745 = vmatprep.subr.mxu0 %v692
    %746 = vmatpush1.msra.mxu0 %v691
    %747 = vmatprep.subr.mxu0 %v696
    %748 = vmatpush1.msra.mxu0 %v695
    %749 = vmatprep.subr.mxu0 %v700
    %750 = vmatpush1.msra.mxu0 %v699
    %751 = vmatprep.subr.mxu0 %v704
    %752 = vmatpush1.msra.mxu0 %v703
    %753 = vmatprep.subr.mxu0 %v708
    %754 = vmatpush1.msra.mxu0 %v707
    %755 = vmatprep.subr.mxu0 %v712
    %756 = vmatpush1.msra.mxu0 %v711
    %757 = vmatprep.subr.mxu0 %v716
    %758 = vmatpush1.msra.mxu0 %v715
    %759 = vmatprep.subr.mxu0 %v720
    %760 = vmatpush1.msra.mxu0 %v719
    %761 = vmatprep.subr.mxu0 %v724
    %762 = vmatpush1.msra.mxu0 %v723
    %763 = vmatprep.subr.mxu0 %v728
    %764 = vmatpush1.msra.mxu0 %v727
    %765 = vmatprep.subr.mxu0 %v732
    %766 = vmatpush1.msra.mxu0 %v731
    %767 = vmatprep.subr.mxu0 0.0
    %768 = vmatpush1.msra.mxu0 0.0
    %769 = vmatprep.subr.mxu0 0.0
    %770 = vmatpush1.msra.mxu0 0.0
    %771 = vmatprep.subr.mxu0 0.0
    %772 = vmatpush1.msra.mxu0 0.0
    %773 = vmatprep.subr.mxu0 0.0
    %774 = vmatpush1.msra.mxu0 0.0
    %775 = vmatprep.subr.mxu0 0.0
    %776 = vmatpush1.msra.mxu0 0.0
    %777 = vmatprep.subr.mxu0 0.0
    %778 = vmatpush1.msra.mxu0 0.0
    %779 = vmatprep.subr.mxu0 0.0
    %780 = vmatpush1.msra.mxu0 0.0
    %781 = vmatprep.subr.mxu0 0.0
    %782 = vmatpush1.msra.mxu0 0.0
    %783 = vmatprep.subr.mxu0 0.0
    %784 = vmatpush1.msra.mxu0 0.0
    %785 = vmatprep.subr.mxu0 0.0
    %786 = vmatpush1.msra.mxu0 0.0
    %787 = vmatprep.subr.mxu0 0.0
    %788 = vmatpush1.msra.mxu0 0.0
    %789 = vmatprep.subr.mxu0 0.0
    %790 = vmatpush1.msra.mxu0 0.0
    %791 = vmatprep.subr.mxu0 0.0
    %792 = vmatpush1.msra.mxu0 0.0
    %793 = vmatprep.subr.mxu0 0.0
    %794 = vmatpush1.msra.mxu0 0.0
    %795 = vmatprep.subr.mxu0 0.0
    %796 = vmatpush1.msra.mxu0 0.0
    %797 = vmatprep.subr.mxu0 0.0
    %798 = vmatpush1.msra.mxu0 0.0
    %799 = vmatprep.mubr.f32.mxu0 0.0
    %800 = vmatmul.mubr.f32.gmra.mrb[0].mxu0 %v662
    %v801 = vpop.f32.mrb[0].mxu0
    %v802 = vadd.f32 0.0, %v801
    %v803 = vpop.f32.mrb[0].mxu0
    %v804 = vadd.f32 0.0, %v803
    %805 = vdwg.mxu0
    %806 = vmatprep.subr.mxu0 %v674
    %807 = vmatpush1.msra.mxu0 %v673
    %808 = vmatprep.subr.mxu0 %v678
    %809 = vmatpush1.msra.mxu0 %v677
    %810 = vmatprep.subr.mxu0 %v682
    %811 = vmatpush1.msra.mxu0 %v681
    %812 = vmatprep.subr.mxu0 %v686
    %813 = vmatpush1.msra.mxu0 %v685
    %814 = vmatprep.subr.mxu0 %v690
    %815 = vmatpush1.msra.mxu0 %v689
    %816 = vmatprep.subr.mxu0 %v694
    %817 = vmatpush1.msra.mxu0 %v693
    %818 = vmatprep.subr.mxu0 %v698
    %819 = vmatpush1.msra.mxu0 %v697
    %820 = vmatprep.subr.mxu0 %v702
    %821 = vmatpush1.msra.mxu0 %v701
    %822 = vmatprep.subr.mxu0 %v706
    %823 = vmatpush1.msra.mxu0 %v705
    %824 = vmatprep.subr.mxu0 %v710
    %825 = vmatpush1.msra.mxu0 %v709
    %826 = vmatprep.subr.mxu0 %v714
    %827 = vmatpush1.msra.mxu0 %v713
    %828 = vmatprep.subr.mxu0 %v718
    %829 = vmatpush1.msra.mxu0 %v717
    %830 = vmatprep.subr.mxu0 %v722
    %831 = vmatpush1.msra.mxu0 %v721
    %832 = vmatprep.subr.mxu0 %v726
    %833 = vmatpush1.msra.mxu0 %v725
    %834 = vmatprep.subr.mxu0 %v730
    %835 = vmatpush1.msra.mxu0 %v729
    %836 = vmatprep.subr.mxu0 %v734
    %837 = vmatpush1.msra.mxu0 %v733
    %838 = vmatprep.subr.mxu0 0.0
    %839 = vmatpush1.msra.mxu0 0.0
    %840 = vmatprep.subr.mxu0 0.0
    %841 = vmatpush1.msra.mxu0 0.0
    %842 = vmatprep.subr.mxu0 0.0
    %843 = vmatpush1.msra.mxu0 0.0
    %844 = vmatprep.subr.mxu0 0.0
    %845 = vmatpush1.msra.mxu0 0.0
    %846 = vmatprep.subr.mxu0 0.0
    %847 = vmatpush1.msra.mxu0 0.0
    %848 = vmatprep.subr.mxu0 0.0
    %849 = vmatpush1.msra.mxu0 0.0
    %850 = vmatprep.subr.mxu0 0.0
    %851 = vmatpush1.msra.mxu0 0.0
    %852 = vmatprep.subr.mxu0 0.0
    %853 = vmatpush1.msra.mxu0 0.0
    %854 = vmatprep.subr.mxu0 0.0
    %855 = vmatpush1.msra.mxu0 0.0
    %856 = vmatprep.subr.mxu0 0.0
    %857 = vmatpush1.msra.mxu0 0.0
    %858 = vmatprep.subr.mxu0 0.0
    %859 = vmatpush1.msra.mxu0 0.0
    %860 = vmatprep.subr.mxu0 0.0
    %861 = vmatpush1.msra.mxu0 0.0
    %862 = vmatprep.subr.mxu0 0.0
    %863 = vmatpush1.msra.mxu0 0.0
    %864 = vmatprep.subr.mxu0 0.0
    %865 = vmatpush1.msra.mxu0 0.0
    %866 = vmatprep.subr.mxu0 0.0
    %867 = vmatpush1.msra.mxu0 0.0
    %868 = vmatprep.subr.mxu0 0.0
    %869 = vmatpush1.msra.mxu0 0.0
    %870 = vmatprep.mubr.f32.mxu0 0.0
    %871 = vmatmul.mubr.f32.gmra.mrb[0].mxu0 %v662
    %v872 = vpop.f32.mrb[0].mxu0
    %v873 = vadd.f32 0.0, %v872
    %v874 = vpop.f32.mrb[0].mxu0
    %v875 = vadd.f32 0.0, %v874
    %876 = vdwg.mxu0
    %v877 = vadd.f32 %v667, %v802
    %v878 = vadd.f32 %v668, %v804
    %v879 = vadd.f32 %v669, %v873
    %v880 = vadd.f32 %v670, %v875
    %v881 = vxor.u32 %v877, 2147483648
    %v882 = vxor.u32 %v878, 2147483648
    %v883 = vxor.u32 %v879, 2147483648
    %v884 = vmul.f32 %v881, 1.442695
    %v885 = vpow.pop %v884
    %v886 = vmul.f32 %v882, 1.442695
    %v887 = vpow.pop %v886
    %v888 = vmul.f32 %v883, 1.442695
    %v889 = vpow.pop %v888
    %v890 = vadd.f32 %v885, 1.0
    %v891 = vadd.f32 %v887, 1.0
    %v892 = vadd.f32 %v889, 1.0
    %v893 = vrcp.pop %v890
    %v894 = vmul.f32 1.0, %v893
    %v895 = vrcp.pop %v891
    %v896 = vmul.f32 1.0, %v895
    %v897 = vrcp.pop %v892
    %v898 = vmul.f32 1.0, %v897
    %v899 = vtanh.pop %v880
    %v900 = vmul.f32 %v896, %v660
    %v901 = vmul.f32 %v894, %v899
    %v902 = vadd.f32 %v900, %v901
    %v903 = vtanh.pop %v902
    %v904 = vmul.f32 %v898, %v903
    %s905 = scalar_lea.vmem [#allocation5], 8
    %906 = vst [vmem:[%s905] sm:$0xff] %v904
    %s907 = smul.u32 2, 4
    %s908 = smul.addr %s907, 8
    %s909 = scalar_lea.vmem [#allocation4], %s908
    %v910 = vld [vmem:[%s909] sm:$0xff]
    %v911 = vld [vmem:[%s909 + $0x8] sm:$0xff]
    %v912 = vld [vmem:[%s909 + $0x10] sm:$0xff]
    %v913 = vld [vmem:[%s909 + $0x18] sm:$0xff]
    %v914 = vld [vmem:[#allocation9] sm:$0xff]
    %v915 = vld [vmem:[#allocation9 + $0x8] sm:$0xff]
    %v916 = vld [vmem:[#allocation9 + $0x10] sm:$0xff]
    %v917 = vld [vmem:[#allocation9 + $0x18] sm:$0xff]
    %v918 = vld [vmem:[#allocation9 + $0x20] sm:$0xff]
    %v919 = vld [vmem:[#allocation9 + $0x28] sm:$0xff]
    %v920 = vld [vmem:[#allocation9 + $0x30] sm:$0xff]
    %v921 = vld [vmem:[#allocation9 + $0x38] sm:$0xff]
    %v922 = vld [vmem:[#allocation9 + $0x40] sm:$0xff]
    %v923 = vld [vmem:[#allocation9 + $0x48] sm:$0xff]
    %v924 = vld [vmem:[#allocation9 + $0x50] sm:$0xff]
    %v925 = vld [vmem:[#allocation9 + $0x58] sm:$0xff]
    %v926 = vld [vmem:[#allocation9 + $0x60] sm:$0xff]
    %v927 = vld [vmem:[#allocation9 + $0x68] sm:$0xff]
    %v928 = vld [vmem:[#allocation9 + $0x70] sm:$0xff]
    %v929 = vld [vmem:[#allocation9 + $0x78] sm:$0xff]
    %v930 = vld [vmem:[#allocation9 + $0x80] sm:$0xff]
    %v931 = vld [vmem:[#allocation9 + $0x88] sm:$0xff]
    %v932 = vld [vmem:[#allocation9 + $0x90] sm:$0xff]
    %v933 = vld [vmem:[#allocation9 + $0x98] sm:$0xff]
    %v934 = vld [vmem:[#allocation9 + $0xa0] sm:$0xff]
    %v935 = vld [vmem:[#allocation9 + $0xa8] sm:$0xff]
    %v936 = vld [vmem:[#allocation9 + $0xb0] sm:$0xff]
    %v937 = vld [vmem:[#allocation9 + $0xb8] sm:$0xff]
    %v938 = vld [vmem:[#allocation9 + $0xc0] sm:$0xff]
    %v939 = vld [vmem:[#allocation9 + $0xc8] sm:$0xff]
    %v940 = vld [vmem:[#allocation9 + $0xd0] sm:$0xff]
    %v941 = vld [vmem:[#allocation9 + $0xd8] sm:$0xff]
    %v942 = vld [vmem:[#allocation9 + $0xe0] sm:$0xff]
    %v943 = vld [vmem:[#allocation9 + $0xe8] sm:$0xff]
    %v944 = vld [vmem:[#allocation9 + $0xf0] sm:$0xff]
    %v945 = vld [vmem:[#allocation9 + $0xf8] sm:$0xff]
    %v946 = vld [vmem:[#allocation9 + $0x100] sm:$0xff]
    %v947 = vld [vmem:[#allocation9 + $0x108] sm:$0xff]
    %v948 = vld [vmem:[#allocation9 + $0x110] sm:$0xff]
    %v949 = vld [vmem:[#allocation9 + $0x118] sm:$0xff]
    %v950 = vld [vmem:[#allocation9 + $0x120] sm:$0xff]
    %v951 = vld [vmem:[#allocation9 + $0x128] sm:$0xff]
    %v952 = vld [vmem:[#allocation9 + $0x130] sm:$0xff]
    %v953 = vld [vmem:[#allocation9 + $0x138] sm:$0xff]
    %v954 = vld [vmem:[#allocation9 + $0x140] sm:$0xff]
    %v955 = vld [vmem:[#allocation9 + $0x148] sm:$0xff]
    %v956 = vld [vmem:[#allocation9 + $0x150] sm:$0xff]
    %v957 = vld [vmem:[#allocation9 + $0x158] sm:$0xff]
    %v958 = vld [vmem:[#allocation9 + $0x160] sm:$0xff]
    %v959 = vld [vmem:[#allocation9 + $0x168] sm:$0xff]
    %v960 = vld [vmem:[#allocation9 + $0x170] sm:$0xff]
    %v961 = vld [vmem:[#allocation9 + $0x178] sm:$0xff]
    %v962 = vld [vmem:[#allocation9 + $0x180] sm:$0xff]
    %v963 = vld [vmem:[#allocation9 + $0x188] sm:$0xff]
    %v964 = vld [vmem:[#allocation9 + $0x190] sm:$0xff]
    %v965 = vld [vmem:[#allocation9 + $0x198] sm:$0xff]
    %v966 = vld [vmem:[#allocation9 + $0x1a0] sm:$0xff]
    %v967 = vld [vmem:[#allocation9 + $0x1a8] sm:$0xff]
    %v968 = vld [vmem:[#allocation9 + $0x1b0] sm:$0xff]
    %v969 = vld [vmem:[#allocation9 + $0x1b8] sm:$0xff]
    %v970 = vld [vmem:[#allocation9 + $0x1c0] sm:$0xff]
    %v971 = vld [vmem:[#allocation9 + $0x1c8] sm:$0xff]
    %v972 = vld [vmem:[#allocation9 + $0x1d0] sm:$0xff]
    %v973 = vld [vmem:[#allocation9 + $0x1d8] sm:$0xff]
    %v974 = vld [vmem:[#allocation9 + $0x1e0] sm:$0xff]
    %v975 = vld [vmem:[#allocation9 + $0x1e8] sm:$0xff]
    %v976 = vld [vmem:[#allocation9 + $0x1f0] sm:$0xff]
    %v977 = vld [vmem:[#allocation9 + $0x1f8] sm:$0xff]
    %978 = vmatprep.subr.mxu0 %v915
    %979 = vmatpush1.msra.mxu0 %v914
    %980 = vmatprep.subr.mxu0 %v919
    %981 = vmatpush1.msra.mxu0 %v918
    %982 = vmatprep.subr.mxu0 %v923
    %983 = vmatpush1.msra.mxu0 %v922
    %984 = vmatprep.subr.mxu0 %v927
    %985 = vmatpush1.msra.mxu0 %v926
    %986 = vmatprep.subr.mxu0 %v931
    %987 = vmatpush1.msra.mxu0 %v930
    %988 = vmatprep.subr.mxu0 %v935
    %989 = vmatpush1.msra.mxu0 %v934
    %990 = vmatprep.subr.mxu0 %v939
    %991 = vmatpush1.msra.mxu0 %v938
    %992 = vmatprep.subr.mxu0 %v943
    %993 = vmatpush1.msra.mxu0 %v942
    %994 = vmatprep.subr.mxu0 %v947
    %995 = vmatpush1.msra.mxu0 %v946
    %996 = vmatprep.subr.mxu0 %v951
    %997 = vmatpush1.msra.mxu0 %v950
    %998 = vmatprep.subr.mxu0 %v955
    %999 = vmatpush1.msra.mxu0 %v954
    %1000 = vmatprep.subr.mxu0 %v959
    %1001 = vmatpush1.msra.mxu0 %v958
    %1002 = vmatprep.subr.mxu0 %v963
    %1003 = vmatpush1.msra.mxu0 %v962
    %1004 = vmatprep.subr.mxu0 %v967
    %1005 = vmatpush1.msra.mxu0 %v966
    %1006 = vmatprep.subr.mxu0 %v971
    %1007 = vmatpush1.msra.mxu0 %v970
    %1008 = vmatprep.subr.mxu0 %v975
    %1009 = vmatpush1.msra.mxu0 %v974
    %1010 = vmatprep.subr.mxu0 0.0
    %1011 = vmatpush1.msra.mxu0 0.0
    %1012 = vmatprep.subr.mxu0 0.0
    %1013 = vmatpush1.msra.mxu0 0.0
    %1014 = vmatprep.subr.mxu0 0.0
    %1015 = vmatpush1.msra.mxu0 0.0
    %1016 = vmatprep.subr.mxu0 0.0
    %1017 = vmatpush1.msra.mxu0 0.0
    %1018 = vmatprep.subr.mxu0 0.0
    %1019 = vmatpush1.msra.mxu0 0.0
    %1020 = vmatprep.subr.mxu0 0.0
    %1021 = vmatpush1.msra.mxu0 0.0
    %1022 = vmatprep.subr.mxu0 0.0
    %1023 = vmatpush1.msra.mxu0 0.0
    %1024 = vmatprep.subr.mxu0 0.0
    %1025 = vmatpush1.msra.mxu0 0.0
    %1026 = vmatprep.subr.mxu0 0.0
    %1027 = vmatpush1.msra.mxu0 0.0
    %1028 = vmatprep.subr.mxu0 0.0
    %1029 = vmatpush1.msra.mxu0 0.0
    %1030 = vmatprep.subr.mxu0 0.0
    %1031 = vmatpush1.msra.mxu0 0.0
    %1032 = vmatprep.subr.mxu0 0.0
    %1033 = vmatpush1.msra.mxu0 0.0
    %1034 = vmatprep.subr.mxu0 0.0
    %1035 = vmatpush1.msra.mxu0 0.0
    %1036 = vmatprep.subr.mxu0 0.0
    %1037 = vmatpush1.msra.mxu0 0.0
    %1038 = vmatprep.subr.mxu0 0.0
    %1039 = vmatpush1.msra.mxu0 0.0
    %1040 = vmatprep.subr.mxu0 0.0
    %1041 = vmatpush1.msra.mxu0 0.0
    %1042 = vmatprep.mubr.f32.mxu0 0.0
    %1043 = vmatmul.mubr.f32.gmra.mrb[0].mxu0 %v904
    %v1044 = vpop.f32.mrb[0].mxu0
    %v1045 = vadd.f32 0.0, %v1044
    %v1046 = vpop.f32.mrb[0].mxu0
    %v1047 = vadd.f32 0.0, %v1046
    %1048 = vdwg.mxu0
    %1049 = vmatprep.subr.mxu0 %v917
    %1050 = vmatpush1.msra.mxu0 %v916
    %1051 = vmatprep.subr.mxu0 %v921
    %1052 = vmatpush1.msra.mxu0 %v920
    %1053 = vmatprep.subr.mxu0 %v925
    %1054 = vmatpush1.msra.mxu0 %v924
    %1055 = vmatprep.subr.mxu0 %v929
    %1056 = vmatpush1.msra.mxu0 %v928
    %1057 = vmatprep.subr.mxu0 %v933
    %1058 = vmatpush1.msra.mxu0 %v932
    %1059 = vmatprep.subr.mxu0 %v937
    %1060 = vmatpush1.msra.mxu0 %v936
    %1061 = vmatprep.subr.mxu0 %v941
    %1062 = vmatpush1.msra.mxu0 %v940
    %1063 = vmatprep.subr.mxu0 %v945
    %1064 = vmatpush1.msra.mxu0 %v944
    %1065 = vmatprep.subr.mxu0 %v949
    %1066 = vmatpush1.msra.mxu0 %v948
    %1067 = vmatprep.subr.mxu0 %v953
    %1068 = vmatpush1.msra.mxu0 %v952
    %1069 = vmatprep.subr.mxu0 %v957
    %1070 = vmatpush1.msra.mxu0 %v956
    %1071 = vmatprep.subr.mxu0 %v961
    %1072 = vmatpush1.msra.mxu0 %v960
    %1073 = vmatprep.subr.mxu0 %v965
    %1074 = vmatpush1.msra.mxu0 %v964
    %1075 = vmatprep.subr.mxu0 %v969
    %1076 = vmatpush1.msra.mxu0 %v968
    %1077 = vmatprep.subr.mxu0 %v973
    %1078 = vmatpush1.msra.mxu0 %v972
    %1079 = vmatprep.subr.mxu0 %v977
    %1080 = vmatpush1.msra.mxu0 %v976
    %1081 = vmatprep.subr.mxu0 0.0
    %1082 = vmatpush1.msra.mxu0 0.0
    %1083 = vmatprep.subr.mxu0 0.0
    %1084 = vmatpush1.msra.mxu0 0.0
    %1085 = vmatprep.subr.mxu0 0.0
    %1086 = vmatpush1.msra.mxu0 0.0
    %1087 = vmatprep.subr.mxu0 0.0
    %1088 = vmatpush1.msra.mxu0 0.0
    %1089 = vmatprep.subr.mxu0 0.0
    %1090 = vmatpush1.msra.mxu0 0.0
    %1091 = vmatprep.subr.mxu0 0.0
    %1092 = vmatpush1.msra.mxu0 0.0
    %1093 = vmatprep.subr.mxu0 0.0
    %1094 = vmatpush1.msra.mxu0 0.0
    %1095 = vmatprep.subr.mxu0 0.0
    %1096 = vmatpush1.msra.mxu0 0.0
    %1097 = vmatprep.subr.mxu0 0.0
    %1098 = vmatpush1.msra.mxu0 0.0
    %1099 = vmatprep.subr.mxu0 0.0
    %1100 = vmatpush1.msra.mxu0 0.0
    %1101 = vmatprep.subr.mxu0 0.0
    %1102 = vmatpush1.msra.mxu0 0.0
    %1103 = vmatprep.subr.mxu0 0.0
    %1104 = vmatpush1.msra.mxu0 0.0
    %1105 = vmatprep.subr.mxu0 0.0
    %1106 = vmatpush1.msra.mxu0 0.0
    %1107 = vmatprep.subr.mxu0 0.0
    %1108 = vmatpush1.msra.mxu0 0.0
    %1109 = vmatprep.subr.mxu0 0.0
    %1110 = vmatpush1.msra.mxu0 0.0
    %1111 = vmatprep.subr.mxu0 0.0
    %1112 = vmatpush1.msra.mxu0 0.0
    %1113 = vmatprep.mubr.f32.mxu0 0.0
    %1114 = vmatmul.mubr.f32.gmra.mrb[0].mxu0 %v904
    %v1115 = vpop.f32.mrb[0].mxu0
    %v1116 = vadd.f32 0.0, %v1115
    %v1117 = vpop.f32.mrb[0].mxu0
    %v1118 = vadd.f32 0.0, %v1117
    %1119 = vdwg.mxu0
    %v1120 = vadd.f32 %v910, %v1045
    %v1121 = vadd.f32 %v911, %v1047
    %v1122 = vadd.f32 %v912, %v1116
    %v1123 = vadd.f32 %v913, %v1118
    %v1124 = vxor.u32 %v1120, 2147483648
    %v1125 = vxor.u32 %v1121, 2147483648
    %v1126 = vxor.u32 %v1122, 2147483648
    %v1127 = vmul.f32 %v1124, 1.442695
    %v1128 = vpow.pop %v1127
    %v1129 = vmul.f32 %v1125, 1.442695
    %v1130 = vpow.pop %v1129
    %v1131 = vmul.f32 %v1126, 1.442695
    %v1132 = vpow.pop %v1131
    %v1133 = vadd.f32 %v1128, 1.0
    %v1134 = vadd.f32 %v1130, 1.0
    %v1135 = vadd.f32 %v1132, 1.0
    %v1136 = vrcp.pop %v1133
    %v1137 = vmul.f32 1.0, %v1136
    %v1138 = vrcp.pop %v1134
    %v1139 = vmul.f32 1.0, %v1138
    %v1140 = vrcp.pop %v1135
    %v1141 = vmul.f32 1.0, %v1140
    %v1142 = vtanh.pop %v1123
    %v1143 = vmul.f32 %v1139, %v902
    %v1144 = vmul.f32 %v1137, %v1142
    %v1145 = vadd.f32 %v1143, %v1144
    %v1146 = vtanh.pop %v1145
    %v1147 = vmul.f32 %v1141, %v1146
    %s1148 = scalar_lea.vmem [#allocation5], 16
    %1149 = vst [vmem:[%s1148] sm:$0xff] %v1147
    %s1150 = smul.u32 3, 4
    %s1151 = smul.addr %s1150, 8
    %s1152 = scalar_lea.vmem [#allocation4], %s1151
    %v1153 = vld [vmem:[%s1152] sm:$0xff]
    %v1154 = vld [vmem:[%s1152 + $0x8] sm:$0xff]
    %v1155 = vld [vmem:[%s1152 + $0x10] sm:$0xff]
    %v1156 = vld [vmem:[%s1152 + $0x18] sm:$0xff]
    %v1157 = vld [vmem:[#allocation9] sm:$0xff]
    %v1158 = vld [vmem:[#allocation9 + $0x8] sm:$0xff]
    %v1159 = vld [vmem:[#allocation9 + $0x10] sm:$0xff]
    %v1160 = vld [vmem:[#allocation9 + $0x18] sm:$0xff]
    %v1161 = vld [vmem:[#allocation9 + $0x20] sm:$0xff]
    %v1162 = vld [vmem:[#allocation9 + $0x28] sm:$0xff]
    %v1163 = vld [vmem:[#allocation9 + $0x30] sm:$0xff]
    %v1164 = vld [vmem:[#allocation9 + $0x38] sm:$0xff]
    %v1165 = vld [vmem:[#allocation9 + $0x40] sm:$0xff]
    %v1166 = vld [vmem:[#allocation9 + $0x48] sm:$0xff]
    %v1167 = vld [vmem:[#allocation9 + $0x50] sm:$0xff]
    %v1168 = vld [vmem:[#allocation9 + $0x58] sm:$0xff]
    %v1169 = vld [vmem:[#allocation9 + $0x60] sm:$0xff]
    %v1170 = vld [vmem:[#allocation9 + $0x68] sm:$0xff]
    %v1171 = vld [vmem:[#allocation9 + $0x70] sm:$0xff]
    %v1172 = vld [vmem:[#allocation9 + $0x78] sm:$0xff]
    %v1173 = vld [vmem:[#allocation9 + $0x80] sm:$0xff]
    %v1174 = vld [vmem:[#allocation9 + $0x88] sm:$0xff]
    %v1175 = vld [vmem:[#allocation9 + $0x90] sm:$0xff]
    %v1176 = vld [vmem:[#allocation9 + $0x98] sm:$0xff]
    %v1177 = vld [vmem:[#allocation9 + $0xa0] sm:$0xff]
    %v1178 = vld [vmem:[#allocation9 + $0xa8] sm:$0xff]
    %v1179 = vld [vmem:[#allocation9 + $0xb0] sm:$0xff]
    %v1180 = vld [vmem:[#allocation9 + $0xb8] sm:$0xff]
    %v1181 = vld [vmem:[#allocation9 + $0xc0] sm:$0xff]
    %v1182 = vld [vmem:[#allocation9 + $0xc8] sm:$0xff]
    %v1183 = vld [vmem:[#allocation9 + $0xd0] sm:$0xff]
    %v1184 = vld [vmem:[#allocation9 + $0xd8] sm:$0xff]
    %v1185 = vld [vmem:[#allocation9 + $0xe0] sm:$0xff]
    %v1186 = vld [vmem:[#allocation9 + $0xe8] sm:$0xff]
    %v1187 = vld [vmem:[#allocation9 + $0xf0] sm:$0xff]
    %v1188 = vld [vmem:[#allocation9 + $0xf8] sm:$0xff]
    %v1189 = vld [vmem:[#allocation9 + $0x100] sm:$0xff]
    %v1190 = vld [vmem:[#allocation9 + $0x108] sm:$0xff]
    %v1191 = vld [vmem:[#allocation9 + $0x110] sm:$0xff]
    %v1192 = vld [vmem:[#allocation9 + $0x118] sm:$0xff]
    %v1193 = vld [vmem:[#allocation9 + $0x120] sm:$0xff]
    %v1194 = vld [vmem:[#allocation9 + $0x128] sm:$0xff]
    %v1195 = vld [vmem:[#allocation9 + $0x130] sm:$0xff]
    %v1196 = vld [vmem:[#allocation9 + $0x138] sm:$0xff]
    %v1197 = vld [vmem:[#allocation9 + $0x140] sm:$0xff]
    %v1198 = vld [vmem:[#allocation9 + $0x148] sm:$0xff]
    %v1199 = vld [vmem:[#allocation9 + $0x150] sm:$0xff]
    %v1200 = vld [vmem:[#allocation9 + $0x158] sm:$0xff]
    %v1201 = vld [vmem:[#allocation9 + $0x160] sm:$0xff]
    %v1202 = vld [vmem:[#allocation9 + $0x168] sm:$0xff]
    %v1203 = vld [vmem:[#allocation9 + $0x170] sm:$0xff]
    %v1204 = vld [vmem:[#allocation9 + $0x178] sm:$0xff]
    %v1205 = vld [vmem:[#allocation9 + $0x180] sm:$0xff]
    %v1206 = vld [vmem:[#allocation9 + $0x188] sm:$0xff]
    %v1207 = vld [vmem:[#allocation9 + $0x190] sm:$0xff]
    %v1208 = vld [vmem:[#allocation9 + $0x198] sm:$0xff]
    %v1209 = vld [vmem:[#allocation9 + $0x1a0] sm:$0xff]
    %v1210 = vld [vmem:[#allocation9 + $0x1a8] sm:$0xff]
    %v1211 = vld [vmem:[#allocation9 + $0x1b0] sm:$0xff]
    %v1212 = vld [vmem:[#allocation9 + $0x1b8] sm:$0xff]
    %v1213 = vld [vmem:[#allocation9 + $0x1c0] sm:$0xff]
    %v1214 = vld [vmem:[#allocation9 + $0x1c8] sm:$0xff]
    %v1215 = vld [vmem:[#allocation9 + $0x1d0] sm:$0xff]
    %v1216 = vld [vmem:[#allocation9 + $0x1d8] sm:$0xff]
    %v1217 = vld [vmem:[#allocation9 + $0x1e0] sm:$0xff]
    %v1218 = vld [vmem:[#allocation9 + $0x1e8] sm:$0xff]
    %v1219 = vld [vmem:[#allocation9 + $0x1f0] sm:$0xff]
    %v1220 = vld [vmem:[#allocation9 + $0x1f8] sm:$0xff]
    %1221 = vmatprep.subr.mxu0 %v1158
    %1222 = vmatpush1.msra.mxu0 %v1157
    %1223 = vmatprep.subr.mxu0 %v1162
    %1224 = vmatpush1.msra.mxu0 %v1161
    %1225 = vmatprep.subr.mxu0 %v1166
    %1226 = vmatpush1.msra.mxu0 %v1165
    %1227 = vmatprep.subr.mxu0 %v1170
    %1228 = vmatpush1.msra.mxu0 %v1169
    %1229 = vmatprep.subr.mxu0 %v1174
    %1230 = vmatpush1.msra.mxu0 %v1173
    %1231 = vmatprep.subr.mxu0 %v1178
    %1232 = vmatpush1.msra.mxu0 %v1177
    %1233 = vmatprep.subr.mxu0 %v1182
    %1234 = vmatpush1.msra.mxu0 %v1181
    %1235 = vmatprep.subr.mxu0 %v1186
    %1236 = vmatpush1.msra.mxu0 %v1185
    %1237 = vmatprep.subr.mxu0 %v1190
    %1238 = vmatpush1.msra.mxu0 %v1189
    %1239 = vmatprep.subr.mxu0 %v1194
    %1240 = vmatpush1.msra.mxu0 %v1193
    %1241 = vmatprep.subr.mxu0 %v1198
    %1242 = vmatpush1.msra.mxu0 %v1197
    %1243 = vmatprep.subr.mxu0 %v1202
    %1244 = vmatpush1.msra.mxu0 %v1201
    %1245 = vmatprep.subr.mxu0 %v1206
    %1246 = vmatpush1.msra.mxu0 %v1205
    %1247 = vmatprep.subr.mxu0 %v1210
    %1248 = vmatpush1.msra.mxu0 %v1209
    %1249 = vmatprep.subr.mxu0 %v1214
    %1250 = vmatpush1.msra.mxu0 %v1213
    %1251 = vmatprep.subr.mxu0 %v1218
    %1252 = vmatpush1.msra.mxu0 %v1217
    %1253 = vmatprep.subr.mxu0 0.0
    %1254 = vmatpush1.msra.mxu0 0.0
    %1255 = vmatprep.subr.mxu0 0.0
    %1256 = vmatpush1.msra.mxu0 0.0
    %1257 = vmatprep.subr.mxu0 0.0
    %1258 = vmatpush1.msra.mxu0 0.0
    %1259 = vmatprep.subr.mxu0 0.0
    %1260 = vmatpush1.msra.mxu0 0.0
    %1261 = vmatprep.subr.mxu0 0.0
    %1262 = vmatpush1.msra.mxu0 0.0
    %1263 = vmatprep.subr.mxu0 0.0
    %1264 = vmatpush1.msra.mxu0 0.0
    %1265 = vmatprep.subr.mxu0 0.0
    %1266 = vmatpush1.msra.mxu0 0.0
    %1267 = vmatprep.subr.mxu0 0.0
    %1268 = vmatpush1.msra.mxu0 0.0
    %1269 = vmatprep.subr.mxu0 0.0
    %1270 = vmatpush1.msra.mxu0 0.0
    %1271 = vmatprep.subr.mxu0 0.0
    %1272 = vmatpush1.msra.mxu0 0.0
    %1273 = vmatprep.subr.mxu0 0.0
    %1274 = vmatpush1.msra.mxu0 0.0
    %1275 = vmatprep.subr.mxu0 0.0
    %1276 = vmatpush1.msra.mxu0 0.0
    %1277 = vmatprep.subr.mxu0 0.0
    %1278 = vmatpush1.msra.mxu0 0.0
    %1279 = vmatprep.subr.mxu0 0.0
    %1280 = vmatpush1.msra.mxu0 0.0
    %1281 = vmatprep.subr.mxu0 0.0
    %1282 = vmatpush1.msra.mxu0 0.0
    %1283 = vmatprep.subr.mxu0 0.0
    %1284 = vmatpush1.msra.mxu0 0.0
    %1285 = vmatprep.mubr.f32.mxu0 0.0
    %1286 = vmatmul.mubr.f32.gmra.mrb[0].mxu0 %v1147
    %v1287 = vpop.f32.mrb[0].mxu0
    %v1288 = vadd.f32 0.0, %v1287
    %v1289 = vpop.f32.mrb[0].mxu0
    %v1290 = vadd.f32 0.0, %v1289
    %1291 = vdwg.mxu0
    %1292 = vmatprep.subr.mxu0 %v1160
    %1293 = vmatpush1.msra.mxu0 %v1159
    %1294 = vmatprep.subr.mxu0 %v1164
    %1295 = vmatpush1.msra.mxu0 %v1163
    %1296 = vmatprep.subr.mxu0 %v1168
    %1297 = vmatpush1.msra.mxu0 %v1167
    %1298 = vmatprep.subr.mxu0 %v1172
    %1299 = vmatpush1.msra.mxu0 %v1171
    %1300 = vmatprep.subr.mxu0 %v1176
    %1301 = vmatpush1.msra.mxu0 %v1175
    %1302 = vmatprep.subr.mxu0 %v1180
    %1303 = vmatpush1.msra.mxu0 %v1179
    %1304 = vmatprep.subr.mxu0 %v1184
    %1305 = vmatpush1.msra.mxu0 %v1183
    %1306 = vmatprep.subr.mxu0 %v1188
    %1307 = vmatpush1.msra.mxu0 %v1187
    %1308 = vmatprep.subr.mxu0 %v1192
    %1309 = vmatpush1.msra.mxu0 %v1191
    %1310 = vmatprep.subr.mxu0 %v1196
    %1311 = vmatpush1.msra.mxu0 %v1195
    %1312 = vmatprep.subr.mxu0 %v1200
    %1313 = vmatpush1.msra.mxu0 %v1199
    %1314 = vmatprep.subr.mxu0 %v1204
    %1315 = vmatpush1.msra.mxu0 %v1203
    %1316 = vmatprep.subr.mxu0 %v1208
    %1317 = vmatpush1.msra.mxu0 %v1207
    %1318 = vmatprep.subr.mxu0 %v1212
    %1319 = vmatpush1.msra.mxu0 %v1211
    %1320 = vmatprep.subr.mxu0 %v1216
    %1321 = vmatpush1.msra.mxu0 %v1215
    %1322 = vmatprep.subr.mxu0 %v1220
    %1323 = vmatpush1.msra.mxu0 %v1219
    %1324 = vmatprep.subr.mxu0 0.0
    %1325 = vmatpush1.msra.mxu0 0.0
    %1326 = vmatprep.subr.mxu0 0.0
    %1327 = vmatpush1.msra.mxu0 0.0
    %1328 = vmatprep.subr.mxu0 0.0
    %1329 = vmatpush1.msra.mxu0 0.0
    %1330 = vmatprep.subr.mxu0 0.0
    %1331 = vmatpush1.msra.mxu0 0.0
    %1332 = vmatprep.subr.mxu0 0.0
    %1333 = vmatpush1.msra.mxu0 0.0
    %1334 = vmatprep.subr.mxu0 0.0
    %1335 = vmatpush1.msra.mxu0 0.0
    %1336 = vmatprep.subr.mxu0 0.0
    %1337 = vmatpush1.msra.mxu0 0.0
    %1338 = vmatprep.subr.mxu0 0.0
    %1339 = vmatpush1.msra.mxu0 0.0
    %1340 = vmatprep.subr.mxu0 0.0
    %1341 = vmatpush1.msra.mxu0 0.0
    %1342 = vmatprep.subr.mxu0 0.0
    %1343 = vmatpush1.msra.mxu0 0.0
    %1344 = vmatprep.subr.mxu0 0.0
    %1345 = vmatpush1.msra.mxu0 0.0
    %1346 = vmatprep.subr.mxu0 0.0
    %1347 = vmatpush1.msra.mxu0 0.0
    %1348 = vmatprep.subr.mxu0 0.0
    %1349 = vmatpush1.msra.mxu0 0.0
    %1350 = vmatprep.subr.mxu0 0.0
    %1351 = vmatpush1.msra.mxu0 0.0
    %1352 = vmatprep.subr.mxu0 0.0
    %1353 = vmatpush1.msra.mxu0 0.0
    %1354 = vmatprep.subr.mxu0 0.0
    %1355 = vmatpush1.msra.mxu0 0.0
    %1356 = vmatprep.mubr.f32.mxu0 0.0
    %1357 = vmatmul.mubr.f32.gmra.mrb[0].mxu0 %v1147
    %v1358 = vpop.f32.mrb[0].mxu0
    %v1359 = vadd.f32 0.0, %v1358
    %v1360 = vpop.f32.mrb[0].mxu0
    %v1361 = vadd.f32 0.0, %v1360
    %1362 = vdwg.mxu0
    %v1363 = vadd.f32 %v1153, %v1288
    %v1364 = vadd.f32 %v1154, %v1290
    %v1365 = vadd.f32 %v1155, %v1359
    %v1366 = vadd.f32 %v1156, %v1361
    %v1367 = vxor.u32 %v1363, 2147483648
    %v1368 = vxor.u32 %v1364, 2147483648
    %v1369 = vxor.u32 %v1365, 2147483648
    %v1370 = vmul.f32 %v1367, 1.442695
    %v1371 = vpow.pop %v1370
    %v1372 = vmul.f32 %v1368, 1.442695
    %v1373 = vpow.pop %v1372
    %v1374 = vmul.f32 %v1369, 1.442695
    %v1375 = vpow.pop %v1374
    %v1376 = vadd.f32 %v1371, 1.0
    %v1377 = vadd.f32 %v1373, 1.0
    %v1378 = vadd.f32 %v1375, 1.0
    %v1379 = vrcp.pop %v1376
    %v1380 = vmul.f32 1.0, %v1379
    %v1381 = vrcp.pop %v1377
    %v1382 = vmul.f32 1.0, %v1381
    %v1383 = vrcp.pop %v1378
    %v1384 = vmul.f32 1.0, %v1383
    %v1385 = vtanh.pop %v1366
    %v1386 = vmul.f32 %v1382, %v1145
    %v1387 = vmul.f32 %v1380, %v1385
    %v1388 = vadd.f32 %v1386, %v1387
    %v1389 = vtanh.pop %v1388
    %v1390 = vmul.f32 %v1384, %v1389
    %s1391 = scalar_lea.vmem [#allocation5], 24
    %1392 = vst [vmem:[%s1391] sm:$0xff] %v1390
    %s1393 = smul.u32 4, 4
    %s1394 = smul.addr %s1393, 8
    %s1395 = scalar_lea.vmem [#allocation4], %s1394
    %v1396 = vld [vmem:[%s1395] sm:$0xff]
    %v1397 = vld [vmem:[%s1395 + $0x8] sm:$0xff]
    %v1398 = vld [vmem:[%s1395 + $0x10] sm:$0xff]
    %v1399 = vld [vmem:[%s1395 + $0x18] sm:$0xff]
    %v1400 = vld [vmem:[#allocation9] sm:$0xff]
    %v1401 = vld [vmem:[#allocation9 + $0x8] sm:$0xff]
    %v1402 = vld [vmem:[#allocation9 + $0x10] sm:$0xff]
    %v1403 = vld [vmem:[#allocation9 + $0x18] sm:$0xff]
    %v1404 = vld [vmem:[#allocation9 + $0x20] sm:$0xff]
    %v1405 = vld [vmem:[#allocation9 + $0x28] sm:$0xff]
    %v1406 = vld [vmem:[#allocation9 + $0x30] sm:$0xff]
    %v1407 = vld [vmem:[#allocation9 + $0x38] sm:$0xff]
    %v1408 = vld [vmem:[#allocation9 + $0x40] sm:$0xff]
    %v1409 = vld [vmem:[#allocation9 + $0x48] sm:$0xff]
    %v1410 = vld [vmem:[#allocation9 + $0x50] sm:$0xff]
    %v1411 = vld [vmem:[#allocation9 + $0x58] sm:$0xff]
    %v1412 = vld [vmem:[#allocation9 + $0x60] sm:$0xff]
    %v1413 = vld [vmem:[#allocation9 + $0x68] sm:$0xff]
    %v1414 = vld [vmem:[#allocation9 + $0x70] sm:$0xff]
    %v1415 = vld [vmem:[#allocation9 + $0x78] sm:$0xff]
    %v1416 = vld [vmem:[#allocation9 + $0x80] sm:$0xff]
    %v1417 = vld [vmem:[#allocation9 + $0x88] sm:$0xff]
    %v1418 = vld [vmem:[#allocation9 + $0x90] sm:$0xff]
    %v1419 = vld [vmem:[#allocation9 + $0x98] sm:$0xff]
    %v1420 = vld [vmem:[#allocation9 + $0xa0] sm:$0xff]
    %v1421 = vld [vmem:[#allocation9 + $0xa8] sm:$0xff]
    %v1422 = vld [vmem:[#allocation9 + $0xb0] sm:$0xff]
    %v1423 = vld [vmem:[#allocation9 + $0xb8] sm:$0xff]
    %v1424 = vld [vmem:[#allocation9 + $0xc0] sm:$0xff]
    %v1425 = vld [vmem:[#allocation9 + $0xc8] sm:$0xff]
    %v1426 = vld [vmem:[#allocation9 + $0xd0] sm:$0xff]
    %v1427 = vld [vmem:[#allocation9 + $0xd8] sm:$0xff]
    %v1428 = vld [vmem:[#allocation9 + $0xe0] sm:$0xff]
    %v1429 = vld [vmem:[#allocation9 + $0xe8] sm:$0xff]
    %v1430 = vld [vmem:[#allocation9 + $0xf0] sm:$0xff]
    %v1431 = vld [vmem:[#allocation9 + $0xf8] sm:$0xff]
    %v1432 = vld [vmem:[#allocation9 + $0x100] sm:$0xff]
    %v1433 = vld [vmem:[#allocation9 + $0x108] sm:$0xff]
    %v1434 = vld [vmem:[#allocation9 + $0x110] sm:$0xff]
    %v1435 = vld [vmem:[#allocation9 + $0x118] sm:$0xff]
    %v1436 = vld [vmem:[#allocation9 + $0x120] sm:$0xff]
    %v1437 = vld [vmem:[#allocation9 + $0x128] sm:$0xff]
    %v1438 = vld [vmem:[#allocation9 + $0x130] sm:$0xff]
    %v1439 = vld [vmem:[#allocation9 + $0x138] sm:$0xff]
    %v1440 = vld [vmem:[#allocation9 + $0x140] sm:$0xff]
    %v1441 = vld [vmem:[#allocation9 + $0x148] sm:$0xff]
    %v1442 = vld [vmem:[#allocation9 + $0x150] sm:$0xff]
    %v1443 = vld [vmem:[#allocation9 + $0x158] sm:$0xff]
    %v1444 = vld [vmem:[#allocation9 + $0x160] sm:$0xff]
    %v1445 = vld [vmem:[#allocation9 + $0x168] sm:$0xff]
    %v1446 = vld [vmem:[#allocation9 + $0x170] sm:$0xff]
    %v1447 = vld [vmem:[#allocation9 + $0x178] sm:$0xff]
    %v1448 = vld [vmem:[#allocation9 + $0x180] sm:$0xff]
    %v1449 = vld [vmem:[#allocation9 + $0x188] sm:$0xff]
    %v1450 = vld [vmem:[#allocation9 + $0x190] sm:$0xff]
    %v1451 = vld [vmem:[#allocation9 + $0x198] sm:$0xff]
    %v1452 = vld [vmem:[#allocation9 + $0x1a0] sm:$0xff]
    %v1453 = vld [vmem:[#allocation9 + $0x1a8] sm:$0xff]
    %v1454 = vld [vmem:[#allocation9 + $0x1b0] sm:$0xff]
    %v1455 = vld [vmem:[#allocation9 + $0x1b8] sm:$0xff]
    %v1456 = vld [vmem:[#allocation9 + $0x1c0] sm:$0xff]
    %v1457 = vld [vmem:[#allocation9 + $0x1c8] sm:$0xff]
    %v1458 = vld [vmem:[#allocation9 + $0x1d0] sm:$0xff]
    %v1459 = vld [vmem:[#allocation9 + $0x1d8] sm:$0xff]
    %v1460 = vld [vmem:[#allocation9 + $0x1e0] sm:$0xff]
    %v1461 = vld [vmem:[#allocation9 + $0x1e8] sm:$0xff]
    %v1462 = vld [vmem:[#allocation9 + $0x1f0] sm:$0xff]
    %v1463 = vld [vmem:[#allocation9 + $0x1f8] sm:$0xff]
    %1464 = vmatprep.subr.mxu0 %v1401
    %1465 = vmatpush1.msra.mxu0 %v1400
    %1466 = vmatprep.subr.mxu0 %v1405
    %1467 = vmatpush1.msra.mxu0 %v1404
    %1468 = vmatprep.subr.mxu0 %v1409
    %1469 = vmatpush1.msra.mxu0 %v1408
    %1470 = vmatprep.subr.mxu0 %v1413
    %1471 = vmatpush1.msra.mxu0 %v1412
    %1472 = vmatprep.subr.mxu0 %v1417
    %1473 = vmatpush1.msra.mxu0 %v1416
    %1474 = vmatprep.subr.mxu0 %v1421
    %1475 = vmatpush1.msra.mxu0 %v1420
    %1476 = vmatprep.subr.mxu0 %v1425
    %1477 = vmatpush1.msra.mxu0 %v1424
    %1478 = vmatprep.subr.mxu0 %v1429
    %1479 = vmatpush1.msra.mxu0 %v1428
    %1480 = vmatprep.subr.mxu0 %v1433
    %1481 = vmatpush1.msra.mxu0 %v1432
    %1482 = vmatprep.subr.mxu0 %v1437
    %1483 = vmatpush1.msra.mxu0 %v1436
    %1484 = vmatprep.subr.mxu0 %v1441
    %1485 = vmatpush1.msra.mxu0 %v1440
    %1486 = vmatprep.subr.mxu0 %v1445
    %1487 = vmatpush1.msra.mxu0 %v1444
    %1488 = vmatprep.subr.mxu0 %v1449
    %1489 = vmatpush1.msra.mxu0 %v1448
    %1490 = vmatprep.subr.mxu0 %v1453
    %1491 = vmatpush1.msra.mxu0 %v1452
    %1492 = vmatprep.subr.mxu0 %v1457
    %1493 = vmatpush1.msra.mxu0 %v1456
    %1494 = vmatprep.subr.mxu0 %v1461
    %1495 = vmatpush1.msra.mxu0 %v1460
    %1496 = vmatprep.subr.mxu0 0.0
    %1497 = vmatpush1.msra.mxu0 0.0
    %1498 = vmatprep.subr.mxu0 0.0
    %1499 = vmatpush1.msra.mxu0 0.0
    %1500 = vmatprep.subr.mxu0 0.0
    %1501 = vmatpush1.msra.mxu0 0.0
    %1502 = vmatprep.subr.mxu0 0.0
    %1503 = vmatpush1.msra.mxu0 0.0
    %1504 = vmatprep.subr.mxu0 0.0
    %1505 = vmatpush1.msra.mxu0 0.0
    %1506 = vmatprep.subr.mxu0 0.0
    %1507 = vmatpush1.msra.mxu0 0.0
    %1508 = vmatprep.subr.mxu0 0.0
    %1509 = vmatpush1.msra.mxu0 0.0
    %1510 = vmatprep.subr.mxu0 0.0
    %1511 = vmatpush1.msra.mxu0 0.0
    %1512 = vmatprep.subr.mxu0 0.0
    %1513 = vmatpush1.msra.mxu0 0.0
    %1514 = vmatprep.subr.mxu0 0.0
    %1515 = vmatpush1.msra.mxu0 0.0
    %1516 = vmatprep.subr.mxu0 0.0
    %1517 = vmatpush1.msra.mxu0 0.0
    %1518 = vmatprep.subr.mxu0 0.0
    %1519 = vmatpush1.msra.mxu0 0.0
    %1520 = vmatprep.subr.mxu0 0.0
    %1521 = vmatpush1.msra.mxu0 0.0
    %1522 = vmatprep.subr.mxu0 0.0
    %1523 = vmatpush1.msra.mxu0 0.0
    %1524 = vmatprep.subr.mxu0 0.0
    %1525 = vmatpush1.msra.mxu0 0.0
    %1526 = vmatprep.subr.mxu0 0.0
    %1527 = vmatpush1.msra.mxu0 0.0
    %1528 = vmatprep.mubr.f32.mxu0 0.0
    %1529 = vmatmul.mubr.f32.gmra.mrb[0].mxu0 %v1390
    %v1530 = vpop.f32.mrb[0].mxu0
    %v1531 = vadd.f32 0.0, %v1530
    %v1532 = vpop.f32.mrb[0].mxu0
    %v1533 = vadd.f32 0.0, %v1532
    %1534 = vdwg.mxu0
    %1535 = vmatprep.subr.mxu0 %v1403
    %1536 = vmatpush1.msra.mxu0 %v1402
    %1537 = vmatprep.subr.mxu0 %v1407
    %1538 = vmatpush1.msra.mxu0 %v1406
    %1539 = vmatprep.subr.mxu0 %v1411
    %1540 = vmatpush1.msra.mxu0 %v1410
    %1541 = vmatprep.subr.mxu0 %v1415
    %1542 = vmatpush1.msra.mxu0 %v1414
    %1543 = vmatprep.subr.mxu0 %v1419
    %1544 = vmatpush1.msra.mxu0 %v1418
    %1545 = vmatprep.subr.mxu0 %v1423
    %1546 = vmatpush1.msra.mxu0 %v1422
    %1547 = vmatprep.subr.mxu0 %v1427
    %1548 = vmatpush1.msra.mxu0 %v1426
    %1549 = vmatprep.subr.mxu0 %v1431
    %1550 = vmatpush1.msra.mxu0 %v1430
    %1551 = vmatprep.subr.mxu0 %v1435
    %1552 = vmatpush1.msra.mxu0 %v1434
    %1553 = vmatprep.subr.mxu0 %v1439
    %1554 = vmatpush1.msra.mxu0 %v1438
    %1555 = vmatprep.subr.mxu0 %v1443
    %1556 = vmatpush1.msra.mxu0 %v1442
    %1557 = vmatprep.subr.mxu0 %v1447
    %1558 = vmatpush1.msra.mxu0 %v1446
    %1559 = vmatprep.subr.mxu0 %v1451
    %1560 = vmatpush1.msra.mxu0 %v1450
    %1561 = vmatprep.subr.mxu0 %v1455
    %1562 = vmatpush1.msra.mxu0 %v1454
    %1563 = vmatprep.subr.mxu0 %v1459
    %1564 = vmatpush1.msra.mxu0 %v1458
    %1565 = vmatprep.subr.mxu0 %v1463
    %1566 = vmatpush1.msra.mxu0 %v1462
    %1567 = vmatprep.subr.mxu0 0.0
    %1568 = vmatpush1.msra.mxu0 0.0
    %1569 = vmatprep.subr.mxu0 0.0
    %1570 = vmatpush1.msra.mxu0 0.0
    %1571 = vmatprep.subr.mxu0 0.0
    %1572 = vmatpush1.msra.mxu0 0.0
    %1573 = vmatprep.subr.mxu0 0.0
    %1574 = vmatpush1.msra.mxu0 0.0
    %1575 = vmatprep.subr.mxu0 0.0
    %1576 = vmatpush1.msra.mxu0 0.0
    %1577 = vmatprep.subr.mxu0 0.0
    %1578 = vmatpush1.msra.mxu0 0.0
    %1579 = vmatprep.subr.mxu0 0.0
    %1580 = vmatpush1.msra.mxu0 0.0
    %1581 = vmatprep.subr.mxu0 0.0
    %1582 = vmatpush1.msra.mxu0 0.0
    %1583 = vmatprep.subr.mxu0 0.0
    %1584 = vmatpush1.msra.mxu0 0.0
    %1585 = vmatprep.subr.mxu0 0.0
    %1586 = vmatpush1.msra.mxu0 0.0
    %1587 = vmatprep.subr.mxu0 0.0
    %1588 = vmatpush1.msra.mxu0 0.0
    %1589 = vmatprep.subr.mxu0 0.0
    %1590 = vmatpush1.msra.mxu0 0.0
    %1591 = vmatprep.subr.mxu0 0.0
    %1592 = vmatpush1.msra.mxu0 0.0
    %1593 = vmatprep.subr.mxu0 0.0
    %1594 = vmatpush1.msra.mxu0 0.0
    %1595 = vmatprep.subr.mxu0 0.0
    %1596 = vmatpush1.msra.mxu0 0.0
    %1597 = vmatprep.subr.mxu0 0.0
    %1598 = vmatpush1.msra.mxu0 0.0
    %1599 = vmatprep.mubr.f32.mxu0 0.0
    %1600 = vmatmul.mubr.f32.gmra.mrb[0].mxu0 %v1390
    %v1601 = vpop.f32.mrb[0].mxu0
    %v1602 = vadd.f32 0.0, %v1601
    %v1603 = vpop.f32.mrb[0].mxu0
    %v1604 = vadd.f32 0.0, %v1603
    %1605 = vdwg.mxu0
    %v1606 = vadd.f32 %v1396, %v1531
    %v1607 = vadd.f32 %v1397, %v1533
    %v1608 = vadd.f32 %v1398, %v1602
    %v1609 = vadd.f32 %v1399, %v1604
    %v1610 = vxor.u32 %v1606, 2147483648
    %v1611 = vxor.u32 %v1607, 2147483648
    %v1612 = vxor.u32 %v1608, 2147483648
    %v1613 = vmul.f32 %v1610, 1.442695
    %v1614 = vpow.pop %v1613
    %v1615 = vmul.f32 %v1611, 1.442695
    %v1616 = vpow.pop %v1615
    %v1617 = vmul.f32 %v1612, 1.442695
    %v1618 = vpow.pop %v1617
    %v1619 = vadd.f32 %v1614, 1.0
    %v1620 = vadd.f32 %v1616, 1.0
    %v1621 = vadd.f32 %v1618, 1.0
    %v1622 = vrcp.pop %v1619
    %v1623 = vmul.f32 1.0, %v1622
    %v1624 = vrcp.pop %v1620
    %v1625 = vmul.f32 1.0, %v1624
    %v1626 = vrcp.pop %v1621
    %v1627 = vmul.f32 1.0, %v1626
    %v1628 = vtanh.pop %v1609
    %v1629 = vmul.f32 %v1625, %v1388
    %v1630 = vmul.f32 %v1623, %v1628
    %v1631 = vadd.f32 %v1629, %v1630
    %v1632 = vtanh.pop %v1631
    %v1633 = vmul.f32 %v1627, %v1632
    %s1634 = scalar_lea.vmem [#allocation5], 32
    %1635 = vst [vmem:[%s1634] sm:$0xff] %v1633
    %s1636 = smul.u32 5, 4
    %s1637 = smul.addr %s1636, 8
    %s1638 = scalar_lea.vmem [#allocation4], %s1637
    %v1639 = vld [vmem:[%s1638] sm:$0xff]
    %v1640 = vld [vmem:[%s1638 + $0x8] sm:$0xff]
    %v1641 = vld [vmem:[%s1638 + $0x10] sm:$0xff]
    %v1642 = vld [vmem:[%s1638 + $0x18] sm:$0xff]
    %v1643 = vld [vmem:[#allocation9] sm:$0xff]
    %v1644 = vld [vmem:[#allocation9 + $0x8] sm:$0xff]
    %v1645 = vld [vmem:[#allocation9 + $0x10] sm:$0xff]
    %v1646 = vld [vmem:[#allocation9 + $0x18] sm:$0xff]
    %v1647 = vld [vmem:[#allocation9 + $0x20] sm:$0xff]
    %v1648 = vld [vmem:[#allocation9 + $0x28] sm:$0xff]
    %v1649 = vld [vmem:[#allocation9 + $0x30] sm:$0xff]
    %v1650 = vld [vmem:[#allocation9 + $0x38] sm:$0xff]
    %v1651 = vld [vmem:[#allocation9 + $0x40] sm:$0xff]
    %v1652 = vld [vmem:[#allocation9 + $0x48] sm:$0xff]
    %v1653 = vld [vmem:[#allocation9 + $0x50] sm:$0xff]
    %v1654 = vld [vmem:[#allocation9 + $0x58] sm:$0xff]
    %v1655 = vld [vmem:[#allocation9 + $0x60] sm:$0xff]
    %v1656 = vld [vmem:[#allocation9 + $0x68] sm:$0xff]
    %v1657 = vld [vmem:[#allocation9 + $0x70] sm:$0xff]
    %v1658 = vld [vmem:[#allocation9 + $0x78] sm:$0xff]
    %v1659 = vld [vmem:[#allocation9 + $0x80] sm:$0xff]
    %v1660 = vld [vmem:[#allocation9 + $0x88] sm:$0xff]
    %v1661 = vld [vmem:[#allocation9 + $0x90] sm:$0xff]
    %v1662 = vld [vmem:[#allocation9 + $0x98] sm:$0xff]
    %v1663 = vld [vmem:[#allocation9 + $0xa0] sm:$0xff]
    %v1664 = vld [vmem:[#allocation9 + $0xa8] sm:$0xff]
    %v1665 = vld [vmem:[#allocation9 + $0xb0] sm:$0xff]
    %v1666 = vld [vmem:[#allocation9 + $0xb8] sm:$0xff]
    %v1667 = vld [vmem:[#allocation9 + $0xc0] sm:$0xff]
    %v1668 = vld [vmem:[#allocation9 + $0xc8] sm:$0xff]
    %v1669 = vld [vmem:[#allocation9 + $0xd0] sm:$0xff]
    %v1670 = vld [vmem:[#allocation9 + $0xd8] sm:$0xff]
    %v1671 = vld [vmem:[#allocation9 + $0xe0] sm:$0xff]
    %v1672 = vld [vmem:[#allocation9 + $0xe8] sm:$0xff]
    %v1673 = vld [vmem:[#allocation9 + $0xf0] sm:$0xff]
    %v1674 = vld [vmem:[#allocation9 + $0xf8] sm:$0xff]
    %v1675 = vld [vmem:[#allocation9 + $0x100] sm:$0xff]
    %v1676 = vld [vmem:[#allocation9 + $0x108] sm:$0xff]
    %v1677 = vld [vmem:[#allocation9 + $0x110] sm:$0xff]
    %v1678 = vld [vmem:[#allocation9 + $0x118] sm:$0xff]
    %v1679 = vld [vmem:[#allocation9 + $0x120] sm:$0xff]
    %v1680 = vld [vmem:[#allocation9 + $0x128] sm:$0xff]
    %v1681 = vld [vmem:[#allocation9 + $0x130] sm:$0xff]
    %v1682 = vld [vmem:[#allocation9 + $0x138] sm:$0xff]
    %v1683 = vld [vmem:[#allocation9 + $0x140] sm:$0xff]
    %v1684 = vld [vmem:[#allocation9 + $0x148] sm:$0xff]
    %v1685 = vld [vmem:[#allocation9 + $0x150] sm:$0xff]
    %v1686 = vld [vmem:[#allocation9 + $0x158] sm:$0xff]
    %v1687 = vld [vmem:[#allocation9 + $0x160] sm:$0xff]
    %v1688 = vld [vmem:[#allocation9 + $0x168] sm:$0xff]
    %v1689 = vld [vmem:[#allocation9 + $0x170] sm:$0xff]
    %v1690 = vld [vmem:[#allocation9 + $0x178] sm:$0xff]
    %v1691 = vld [vmem:[#allocation9 + $0x180] sm:$0xff]
    %v1692 = vld [vmem:[#allocation9 + $0x188] sm:$0xff]
    %v1693 = vld [vmem:[#allocation9 + $0x190] sm:$0xff]
    %v1694 = vld [vmem:[#allocation9 + $0x198] sm:$0xff]
    %v1695 = vld [vmem:[#allocation9 + $0x1a0] sm:$0xff]
    %v1696 = vld [vmem:[#allocation9 + $0x1a8] sm:$0xff]
    %v1697 = vld [vmem:[#allocation9 + $0x1b0] sm:$0xff]
    %v1698 = vld [vmem:[#allocation9 + $0x1b8] sm:$0xff]
    %v1699 = vld [vmem:[#allocation9 + $0x1c0] sm:$0xff]
    %v1700 = vld [vmem:[#allocation9 + $0x1c8] sm:$0xff]
    %v1701 = vld [vmem:[#allocation9 + $0x1d0] sm:$0xff]
    %v1702 = vld [vmem:[#allocation9 + $0x1d8] sm:$0xff]
    %v1703 = vld [vmem:[#allocation9 + $0x1e0] sm:$0xff]
    %v1704 = vld [vmem:[#allocation9 + $0x1e8] sm:$0xff]
    %v1705 = vld [vmem:[#allocation9 + $0x1f0] sm:$0xff]
    %v1706 = vld [vmem:[#allocation9 + $0x1f8] sm:$0xff]
    %1707 = vmatprep.subr.mxu0 %v1644
    %1708 = vmatpush1.msra.mxu0 %v1643
    %1709 = vmatprep.subr.mxu0 %v1648
    %1710 = vmatpush1.msra.mxu0 %v1647
    %1711 = vmatprep.subr.mxu0 %v1652
    %1712 = vmatpush1.msra.mxu0 %v1651
    %1713 = vmatprep.subr.mxu0 %v1656
    %1714 = vmatpush1.msra.mxu0 %v1655
    %1715 = vmatprep.subr.mxu0 %v1660
    %1716 = vmatpush1.msra.mxu0 %v1659
    %1717 = vmatprep.subr.mxu0 %v1664
    %1718 = vmatpush1.msra.mxu0 %v1663
    %1719 = vmatprep.subr.mxu0 %v1668
    %1720 = vmatpush1.msra.mxu0 %v1667
    %1721 = vmatprep.subr.mxu0 %v1672
    %1722 = vmatpush1.msra.mxu0 %v1671
    %1723 = vmatprep.subr.mxu0 %v1676
    %1724 = vmatpush1.msra.mxu0 %v1675
    %1725 = vmatprep.subr.mxu0 %v1680
    %1726 = vmatpush1.msra.mxu0 %v1679
    %1727 = vmatprep.subr.mxu0 %v1684
    %1728 = vmatpush1.msra.mxu0 %v1683
    %1729 = vmatprep.subr.mxu0 %v1688
    %1730 = vmatpush1.msra.mxu0 %v1687
    %1731 = vmatprep.subr.mxu0 %v1692
    %1732 = vmatpush1.msra.mxu0 %v1691
    %1733 = vmatprep.subr.mxu0 %v1696
    %1734 = vmatpush1.msra.mxu0 %v1695
    %1735 = vmatprep.subr.mxu0 %v1700
    %1736 = vmatpush1.msra.mxu0 %v1699
    %1737 = vmatprep.subr.mxu0 %v1704
    %1738 = vmatpush1.msra.mxu0 %v1703
    %1739 = vmatprep.subr.mxu0 0.0
    %1740 = vmatpush1.msra.mxu0 0.0
    %1741 = vmatprep.subr.mxu0 0.0
    %1742 = vmatpush1.msra.mxu0 0.0
    %1743 = vmatprep.subr.mxu0 0.0
    %1744 = vmatpush1.msra.mxu0 0.0
    %1745 = vmatprep.subr.mxu0 0.0
    %1746 = vmatpush1.msra.mxu0 0.0
    %1747 = vmatprep.subr.mxu0 0.0
    %1748 = vmatpush1.msra.mxu0 0.0
    %1749 = vmatprep.subr.mxu0 0.0
    %1750 = vmatpush1.msra.mxu0 0.0
    %1751 = vmatprep.subr.mxu0 0.0
    %1752 = vmatpush1.msra.mxu0 0.0
    %1753 = vmatprep.subr.mxu0 0.0
    %1754 = vmatpush1.msra.mxu0 0.0
    %1755 = vmatprep.subr.mxu0 0.0
    %1756 = vmatpush1.msra.mxu0 0.0
    %1757 = vmatprep.subr.mxu0 0.0
    %1758 = vmatpush1.msra.mxu0 0.0
    %1759 = vmatprep.subr.mxu0 0.0
    %1760 = vmatpush1.msra.mxu0 0.0
    %1761 = vmatprep.subr.mxu0 0.0
    %1762 = vmatpush1.msra.mxu0 0.0
    %1763 = vmatprep.subr.mxu0 0.0
    %1764 = vmatpush1.msra.mxu0 0.0
    %1765 = vmatprep.subr.mxu0 0.0
    %1766 = vmatpush1.msra.mxu0 0.0
    %1767 = vmatprep.subr.mxu0 0.0
    %1768 = vmatpush1.msra.mxu0 0.0
    %1769 = vmatprep.subr.mxu0 0.0
    %1770 = vmatpush1.msra.mxu0 0.0
    %1771 = vmatprep.mubr.f32.mxu0 0.0
    %1772 = vmatmul.mubr.f32.gmra.mrb[0].mxu0 %v1633
    %v1773 = vpop.f32.mrb[0].mxu0
    %v1774 = vadd.f32 0.0, %v1773
    %v1775 = vpop.f32.mrb[0].mxu0
    %v1776 = vadd.f32 0.0, %v1775
    %1777 = vdwg.mxu0
    %1778 = vmatprep.subr.mxu0 %v1646
    %1779 = vmatpush1.msra.mxu0 %v1645
    %1780 = vmatprep.subr.mxu0 %v1650
    %1781 = vmatpush1.msra.mxu0 %v1649
    %1782 = vmatprep.subr.mxu0 %v1654
    %1783 = vmatpush1.msra.mxu0 %v1653
    %1784 = vmatprep.subr.mxu0 %v1658
    %1785 = vmatpush1.msra.mxu0 %v1657
    %1786 = vmatprep.subr.mxu0 %v1662
    %1787 = vmatpush1.msra.mxu0 %v1661
    %1788 = vmatprep.subr.mxu0 %v1666
    %1789 = vmatpush1.msra.mxu0 %v1665
    %1790 = vmatprep.subr.mxu0 %v1670
    %1791 = vmatpush1.msra.mxu0 %v1669
    %1792 = vmatprep.subr.mxu0 %v1674
    %1793 = vmatpush1.msra.mxu0 %v1673
    %1794 = vmatprep.subr.mxu0 %v1678
    %1795 = vmatpush1.msra.mxu0 %v1677
    %1796 = vmatprep.subr.mxu0 %v1682
    %1797 = vmatpush1.msra.mxu0 %v1681
    %1798 = vmatprep.subr.mxu0 %v1686
    %1799 = vmatpush1.msra.mxu0 %v1685
    %1800 = vmatprep.subr.mxu0 %v1690
    %1801 = vmatpush1.msra.mxu0 %v1689
    %1802 = vmatprep.subr.mxu0 %v1694
    %1803 = vmatpush1.msra.mxu0 %v1693
    %1804 = vmatprep.subr.mxu0 %v1698
    %1805 = vmatpush1.msra.mxu0 %v1697
    %1806 = vmatprep.subr.mxu0 %v1702
    %1807 = vmatpush1.msra.mxu0 %v1701
    %1808 = vmatprep.subr.mxu0 %v1706
    %1809 = vmatpush1.msra.mxu0 %v1705
    %1810 = vmatprep.subr.mxu0 0.0
    %1811 = vmatpush1.msra.mxu0 0.0
    %1812 = vmatprep.subr.mxu0 0.0
    %1813 = vmatpush1.msra.mxu0 0.0
    %1814 = vmatprep.subr.mxu0 0.0
    %1815 = vmatpush1.msra.mxu0 0.0
    %1816 = vmatprep.subr.mxu0 0.0
    %1817 = vmatpush1.msra.mxu0 0.0
    %1818 = vmatprep.subr.mxu0 0.0
    %1819 = vmatpush1.msra.mxu0 0.0
    %1820 = vmatprep.subr.mxu0 0.0
    %1821 = vmatpush1.msra.mxu0 0.0
    %1822 = vmatprep.subr.mxu0 0.0
    %1823 = vmatpush1.msra.mxu0 0.0
    %1824 = vmatprep.subr.mxu0 0.0
    %1825 = vmatpush1.msra.mxu0 0.0
    %1826 = vmatprep.subr.mxu0 0.0
    %1827 = vmatpush1.msra.mxu0 0.0
    %1828 = vmatprep.subr.mxu0 0.0
    %1829 = vmatpush1.msra.mxu0 0.0
    %1830 = vmatprep.subr.mxu0 0.0
    %1831 = vmatpush1.msra.mxu0 0.0
    %1832 = vmatprep.subr.mxu0 0.0
    %1833 = vmatpush1.msra.mxu0 0.0
    %1834 = vmatprep.subr.mxu0 0.0
    %1835 = vmatpush1.msra.mxu0 0.0
    %1836 = vmatprep.subr.mxu0 0.0
    %1837 = vmatpush1.msra.mxu0 0.0
    %1838 = vmatprep.subr.mxu0 0.0
    %1839 = vmatpush1.msra.mxu0 0.0
    %1840 = vmatprep.subr.mxu0 0.0
    %1841 = vmatpush1.msra.mxu0 0.0
    %1842 = vmatprep.mubr.f32.mxu0 0.0
    %1843 = vmatmul.mubr.f32.gmra.mrb[0].mxu0 %v1633
    %v1844 = vpop.f32.mrb[0].mxu0
    %v1845 = vadd.f32 0.0, %v1844
    %v1846 = vpop.f32.mrb[0].mxu0
    %v1847 = vadd.f32 0.0, %v1846
    %1848 = vdwg.mxu0
    %v1849 = vadd.f32 %v1639, %v1774
    %v1850 = vadd.f32 %v1640, %v1776
    %v1851 = vadd.f32 %v1641, %v1845
    %v1852 = vadd.f32 %v1642, %v1847
    %v1853 = vxor.u32 %v1849, 2147483648
    %v1854 = vxor.u32 %v1850, 2147483648
    %v1855 = vxor.u32 %v1851, 2147483648
    %v1856 = vmul.f32 %v1853, 1.442695
    %v1857 = vpow.pop %v1856
    %v1858 = vmul.f32 %v1854, 1.442695
    %v1859 = vpow.pop %v1858
    %v1860 = vmul.f32 %v1855, 1.442695
    %v1861 = vpow.pop %v1860
    %v1862 = vadd.f32 %v1857, 1.0
    %v1863 = vadd.f32 %v1859, 1.0
    %v1864 = vadd.f32 %v1861, 1.0
    %v1865 = vrcp.pop %v1862
    %v1866 = vmul.f32 1.0, %v1865
    %v1867 = vrcp.pop %v1863
    %v1868 = vmul.f32 1.0, %v1867
    %v1869 = vrcp.pop %v1864
    %v1870 = vmul.f32 1.0, %v1869
    %v1871 = vtanh.pop %v1852
    %v1872 = vmul.f32 %v1868, %v1631
    %v1873 = vmul.f32 %v1866, %v1871
    %v1874 = vadd.f32 %v1872, %v1873
    %v1875 = vtanh.pop %v1874
    %v1876 = vmul.f32 %v1870, %v1875
    %s1877 = scalar_lea.vmem [#allocation5], 40
    %1878 = vst [vmem:[%s1877] sm:$0xff] %v1876
    %s1879 = smul.u32 6, 4
    %s1880 = smul.addr %s1879, 8
    %s1881 = scalar_lea.vmem [#allocation4], %s1880
    %v1882 = vld [vmem:[%s1881] sm:$0xff]
    %v1883 = vld [vmem:[%s1881 + $0x8] sm:$0xff]
    %v1884 = vld [vmem:[%s1881 + $0x10] sm:$0xff]
    %v1885 = vld [vmem:[%s1881 + $0x18] sm:$0xff]
    %v1886 = vld [vmem:[#allocation9] sm:$0xff]
    %v1887 = vld [vmem:[#allocation9 + $0x8] sm:$0xff]
    %v1888 = vld [vmem:[#allocation9 + $0x10] sm:$0xff]
    %v1889 = vld [vmem:[#allocation9 + $0x18] sm:$0xff]
    %v1890 = vld [vmem:[#allocation9 + $0x20] sm:$0xff]
    %v1891 = vld [vmem:[#allocation9 + $0x28] sm:$0xff]
    %v1892 = vld [vmem:[#allocation9 + $0x30] sm:$0xff]
    %v1893 = vld [vmem:[#allocation9 + $0x38] sm:$0xff]
    %v1894 = vld [vmem:[#allocation9 + $0x40] sm:$0xff]
    %v1895 = vld [vmem:[#allocation9 + $0x48] sm:$0xff]
    %v1896 = vld [vmem:[#allocation9 + $0x50] sm:$0xff]
    %v1897 = vld [vmem:[#allocation9 + $0x58] sm:$0xff]
    %v1898 = vld [vmem:[#allocation9 + $0x60] sm:$0xff]
    %v1899 = vld [vmem:[#allocation9 + $0x68] sm:$0xff]
    %v1900 = vld [vmem:[#allocation9 + $0x70] sm:$0xff]
    %v1901 = vld [vmem:[#allocation9 + $0x78] sm:$0xff]
    %v1902 = vld [vmem:[#allocation9 + $0x80] sm:$0xff]
    %v1903 = vld [vmem:[#allocation9 + $0x88] sm:$0xff]
    %v1904 = vld [vmem:[#allocation9 + $0x90] sm:$0xff]
    %v1905 = vld [vmem:[#allocation9 + $0x98] sm:$0xff]
    %v1906 = vld [vmem:[#allocation9 + $0xa0] sm:$0xff]
    %v1907 = vld [vmem:[#allocation9 + $0xa8] sm:$0xff]
    %v1908 = vld [vmem:[#allocation9 + $0xb0] sm:$0xff]
    %v1909 = vld [vmem:[#allocation9 + $0xb8] sm:$0xff]
    %v1910 = vld [vmem:[#allocation9 + $0xc0] sm:$0xff]
    %v1911 = vld [vmem:[#allocation9 + $0xc8] sm:$0xff]
    %v1912 = vld [vmem:[#allocation9 + $0xd0] sm:$0xff]
    %v1913 = vld [vmem:[#allocation9 + $0xd8] sm:$0xff]
    %v1914 = vld [vmem:[#allocation9 + $0xe0] sm:$0xff]
    %v1915 = vld [vmem:[#allocation9 + $0xe8] sm:$0xff]
    %v1916 = vld [vmem:[#allocation9 + $0xf0] sm:$0xff]
    %v1917 = vld [vmem:[#allocation9 + $0xf8] sm:$0xff]
    %v1918 = vld [vmem:[#allocation9 + $0x100] sm:$0xff]
    %v1919 = vld [vmem:[#allocation9 + $0x108] sm:$0xff]
    %v1920 = vld [vmem:[#allocation9 + $0x110] sm:$0xff]
    %v1921 = vld [vmem:[#allocation9 + $0x118] sm:$0xff]
    %v1922 = vld [vmem:[#allocation9 + $0x120] sm:$0xff]
    %v1923 = vld [vmem:[#allocation9 + $0x128] sm:$0xff]
    %v1924 = vld [vmem:[#allocation9 + $0x130] sm:$0xff]
    %v1925 = vld [vmem:[#allocation9 + $0x138] sm:$0xff]
    %v1926 = vld [vmem:[#allocation9 + $0x140] sm:$0xff]
    %v1927 = vld [vmem:[#allocation9 + $0x148] sm:$0xff]
    %v1928 = vld [vmem:[#allocation9 + $0x150] sm:$0xff]
    %v1929 = vld [vmem:[#allocation9 + $0x158] sm:$0xff]
    %v1930 = vld [vmem:[#allocation9 + $0x160] sm:$0xff]
    %v1931 = vld [vmem:[#allocation9 + $0x168] sm:$0xff]
    %v1932 = vld [vmem:[#allocation9 + $0x170] sm:$0xff]
    %v1933 = vld [vmem:[#allocation9 + $0x178] sm:$0xff]
    %v1934 = vld [vmem:[#allocation9 + $0x180] sm:$0xff]
    %v1935 = vld [vmem:[#allocation9 + $0x188] sm:$0xff]
    %v1936 = vld [vmem:[#allocation9 + $0x190] sm:$0xff]
    %v1937 = vld [vmem:[#allocation9 + $0x198] sm:$0xff]
    %v1938 = vld [vmem:[#allocation9 + $0x1a0] sm:$0xff]
    %v1939 = vld [vmem:[#allocation9 + $0x1a8] sm:$0xff]
    %v1940 = vld [vmem:[#allocation9 + $0x1b0] sm:$0xff]
    %v1941 = vld [vmem:[#allocation9 + $0x1b8] sm:$0xff]
    %v1942 = vld [vmem:[#allocation9 + $0x1c0] sm:$0xff]
    %v1943 = vld [vmem:[#allocation9 + $0x1c8] sm:$0xff]
    %v1944 = vld [vmem:[#allocation9 + $0x1d0] sm:$0xff]
    %v1945 = vld [vmem:[#allocation9 + $0x1d8] sm:$0xff]
    %v1946 = vld [vmem:[#allocation9 + $0x1e0] sm:$0xff]
    %v1947 = vld [vmem:[#allocation9 + $0x1e8] sm:$0xff]
    %v1948 = vld [vmem:[#allocation9 + $0x1f0] sm:$0xff]
    %v1949 = vld [vmem:[#allocation9 + $0x1f8] sm:$0xff]
    %1950 = vmatprep.subr.mxu0 %v1887
    %1951 = vmatpush1.msra.mxu0 %v1886
    %1952 = vmatprep.subr.mxu0 %v1891
    %1953 = vmatpush1.msra.mxu0 %v1890
    %1954 = vmatprep.subr.mxu0 %v1895
    %1955 = vmatpush1.msra.mxu0 %v1894
    %1956 = vmatprep.subr.mxu0 %v1899
    %1957 = vmatpush1.msra.mxu0 %v1898
    %1958 = vmatprep.subr.mxu0 %v1903
    %1959 = vmatpush1.msra.mxu0 %v1902
    %1960 = vmatprep.subr.mxu0 %v1907
    %1961 = vmatpush1.msra.mxu0 %v1906
    %1962 = vmatprep.subr.mxu0 %v1911
    %1963 = vmatpush1.msra.mxu0 %v1910
    %1964 = vmatprep.subr.mxu0 %v1915
    %1965 = vmatpush1.msra.mxu0 %v1914
    %1966 = vmatprep.subr.mxu0 %v1919
    %1967 = vmatpush1.msra.mxu0 %v1918
    %1968 = vmatprep.subr.mxu0 %v1923
    %1969 = vmatpush1.msra.mxu0 %v1922
    %1970 = vmatprep.subr.mxu0 %v1927
    %1971 = vmatpush1.msra.mxu0 %v1926
    %1972 = vmatprep.subr.mxu0 %v1931
    %1973 = vmatpush1.msra.mxu0 %v1930
    %1974 = vmatprep.subr.mxu0 %v1935
    %1975 = vmatpush1.msra.mxu0 %v1934
    %1976 = vmatprep.subr.mxu0 %v1939
    %1977 = vmatpush1.msra.mxu0 %v1938
    %1978 = vmatprep.subr.mxu0 %v1943
    %1979 = vmatpush1.msra.mxu0 %v1942
    %1980 = vmatprep.subr.mxu0 %v1947
    %1981 = vmatpush1.msra.mxu0 %v1946
    %1982 = vmatprep.subr.mxu0 0.0
    %1983 = vmatpush1.msra.mxu0 0.0
    %1984 = vmatprep.subr.mxu0 0.0
    %1985 = vmatpush1.msra.mxu0 0.0
    %1986 = vmatprep.subr.mxu0 0.0
    %1987 = vmatpush1.msra.mxu0 0.0
    %1988 = vmatprep.subr.mxu0 0.0
    %1989 = vmatpush1.msra.mxu0 0.0
    %1990 = vmatprep.subr.mxu0 0.0
    %1991 = vmatpush1.msra.mxu0 0.0
    %1992 = vmatprep.subr.mxu0 0.0
    %1993 = vmatpush1.msra.mxu0 0.0
    %1994 = vmatprep.subr.mxu0 0.0
    %1995 = vmatpush1.msra.mxu0 0.0
    %1996 = vmatprep.subr.mxu0 0.0
    %1997 = vmatpush1.msra.mxu0 0.0
    %1998 = vmatprep.subr.mxu0 0.0
    %1999 = vmatpush1.msra.mxu0 0.0
    %2000 = vmatprep.subr.mxu0 0.0
    %2001 = vmatpush1.msra.mxu0 0.0
    %2002 = vmatprep.subr.mxu0 0.0
    %2003 = vmatpush1.msra.mxu0 0.0
    %2004 = vmatprep.subr.mxu0 0.0
    %2005 = vmatpush1.msra.mxu0 0.0
    %2006 = vmatprep.subr.mxu0 0.0
    %2007 = vmatpush1.msra.mxu0 0.0
    %2008 = vmatprep.subr.mxu0 0.0
    %2009 = vmatpush1.msra.mxu0 0.0
    %2010 = vmatprep.subr.mxu0 0.0
    %2011 = vmatpush1.msra.mxu0 0.0
    %2012 = vmatprep.subr.mxu0 0.0
    %2013 = vmatpush1.msra.mxu0 0.0
    %2014 = vmatprep.mubr.f32.mxu0 0.0
    %2015 = vmatmul.mubr.f32.gmra.mrb[0].mxu0 %v1876
    %v2016 = vpop.f32.mrb[0].mxu0
    %v2017 = vadd.f32 0.0, %v2016
    %v2018 = vpop.f32.mrb[0].mxu0
    %v2019 = vadd.f32 0.0, %v2018
    %2020 = vdwg.mxu0
    %2021 = vmatprep.subr.mxu0 %v1889
    %2022 = vmatpush1.msra.mxu0 %v1888
    %2023 = vmatprep.subr.mxu0 %v1893
    %2024 = vmatpush1.msra.mxu0 %v1892
    %2025 = vmatprep.subr.mxu0 %v1897
    %2026 = vmatpush1.msra.mxu0 %v1896
    %2027 = vmatprep.subr.mxu0 %v1901
    %2028 = vmatpush1.msra.mxu0 %v1900
    %2029 = vmatprep.subr.mxu0 %v1905
    %2030 = vmatpush1.msra.mxu0 %v1904
    %2031 = vmatprep.subr.mxu0 %v1909
    %2032 = vmatpush1.msra.mxu0 %v1908
    %2033 = vmatprep.subr.mxu0 %v1913
    %2034 = vmatpush1.msra.mxu0 %v1912
    %2035 = vmatprep.subr.mxu0 %v1917
    %2036 = vmatpush1.msra.mxu0 %v1916
    %2037 = vmatprep.subr.mxu0 %v1921
    %2038 = vmatpush1.msra.mxu0 %v1920
    %2039 = vmatprep.subr.mxu0 %v1925
    %2040 = vmatpush1.msra.mxu0 %v1924
    %2041 = vmatprep.subr.mxu0 %v1929
    %2042 = vmatpush1.msra.mxu0 %v1928
    %2043 = vmatprep.subr.mxu0 %v1933
    %2044 = vmatpush1.msra.mxu0 %v1932
    %2045 = vmatprep.subr.mxu0 %v1937
    %2046 = vmatpush1.msra.mxu0 %v1936
    %2047 = vmatprep.subr.mxu0 %v1941
    %2048 = vmatpush1.msra.mxu0 %v1940
    %2049 = vmatprep.subr.mxu0 %v1945
    %2050 = vmatpush1.msra.mxu0 %v1944
    %2051 = vmatprep.subr.mxu0 %v1949
    %2052 = vmatpush1.msra.mxu0 %v1948
    %2053 = vmatprep.subr.mxu0 0.0
    %2054 = vmatpush1.msra.mxu0 0.0
    %2055 = vmatprep.subr.mxu0 0.0
    %2056 = vmatpush1.msra.mxu0 0.0
    %2057 = vmatprep.subr.mxu0 0.0
    %2058 = vmatpush1.msra.mxu0 0.0
    %2059 = vmatprep.subr.mxu0 0.0
    %2060 = vmatpush1.msra.mxu0 0.0
    %2061 = vmatprep.subr.mxu0 0.0
    %2062 = vmatpush1.msra.mxu0 0.0
    %2063 = vmatprep.subr.mxu0 0.0
    %2064 = vmatpush1.msra.mxu0 0.0
    %2065 = vmatprep.subr.mxu0 0.0
    %2066 = vmatpush1.msra.mxu0 0.0
    %2067 = vmatprep.subr.mxu0 0.0
    %2068 = vmatpush1.msra.mxu0 0.0
    %2069 = vmatprep.subr.mxu0 0.0
    %2070 = vmatpush1.msra.mxu0 0.0
    %2071 = vmatprep.subr.mxu0 0.0
    %2072 = vmatpush1.msra.mxu0 0.0
    %2073 = vmatprep.subr.mxu0 0.0
    %2074 = vmatpush1.msra.mxu0 0.0
    %2075 = vmatprep.subr.mxu0 0.0
    %2076 = vmatpush1.msra.mxu0 0.0
    %2077 = vmatprep.subr.mxu0 0.0
    %2078 = vmatpush1.msra.mxu0 0.0
    %2079 = vmatprep.subr.mxu0 0.0
    %2080 = vmatpush1.msra.mxu0 0.0
    %2081 = vmatprep.subr.mxu0 0.0
    %2082 = vmatpush1.msra.mxu0 0.0
    %2083 = vmatprep.subr.mxu0 0.0
    %2084 = vmatpush1.msra.mxu0 0.0
    %2085 = vmatprep.mubr.f32.mxu0 0.0
    %2086 = vmatmul.mubr.f32.gmra.mrb[0].mxu0 %v1876
    %v2087 = vpop.f32.mrb[0].mxu0
    %v2088 = vadd.f32 0.0, %v2087
    %v2089 = vpop.f32.mrb[0].mxu0
    %v2090 = vadd.f32 0.0, %v2089
    %2091 = vdwg.mxu0
    %v2092 = vadd.f32 %v1882, %v2017
    %v2093 = vadd.f32 %v1883, %v2019
    %v2094 = vadd.f32 %v1884, %v2088
    %v2095 = vadd.f32 %v1885, %v2090
    %v2096 = vxor.u32 %v2092, 2147483648
    %v2097 = vxor.u32 %v2093, 2147483648
    %v2098 = vxor.u32 %v2094, 2147483648
    %v2099 = vmul.f32 %v2096, 1.442695
    %v2100 = vpow.pop %v2099
    %v2101 = vmul.f32 %v2097, 1.442695
    %v2102 = vpow.pop %v2101
    %v2103 = vmul.f32 %v2098, 1.442695
    %v2104 = vpow.pop %v2103
    %v2105 = vadd.f32 %v2100, 1.0
    %v2106 = vadd.f32 %v2102, 1.0
    %v2107 = vadd.f32 %v2104, 1.0
    %v2108 = vrcp.pop %v2105
    %v2109 = vmul.f32 1.0, %v2108
    %v2110 = vrcp.pop %v2106
    %v2111 = vmul.f32 1.0, %v2110
    %v2112 = vrcp.pop %v2107
    %v2113 = vmul.f32 1.0, %v2112
    %v2114 = vtanh.pop %v2095
    %v2115 = vmul.f32 %v2111, %v1874
    %v2116 = vmul.f32 %v2109, %v2114
    %v2117 = vadd.f32 %v2115, %v2116
    %v2118 = vtanh.pop %v2117
    %v2119 = vmul.f32 %v2113, %v2118
    %s2120 = scalar_lea.vmem [#allocation5], 48
    %2121 = vst [vmem:[%s2120] sm:$0xff] %v2119
    %s2122 = smul.u32 7, 4
    %s2123 = smul.addr %s2122, 8
    %s2124 = scalar_lea.vmem [#allocation4], %s2123
    %v2125 = vld [vmem:[%s2124] sm:$0xff]
    %v2126 = vld [vmem:[%s2124 + $0x8] sm:$0xff]
    %v2127 = vld [vmem:[%s2124 + $0x10] sm:$0xff]
    %v2128 = vld [vmem:[%s2124 + $0x18] sm:$0xff]
    %v2129 = vld [vmem:[#allocation9] sm:$0xff]
    %v2130 = vld [vmem:[#allocation9 + $0x8] sm:$0xff]
    %v2131 = vld [vmem:[#allocation9 + $0x10] sm:$0xff]
    %v2132 = vld [vmem:[#allocation9 + $0x18] sm:$0xff]
    %v2133 = vld [vmem:[#allocation9 + $0x20] sm:$0xff]
    %v2134 = vld [vmem:[#allocation9 + $0x28] sm:$0xff]
    %v2135 = vld [vmem:[#allocation9 + $0x30] sm:$0xff]
    %v2136 = vld [vmem:[#allocation9 + $0x38] sm:$0xff]
    %v2137 = vld [vmem:[#allocation9 + $0x40] sm:$0xff]
    %v2138 = vld [vmem:[#allocation9 + $0x48] sm:$0xff]
    %v2139 = vld [vmem:[#allocation9 + $0x50] sm:$0xff]
    %v2140 = vld [vmem:[#allocation9 + $0x58] sm:$0xff]
    %v2141 = vld [vmem:[#allocation9 + $0x60] sm:$0xff]
    %v2142 = vld [vmem:[#allocation9 + $0x68] sm:$0xff]
    %v2143 = vld [vmem:[#allocation9 + $0x70] sm:$0xff]
    %v2144 = vld [vmem:[#allocation9 + $0x78] sm:$0xff]
    %v2145 = vld [vmem:[#allocation9 + $0x80] sm:$0xff]
    %v2146 = vld [vmem:[#allocation9 + $0x88] sm:$0xff]
    %v2147 = vld [vmem:[#allocation9 + $0x90] sm:$0xff]
    %v2148 = vld [vmem:[#allocation9 + $0x98] sm:$0xff]
    %v2149 = vld [vmem:[#allocation9 + $0xa0] sm:$0xff]
    %v2150 = vld [vmem:[#allocation9 + $0xa8] sm:$0xff]
    %v2151 = vld [vmem:[#allocation9 + $0xb0] sm:$0xff]
    %v2152 = vld [vmem:[#allocation9 + $0xb8] sm:$0xff]
    %v2153 = vld [vmem:[#allocation9 + $0xc0] sm:$0xff]
    %v2154 = vld [vmem:[#allocation9 + $0xc8] sm:$0xff]
    %v2155 = vld [vmem:[#allocation9 + $0xd0] sm:$0xff]
    %v2156 = vld [vmem:[#allocation9 + $0xd8] sm:$0xff]
    %v2157 = vld [vmem:[#allocation9 + $0xe0] sm:$0xff]
    %v2158 = vld [vmem:[#allocation9 + $0xe8] sm:$0xff]
    %v2159 = vld [vmem:[#allocation9 + $0xf0] sm:$0xff]
    %v2160 = vld [vmem:[#allocation9 + $0xf8] sm:$0xff]
    %v2161 = vld [vmem:[#allocation9 + $0x100] sm:$0xff]
    %v2162 = vld [vmem:[#allocation9 + $0x108] sm:$0xff]
    %v2163 = vld [vmem:[#allocation9 + $0x110] sm:$0xff]
    %v2164 = vld [vmem:[#allocation9 + $0x118] sm:$0xff]
    %v2165 = vld [vmem:[#allocation9 + $0x120] sm:$0xff]
    %v2166 = vld [vmem:[#allocation9 + $0x128] sm:$0xff]
    %v2167 = vld [vmem:[#allocation9 + $0x130] sm:$0xff]
    %v2168 = vld [vmem:[#allocation9 + $0x138] sm:$0xff]
    %v2169 = vld [vmem:[#allocation9 + $0x140] sm:$0xff]
    %v2170 = vld [vmem:[#allocation9 + $0x148] sm:$0xff]
    %v2171 = vld [vmem:[#allocation9 + $0x150] sm:$0xff]
    %v2172 = vld [vmem:[#allocation9 + $0x158] sm:$0xff]
    %v2173 = vld [vmem:[#allocation9 + $0x160] sm:$0xff]
    %v2174 = vld [vmem:[#allocation9 + $0x168] sm:$0xff]
    %v2175 = vld [vmem:[#allocation9 + $0x170] sm:$0xff]
    %v2176 = vld [vmem:[#allocation9 + $0x178] sm:$0xff]
    %v2177 = vld [vmem:[#allocation9 + $0x180] sm:$0xff]
    %v2178 = vld [vmem:[#allocation9 + $0x188] sm:$0xff]
    %v2179 = vld [vmem:[#allocation9 + $0x190] sm:$0xff]
    %v2180 = vld [vmem:[#allocation9 + $0x198] sm:$0xff]
    %v2181 = vld [vmem:[#allocation9 + $0x1a0] sm:$0xff]
    %v2182 = vld [vmem:[#allocation9 + $0x1a8] sm:$0xff]
    %v2183 = vld [vmem:[#allocation9 + $0x1b0] sm:$0xff]
    %v2184 = vld [vmem:[#allocation9 + $0x1b8] sm:$0xff]
    %v2185 = vld [vmem:[#allocation9 + $0x1c0] sm:$0xff]
    %v2186 = vld [vmem:[#allocation9 + $0x1c8] sm:$0xff]
    %v2187 = vld [vmem:[#allocation9 + $0x1d0] sm:$0xff]
    %v2188 = vld [vmem:[#allocation9 + $0x1d8] sm:$0xff]
    %v2189 = vld [vmem:[#allocation9 + $0x1e0] sm:$0xff]
    %v2190 = vld [vmem:[#allocation9 + $0x1e8] sm:$0xff]
    %v2191 = vld [vmem:[#allocation9 + $0x1f0] sm:$0xff]
    %v2192 = vld [vmem:[#allocation9 + $0x1f8] sm:$0xff]
    %2193 = vmatprep.subr.mxu0 %v2130
    %2194 = vmatpush1.msra.mxu0 %v2129
    %2195 = vmatprep.subr.mxu0 %v2134
    %2196 = vmatpush1.msra.mxu0 %v2133
    %2197 = vmatprep.subr.mxu0 %v2138
    %2198 = vmatpush1.msra.mxu0 %v2137
    %2199 = vmatprep.subr.mxu0 %v2142
    %2200 = vmatpush1.msra.mxu0 %v2141
    %2201 = vmatprep.subr.mxu0 %v2146
    %2202 = vmatpush1.msra.mxu0 %v2145
    %2203 = vmatprep.subr.mxu0 %v2150
    %2204 = vmatpush1.msra.mxu0 %v2149
    %2205 = vmatprep.subr.mxu0 %v2154
    %2206 = vmatpush1.msra.mxu0 %v2153
    %2207 = vmatprep.subr.mxu0 %v2158
    %2208 = vmatpush1.msra.mxu0 %v2157
    %2209 = vmatprep.subr.mxu0 %v2162
    %2210 = vmatpush1.msra.mxu0 %v2161
    %2211 = vmatprep.subr.mxu0 %v2166
    %2212 = vmatpush1.msra.mxu0 %v2165
    %2213 = vmatprep.subr.mxu0 %v2170
    %2214 = vmatpush1.msra.mxu0 %v2169
    %2215 = vmatprep.subr.mxu0 %v2174
    %2216 = vmatpush1.msra.mxu0 %v2173
    %2217 = vmatprep.subr.mxu0 %v2178
    %2218 = vmatpush1.msra.mxu0 %v2177
    %2219 = vmatprep.subr.mxu0 %v2182
    %2220 = vmatpush1.msra.mxu0 %v2181
    %2221 = vmatprep.subr.mxu0 %v2186
    %2222 = vmatpush1.msra.mxu0 %v2185
    %2223 = vmatprep.subr.mxu0 %v2190
    %2224 = vmatpush1.msra.mxu0 %v2189
    %2225 = vmatprep.subr.mxu0 0.0
    %2226 = vmatpush1.msra.mxu0 0.0
    %2227 = vmatprep.subr.mxu0 0.0
    %2228 = vmatpush1.msra.mxu0 0.0
    %2229 = vmatprep.subr.mxu0 0.0
    %2230 = vmatpush1.msra.mxu0 0.0
    %2231 = vmatprep.subr.mxu0 0.0
    %2232 = vmatpush1.msra.mxu0 0.0
    %2233 = vmatprep.subr.mxu0 0.0
    %2234 = vmatpush1.msra.mxu0 0.0
    %2235 = vmatprep.subr.mxu0 0.0
    %2236 = vmatpush1.msra.mxu0 0.0
    %2237 = vmatprep.subr.mxu0 0.0
    %2238 = vmatpush1.msra.mxu0 0.0
    %2239 = vmatprep.subr.mxu0 0.0
    %2240 = vmatpush1.msra.mxu0 0.0
    %2241 = vmatprep.subr.mxu0 0.0
    %2242 = vmatpush1.msra.mxu0 0.0
    %2243 = vmatprep.subr.mxu0 0.0
    %2244 = vmatpush1.msra.mxu0 0.0
    %2245 = vmatprep.subr.mxu0 0.0
    %2246 = vmatpush1.msra.mxu0 0.0
    %2247 = vmatprep.subr.mxu0 0.0
    %2248 = vmatpush1.msra.mxu0 0.0
    %2249 = vmatprep.subr.mxu0 0.0
    %2250 = vmatpush1.msra.mxu0 0.0
    %2251 = vmatprep.subr.mxu0 0.0
    %2252 = vmatpush1.msra.mxu0 0.0
    %2253 = vmatprep.subr.mxu0 0.0
    %2254 = vmatpush1.msra.mxu0 0.0
    %2255 = vmatprep.subr.mxu0 0.0
    %2256 = vmatpush1.msra.mxu0 0.0
    %2257 = vmatprep.mubr.f32.mxu0 0.0
    %2258 = vmatmul.mubr.f32.gmra.mrb[0].mxu0 %v2119
    %v2259 = vpop.f32.mrb[0].mxu0
    %v2260 = vadd.f32 0.0, %v2259
    %v2261 = vpop.f32.mrb[0].mxu0
    %v2262 = vadd.f32 0.0, %v2261
    %2263 = vdwg.mxu0
    %2264 = vmatprep.subr.mxu0 %v2132
    %2265 = vmatpush1.msra.mxu0 %v2131
    %2266 = vmatprep.subr.mxu0 %v2136
    %2267 = vmatpush1.msra.mxu0 %v2135
    %2268 = vmatprep.subr.mxu0 %v2140
    %2269 = vmatpush1.msra.mxu0 %v2139
    %2270 = vmatprep.subr.mxu0 %v2144
    %2271 = vmatpush1.msra.mxu0 %v2143
    %2272 = vmatprep.subr.mxu0 %v2148
    %2273 = vmatpush1.msra.mxu0 %v2147
    %2274 = vmatprep.subr.mxu0 %v2152
    %2275 = vmatpush1.msra.mxu0 %v2151
    %2276 = vmatprep.subr.mxu0 %v2156
    %2277 = vmatpush1.msra.mxu0 %v2155
    %2278 = vmatprep.subr.mxu0 %v2160
    %2279 = vmatpush1.msra.mxu0 %v2159
    %2280 = vmatprep.subr.mxu0 %v2164
    %2281 = vmatpush1.msra.mxu0 %v2163
    %2282 = vmatprep.subr.mxu0 %v2168
    %2283 = vmatpush1.msra.mxu0 %v2167
    %2284 = vmatprep.subr.mxu0 %v2172
    %2285 = vmatpush1.msra.mxu0 %v2171
    %2286 = vmatprep.subr.mxu0 %v2176
    %2287 = vmatpush1.msra.mxu0 %v2175
    %2288 = vmatprep.subr.mxu0 %v2180
    %2289 = vmatpush1.msra.mxu0 %v2179
    %2290 = vmatprep.subr.mxu0 %v2184
    %2291 = vmatpush1.msra.mxu0 %v2183
    %2292 = vmatprep.subr.mxu0 %v2188
    %2293 = vmatpush1.msra.mxu0 %v2187
    %2294 = vmatprep.subr.mxu0 %v2192
    %2295 = vmatpush1.msra.mxu0 %v2191
    %2296 = vmatprep.subr.mxu0 0.0
    %2297 = vmatpush1.msra.mxu0 0.0
    %2298 = vmatprep.subr.mxu0 0.0
    %2299 = vmatpush1.msra.mxu0 0.0
    %2300 = vmatprep.subr.mxu0 0.0
    %2301 = vmatpush1.msra.mxu0 0.0
    %2302 = vmatprep.subr.mxu0 0.0
    %2303 = vmatpush1.msra.mxu0 0.0
    %2304 = vmatprep.subr.mxu0 0.0
    %2305 = vmatpush1.msra.mxu0 0.0
    %2306 = vmatprep.subr.mxu0 0.0
    %2307 = vmatpush1.msra.mxu0 0.0
    %2308 = vmatprep.subr.mxu0 0.0
    %2309 = vmatpush1.msra.mxu0 0.0
    %2310 = vmatprep.subr.mxu0 0.0
    %2311 = vmatpush1.msra.mxu0 0.0
    %2312 = vmatprep.subr.mxu0 0.0
    %2313 = vmatpush1.msra.mxu0 0.0
    %2314 = vmatprep.subr.mxu0 0.0
    %2315 = vmatpush1.msra.mxu0 0.0
    %2316 = vmatprep.subr.mxu0 0.0
    %2317 = vmatpush1.msra.mxu0 0.0
    %2318 = vmatprep.subr.mxu0 0.0
    %2319 = vmatpush1.msra.mxu0 0.0
    %2320 = vmatprep.subr.mxu0 0.0
    %2321 = vmatpush1.msra.mxu0 0.0
    %2322 = vmatprep.subr.mxu0 0.0
    %2323 = vmatpush1.msra.mxu0 0.0
    %2324 = vmatprep.subr.mxu0 0.0
    %2325 = vmatpush1.msra.mxu0 0.0
    %2326 = vmatprep.subr.mxu0 0.0
    %2327 = vmatpush1.msra.mxu0 0.0
    %2328 = vmatprep.mubr.f32.mxu0 0.0
    %2329 = vmatmul.mubr.f32.gmra.mrb[0].mxu0 %v2119
    %v2330 = vpop.f32.mrb[0].mxu0
    %v2331 = vadd.f32 0.0, %v2330
    %v2332 = vpop.f32.mrb[0].mxu0
    %v2333 = vadd.f32 0.0, %v2332
    %2334 = vdwg.mxu0
    %v2335 = vadd.f32 %v2125, %v2260
    %v2336 = vadd.f32 %v2126, %v2262
    %v2337 = vadd.f32 %v2127, %v2331
    %v2338 = vadd.f32 %v2128, %v2333
    %v2339 = vxor.u32 %v2335, 2147483648
    %v2340 = vxor.u32 %v2336, 2147483648
    %v2341 = vxor.u32 %v2337, 2147483648
    %v2342 = vmul.f32 %v2339, 1.442695
    %v2343 = vpow.pop %v2342
    %v2344 = vmul.f32 %v2340, 1.442695
    %v2345 = vpow.pop %v2344
    %v2346 = vmul.f32 %v2341, 1.442695
    %v2347 = vpow.pop %v2346
    %v2348 = vadd.f32 %v2343, 1.0
    %v2349 = vadd.f32 %v2345, 1.0
    %v2350 = vadd.f32 %v2347, 1.0
    %v2351 = vrcp.pop %v2348
    %v2352 = vmul.f32 1.0, %v2351
    %v2353 = vrcp.pop %v2349
    %v2354 = vmul.f32 1.0, %v2353
    %v2355 = vrcp.pop %v2350
    %v2356 = vmul.f32 1.0, %v2355
    %v2357 = vtanh.pop %v2338
    %v2358 = vmul.f32 %v2354, %v2117
    %v2359 = vmul.f32 %v2352, %v2357
    %v2360 = vadd.f32 %v2358, %v2359
    %v2361 = vtanh.pop %v2360
    %v2362 = vmul.f32 %v2356, %v2361
    %s2363 = scalar_lea.vmem [#allocation5], 56
    %2364 = vst [vmem:[%s2363] sm:$0xff] %v2362
    %2365 = vst [vmem:[#allocation2] sm:$0xff] %v2362
    %2366 = vst [vmem:[#allocation3] sm:$0xff] %v2360
    %v2367 = vld [vmem:[#allocation5] sm:$0xff]
    %v2368 = vld [vmem:[#allocation5 + $0x8] sm:$0xff]
    %v2369 = vld [vmem:[#allocation5 + $0x10] sm:$0xff]
    %v2370 = vld [vmem:[#allocation5 + $0x18] sm:$0xff]
    %v2371 = vld [vmem:[#allocation5 + $0x20] sm:$0xff]
    %v2372 = vld [vmem:[#allocation5 + $0x28] sm:$0xff]
    %v2373 = vld [vmem:[#allocation5 + $0x30] sm:$0xff]
    %v2374 = vld [vmem:[#allocation5 + $0x38] sm:$0xff]
    %v2375 = vld [vmem:[#allocation11] sm:$0xff]
    %v2376 = vld [vmem:[#allocation11 + $0x8] sm:$0xff]
    %v2377 = vld [vmem:[#allocation11 + $0x10] sm:$0xff]
    %v2378 = vld [vmem:[#allocation11 + $0x18] sm:$0xff]
    %v2379 = vld [vmem:[#allocation11 + $0x20] sm:$0xff]
    %v2380 = vld [vmem:[#allocation11 + $0x28] sm:$0xff]
    %v2381 = vld [vmem:[#allocation11 + $0x30] sm:$0xff]
    %v2382 = vld [vmem:[#allocation11 + $0x38] sm:$0xff]
    %v2383 = vld [vmem:[#allocation11 + $0x40] sm:$0xff]
    %v2384 = vld [vmem:[#allocation11 + $0x48] sm:$0xff]
    %v2385 = vld [vmem:[#allocation11 + $0x50] sm:$0xff]
    %v2386 = vld [vmem:[#allocation11 + $0x58] sm:$0xff]
    %v2387 = vld [vmem:[#allocation11 + $0x60] sm:$0xff]
    %v2388 = vld [vmem:[#allocation11 + $0x68] sm:$0xff]
    %v2389 = vld [vmem:[#allocation11 + $0x70] sm:$0xff]
    %v2390 = vld [vmem:[#allocation11 + $0x78] sm:$0xff]
    %v2391 = vld [vmem:[%s5] sm:$0x1]
    %v2393 = vlaneseq
    %v2394 = vshrl.u32 %v2393, 7
    %v2395 = vsub.s32 0, %v2394
    %v2396 = vrot.slane %v2391, %v2395
    %2398 = vmatprep.subr.mxu0 0.0
    %2399 = vmatpush1.msra.mxu0 %v2375
    %2400 = vmatprep.subr.mxu0 0.0
    %2401 = vmatpush1.msra.mxu0 %v2376
    %2402 = vmatprep.subr.mxu0 0.0
    %2403 = vmatpush1.msra.mxu0 %v2377
    %2404 = vmatprep.subr.mxu0 0.0
    %2405 = vmatpush1.msra.mxu0 %v2378
    %2406 = vmatprep.subr.mxu0 0.0
    %2407 = vmatpush1.msra.mxu0 %v2379
    %2408 = vmatprep.subr.mxu0 0.0
    %2409 = vmatpush1.msra.mxu0 %v2380
    %2410 = vmatprep.subr.mxu0 0.0
    %2411 = vmatpush1.msra.mxu0 %v2381
    %2412 = vmatprep.subr.mxu0 0.0
    %2413 = vmatpush1.msra.mxu0 %v2382
    %2414 = vmatprep.subr.mxu0 0.0
    %2415 = vmatpush1.msra.mxu0 %v2383
    %2416 = vmatprep.subr.mxu0 0.0
    %2417 = vmatpush1.msra.mxu0 %v2384
    %2418 = vmatprep.subr.mxu0 0.0
    %2419 = vmatpush1.msra.mxu0 %v2385
    %2420 = vmatprep.subr.mxu0 0.0
    %2421 = vmatpush1.msra.mxu0 %v2386
    %2422 = vmatprep.subr.mxu0 0.0
    %2423 = vmatpush1.msra.mxu0 %v2387
    %2424 = vmatprep.subr.mxu0 0.0
    %2425 = vmatpush1.msra.mxu0 %v2388
    %2426 = vmatprep.subr.mxu0 0.0
    %2427 = vmatpush1.msra.mxu0 %v2389
    %2428 = vmatprep.subr.mxu0 0.0
    %2429 = vmatpush1.msra.mxu0 %v2390
    %2430 = vmatprep.subr.mxu0 0.0
    %2431 = vmatpush1.msra.mxu0 0.0
    %2432 = vmatprep.subr.mxu0 0.0
    %2433 = vmatpush1.msra.mxu0 0.0
    %2434 = vmatprep.subr.mxu0 0.0
    %2435 = vmatpush1.msra.mxu0 0.0
    %2436 = vmatprep.subr.mxu0 0.0
    %2437 = vmatpush1.msra.mxu0 0.0
    %2438 = vmatprep.subr.mxu0 0.0
    %2439 = vmatpush1.msra.mxu0 0.0
    %2440 = vmatprep.subr.mxu0 0.0
    %2441 = vmatpush1.msra.mxu0 0.0
    %2442 = vmatprep.subr.mxu0 0.0
    %2443 = vmatpush1.msra.mxu0 0.0
    %2444 = vmatprep.subr.mxu0 0.0
    %2445 = vmatpush1.msra.mxu0 0.0
    %2446 = vmatprep.subr.mxu0 0.0
    %2447 = vmatpush1.msra.mxu0 0.0
    %2448 = vmatprep.subr.mxu0 0.0
    %2449 = vmatpush1.msra.mxu0 0.0
    %2450 = vmatprep.subr.mxu0 0.0
    %2451 = vmatpush1.msra.mxu0 0.0
    %2452 = vmatprep.subr.mxu0 0.0
    %2453 = vmatpush1.msra.mxu0 0.0
    %2454 = vmatprep.subr.mxu0 0.0
    %2455 = vmatpush1.msra.mxu0 0.0
    %2456 = vmatprep.subr.mxu0 0.0
    %2457 = vmatpush1.msra.mxu0 0.0
    %2458 = vmatprep.subr.mxu0 0.0
    %2459 = vmatpush1.msra.mxu0 0.0
    %2460 = vmatprep.subr.mxu0 0.0
    %2461 = vmatpush1.msra.mxu0 0.0
    %2462 = vmatprep.mubr.f32.mxu0 0.0
    %2463 = vmatmul.mubr.f32.gmra.mrb[0].mxu0 %v2367
    %v2464 = vpop.f32.mrb[0].mxu0
    %v2465 = vadd.f32 %v2396, %v2464
    %v2466 = vpop.f32.mrb[0].mxu0
    %2467 = vmatprep.mubr.f32.mxu0 0.0
    %2468 = vmatmul.mubr.f32.gmra.mrb[0].mxu0 %v2368
    %v2469 = vpop.f32.mrb[0].mxu0
    %v2470 = vadd.f32 %v2396, %v2469
    %v2471 = vpop.f32.mrb[0].mxu0
    %2472 = vmatprep.mubr.f32.mxu0 0.0
    %2473 = vmatmul.mubr.f32.gmra.mrb[0].mxu0 %v2369
    %v2474 = vpop.f32.mrb[0].mxu0
    %v2475 = vadd.f32 %v2396, %v2474
    %v2476 = vpop.f32.mrb[0].mxu0
    %2477 = vmatprep.mubr.f32.mxu0 0.0
    %2478 = vmatmul.mubr.f32.gmra.mrb[0].mxu0 %v2370
    %v2479 = vpop.f32.mrb[0].mxu0
    %v2480 = vadd.f32 %v2396, %v2479
    %v2481 = vpop.f32.mrb[0].mxu0
    %2482 = vmatprep.mubr.f32.mxu0 0.0
    %2483 = vmatmul.mubr.f32.gmra.mrb[0].mxu0 %v2371
    %v2484 = vpop.f32.mrb[0].mxu0
    %v2485 = vadd.f32 %v2396, %v2484
    %v2486 = vpop.f32.mrb[0].mxu0
    %2487 = vmatprep.mubr.f32.mxu0 0.0
    %2488 = vmatmul.mubr.f32.gmra.mrb[0].mxu0 %v2372
    %v2489 = vpop.f32.mrb[0].mxu0
    %v2490 = vadd.f32 %v2396, %v2489
    %v2491 = vpop.f32.mrb[0].mxu0
    %2492 = vmatprep.mubr.f32.mxu0 0.0
    %2493 = vmatmul.mubr.f32.gmra.mrb[0].mxu0 %v2373
    %v2494 = vpop.f32.mrb[0].mxu0
    %v2495 = vadd.f32 %v2396, %v2494
    %v2496 = vpop.f32.mrb[0].mxu0
    %2497 = vmatprep.mubr.f32.mxu0 0.0
    %2498 = vmatmul.mubr.f32.gmra.mrb[0].mxu0 %v2374
    %v2499 = vpop.f32.mrb[0].mxu0
    %v2500 = vadd.f32 %v2396, %v2499
    %v2501 = vpop.f32.mrb[0].mxu0
    %2502 = vdwg.mxu0
    %v2503 = vmax.f32 %v2465, 0.0
    %v2504 = vmax.f32 %v2470, 0.0
    %v2505 = vmax.f32 %v2475, 0.0
    %v2506 = vmax.f32 %v2480, 0.0
    %v2507 = vmax.f32 %v2485, 0.0
    %v2508 = vmax.f32 %v2490, 0.0
    %v2509 = vmax.f32 %v2495, 0.0
    %v2510 = vmax.f32 %v2500, 0.0
    %v2511 = vld [vmem:[#allocation12] sm:$0xff]
    %v2512 = vld [vmem:[#allocation12 + $0x8] sm:$0xff]
    %v2513 = vld [vmem:[#allocation12 + $0x10] sm:$0xff]
    %v2514 = vld [vmem:[#allocation12 + $0x18] sm:$0xff]
    %v2515 = vld [vmem:[#allocation12 + $0x20] sm:$0xff]
    %v2516 = vld [vmem:[#allocation12 + $0x28] sm:$0xff]
    %v2517 = vld [vmem:[#allocation12 + $0x30] sm:$0xff]
    %v2518 = vld [vmem:[#allocation12 + $0x38] sm:$0xff]
    %v2519 = vld [vmem:[#allocation12 + $0x40] sm:$0xff]
    %v2520 = vld [vmem:[#allocation12 + $0x48] sm:$0xff]
    %v2521 = vld [vmem:[#allocation12 + $0x50] sm:$0xff]
    %v2522 = vld [vmem:[#allocation12 + $0x58] sm:$0xff]
    %v2523 = vld [vmem:[#allocation12 + $0x60] sm:$0xff]
    %v2524 = vld [vmem:[#allocation12 + $0x68] sm:$0xff]
    %v2525 = vld [vmem:[#allocation12 + $0x70] sm:$0xff]
    %v2526 = vld [vmem:[#allocation12 + $0x78] sm:$0xff]
    %v2527 = vld [vmem:[%s7] sm:$0x1]
    %v2529 = vlaneseq
    %v2530 = vshrl.u32 %v2529, 7
    %v2531 = vsub.s32 0, %v2530
    %v2532 = vrot.slane %v2527, %v2531
    %2534 = vmatprep.subr.mxu0 0.0
    %2535 = vmatpush1.msra.mxu0 %v2511
    %2536 = vmatprep.subr.mxu0 0.0
    %2537 = vmatpush1.msra.mxu0 %v2512
    %2538 = vmatprep.subr.mxu0 0.0
    %2539 = vmatpush1.msra.mxu0 %v2513
    %2540 = vmatprep.subr.mxu0 0.0
    %2541 = vmatpush1.msra.mxu0 %v2514
    %2542 = vmatprep.subr.mxu0 0.0
    %2543 = vmatpush1.msra.mxu0 %v2515
    %2544 = vmatprep.subr.mxu0 0.0
    %2545 = vmatpush1.msra.mxu0 %v2516
    %2546 = vmatprep.subr.mxu0 0.0
    %2547 = vmatpush1.msra.mxu0 %v2517
    %2548 = vmatprep.subr.mxu0 0.0
    %2549 = vmatpush1.msra.mxu0 %v2518
    %2550 = vmatprep.subr.mxu0 0.0
    %2551 = vmatpush1.msra.mxu0 %v2519
    %2552 = vmatprep.subr.mxu0 0.0
    %2553 = vmatpush1.msra.mxu0 %v2520
    %2554 = vmatprep.subr.mxu0 0.0
    %2555 = vmatpush1.msra.mxu0 %v2521
    %2556 = vmatprep.subr.mxu0 0.0
    %2557 = vmatpush1.msra.mxu0 %v2522
    %2558 = vmatprep.subr.mxu0 0.0
    %2559 = vmatpush1.msra.mxu0 %v2523
    %2560 = vmatprep.subr.mxu0 0.0
    %2561 = vmatpush1.msra.mxu0 %v2524
    %2562 = vmatprep.subr.mxu0 0.0
    %2563 = vmatpush1.msra.mxu0 %v2525
    %2564 = vmatprep.subr.mxu0 0.0
    %2565 = vmatpush1.msra.mxu0 %v2526
    %2566 = vmatprep.subr.mxu0 0.0
    %2567 = vmatpush1.msra.mxu0 0.0
    %2568 = vmatprep.subr.mxu0 0.0
    %2569 = vmatpush1.msra.mxu0 0.0
    %2570 = vmatprep.subr.mxu0 0.0
    %2571 = vmatpush1.msra.mxu0 0.0
    %2572 = vmatprep.subr.mxu0 0.0
    %2573 = vmatpush1.msra.mxu0 0.0
    %2574 = vmatprep.subr.mxu0 0.0
    %2575 = vmatpush1.msra.mxu0 0.0
    %2576 = vmatprep.subr.mxu0 0.0
    %2577 = vmatpush1.msra.mxu0 0.0
    %2578 = vmatprep.subr.mxu0 0.0
    %2579 = vmatpush1.msra.mxu0 0.0
    %2580 = vmatprep.subr.mxu0 0.0
    %2581 = vmatpush1.msra.mxu0 0.0
    %2582 = vmatprep.subr.mxu0 0.0
    %2583 = vmatpush1.msra.mxu0 0.0
    %2584 = vmatprep.subr.mxu0 0.0
    %2585 = vmatpush1.msra.mxu0 0.0
    %2586 = vmatprep.subr.mxu0 0.0
    %2587 = vmatpush1.msra.mxu0 0.0
    %2588 = vmatprep.subr.mxu0 0.0
    %2589 = vmatpush1.msra.mxu0 0.0
    %2590 = vmatprep.subr.mxu0 0.0
    %2591 = vmatpush1.msra.mxu0 0.0
    %2592 = vmatprep.subr.mxu0 0.0
    %2593 = vmatpush1.msra.mxu0 0.0
    %2594 = vmatprep.subr.mxu0 0.0
    %2595 = vmatpush1.msra.mxu0 0.0
    %2596 = vmatprep.subr.mxu0 0.0
    %2597 = vmatpush1.msra.mxu0 0.0
    %2598 = vmatprep.mubr.f32.mxu0 0.0
    %2599 = vmatmul.mubr.f32.gmra.mrb[0].mxu0 %v2503
    %v2600 = vpop.f32.mrb[0].mxu0
    %v2601 = vadd.f32 %v2532, %v2600
    %v2602 = vpop.f32.mrb[0].mxu0
    %2603 = vmatprep.mubr.f32.mxu0 0.0
    %2604 = vmatmul.mubr.f32.gmra.mrb[0].mxu0 %v2504
    %v2605 = vpop.f32.mrb[0].mxu0
    %v2606 = vadd.f32 %v2532, %v2605
    %v2607 = vpop.f32.mrb[0].mxu0
    %2608 = vmatprep.mubr.f32.mxu0 0.0
    %2609 = vmatmul.mubr.f32.gmra.mrb[0].mxu0 %v2505
    %v2610 = vpop.f32.mrb[0].mxu0
    %v2611 = vadd.f32 %v2532, %v2610
    %v2612 = vpop.f32.mrb[0].mxu0
    %2613 = vmatprep.mubr.f32.mxu0 0.0
    %2614 = vmatmul.mubr.f32.gmra.mrb[0].mxu0 %v2506
    %v2615 = vpop.f32.mrb[0].mxu0
    %v2616 = vadd.f32 %v2532, %v2615
    %v2617 = vpop.f32.mrb[0].mxu0
    %2618 = vmatprep.mubr.f32.mxu0 0.0
    %2619 = vmatmul.mubr.f32.gmra.mrb[0].mxu0 %v2507
    %v2620 = vpop.f32.mrb[0].mxu0
    %v2621 = vadd.f32 %v2532, %v2620
    %v2622 = vpop.f32.mrb[0].mxu0
    %2623 = vmatprep.mubr.f32.mxu0 0.0
    %2624 = vmatmul.mubr.f32.gmra.mrb[0].mxu0 %v2508
    %v2625 = vpop.f32.mrb[0].mxu0
    %v2626 = vadd.f32 %v2532, %v2625
    %v2627 = vpop.f32.mrb[0].mxu0
    %2628 = vmatprep.mubr.f32.mxu0 0.0
    %2629 = vmatmul.mubr.f32.gmra.mrb[0].mxu0 %v2509
    %v2630 = vpop.f32.mrb[0].mxu0
    %v2631 = vadd.f32 %v2532, %v2630
    %v2632 = vpop.f32.mrb[0].mxu0
    %2633 = vmatprep.mubr.f32.mxu0 0.0
    %2634 = vmatmul.mubr.f32.gmra.mrb[0].mxu0 %v2510
    %v2635 = vpop.f32.mrb[0].mxu0
    %v2636 = vadd.f32 %v2532, %v2635
    %v2637 = vpop.f32.mrb[0].mxu0
    %2638 = vdwg.mxu0
    %2639 = vmax.xlane.f32.xlu0 %v2601
    %v2640 = vpop.xlane.xlu0 %2639
    %2641 = vmax.xlane.f32.xlu0 %v2606
    %v2642 = vpop.xlane.xlu0 %2641
    %2643 = vmax.xlane.f32.xlu0 %v2611
    %v2644 = vpop.xlane.xlu0 %2643
    %2645 = vmax.xlane.f32.xlu0 %v2616
    %v2646 = vpop.xlane.xlu0 %2645
    %2647 = vmax.xlane.f32.xlu0 %v2621
    %v2648 = vpop.xlane.xlu0 %2647
    %2649 = vmax.xlane.f32.xlu0 %v2626
    %v2650 = vpop.xlane.xlu0 %2649
    %2651 = vmax.xlane.f32.xlu0 %v2631
    %v2652 = vpop.xlane.xlu0 %2651
    %2653 = vmax.xlane.f32.xlu0 %v2636
    %v2654 = vpop.xlane.xlu0 %2653
    %v2655 = vsub.f32 %v2601, %v2640
    %v2656 = vsub.f32 %v2606, %v2642
    %v2657 = vsub.f32 %v2611, %v2644
    %v2658 = vsub.f32 %v2616, %v2646
    %v2659 = vsub.f32 %v2621, %v2648
    %v2660 = vsub.f32 %v2626, %v2650
    %v2661 = vsub.f32 %v2631, %v2652
    %v2662 = vsub.f32 %v2636, %v2654
    %v2663 = vmul.f32 %v2655, 1.442695
    %v2664 = vpow.pop %v2663
    %v2665 = vmul.f32 %v2656, 1.442695
    %v2666 = vpow.pop %v2665
    %v2667 = vmul.f32 %v2657, 1.442695
    %v2668 = vpow.pop %v2667
    %v2669 = vmul.f32 %v2658, 1.442695
    %v2670 = vpow.pop %v2669
    %v2671 = vmul.f32 %v2659, 1.442695
    %v2672 = vpow.pop %v2671
    %v2673 = vmul.f32 %v2660, 1.442695
    %v2674 = vpow.pop %v2673
    %v2675 = vmul.f32 %v2661, 1.442695
    %v2676 = vpow.pop %v2675
    %v2677 = vmul.f32 %v2662, 1.442695
    %v2678 = vpow.pop %v2677
    %2679 = vadd.xlane.f32.xlu0 %v2664
    %v2680 = vpop.xlane.xlu0 %2679
    %2681 = vadd.xlane.f32.xlu0 %v2666
    %v2682 = vpop.xlane.xlu0 %2681
    %2683 = vadd.xlane.f32.xlu0 %v2668
    %v2684 = vpop.xlane.xlu0 %2683
    %2685 = vadd.xlane.f32.xlu0 %v2670
    %v2686 = vpop.xlane.xlu0 %2685
    %2687 = vadd.xlane.f32.xlu0 %v2672
    %v2688 = vpop.xlane.xlu0 %2687
    %2689 = vadd.xlane.f32.xlu0 %v2674
    %v2690 = vpop.xlane.xlu0 %2689
    %2691 = vadd.xlane.f32.xlu0 %v2676
    %v2692 = vpop.xlane.xlu0 %2691
    %2693 = vadd.xlane.f32.xlu0 %v2678
    %v2694 = vpop.xlane.xlu0 %2693
    %v2695 = vrcp.pop %v2680
    %v2696 = vmul.f32 %v2664, %v2695
    %v2697 = vrcp.pop %v2682
    %v2698 = vmul.f32 %v2666, %v2697
    %v2699 = vrcp.pop %v2684
    %v2700 = vmul.f32 %v2668, %v2699
    %v2701 = vrcp.pop %v2686
    %v2702 = vmul.f32 %v2670, %v2701
    %v2703 = vrcp.pop %v2688
    %v2704 = vmul.f32 %v2672, %v2703
    %v2705 = vrcp.pop %v2690
    %v2706 = vmul.f32 %v2674, %v2705
    %v2707 = vrcp.pop %v2692
    %v2708 = vmul.f32 %v2676, %v2707
    %v2709 = vrcp.pop %v2694
    %v2710 = vmul.f32 %v2678, %v2709
    %2711 = vst [vmem:[#allocation14] sm:$0xff] %v2696
    %2712 = vst [vmem:[#allocation14 + $0x8] sm:$0xff] %v2698
    %2713 = vst [vmem:[#allocation14 + $0x10] sm:$0xff] %v2700
    %2714 = vst [vmem:[#allocation14 + $0x18] sm:$0xff] %v2702
    %2715 = vst [vmem:[#allocation14 + $0x20] sm:$0xff] %v2704
    %2716 = vst [vmem:[#allocation14 + $0x28] sm:$0xff] %v2706
    %2717 = vst [vmem:[#allocation14 + $0x30] sm:$0xff] %v2708
    %2718 = vst [vmem:[#allocation14 + $0x38] sm:$0xff] %v2710
    // Predicated region
    $region54: #{tpu_custom_call.1} parent=1 // pred_check
      _
    $region55: #{tpu_custom_call.1} parent=1 // pred_check_branch
      %2720 = sbr.rel (0) target = $region57
    $region56: #{tpu_custom_call.1} parent=1 // pred_region
      %s2722 = ssub.s32 1024, 1024
      %2723 = vsyncadd [#allocation8], %s2722
      %s2724 = sshll.u32 [#allocation14], 4
      %s2725 = int_to_ptr.vmem [resolvable:$true] %s2724
      %2730 = dma.vmem_to_hbm [thread:$0]  %s2725, 1024, %s8, [#allocation8], 128, 128, 8
    $region57: #{tpu_custom_call.1} parent=1 // pred_fallthru
      _
    // Predicated region
    $region58: #{tpu_custom_call.1} parent=1 // pred_check
      _
    $region59: #{tpu_custom_call.1} parent=1 // pred_check_branch
      %2732 = sbr.rel (0) target = $region61
    $region60: #{tpu_custom_call.1} parent=1 // pred_region
      %2733 = dma.done [#allocation8], 1024
    $region61: #{tpu_custom_call.1} parent=1 // pred_fallthru
      _
    %2734 = vsyncpa [#allocation7], 1
    %2735 = vsyncpa [#allocation10], 1
    %2736 = vsyncpa [#allocation13], 1
    %2737 = vsyncpa [#allocation8], 1

</llo_original>
